<compile_context>
chip_gen: v6e
topology: v6e:2x2x1
jax: 0.10.0
libtpu: 0.0.40
codegen_flags: <defaults>
</compile_context>

<pallas_src>
import jax
import jax.numpy as jnp
from jax.experimental import pallas as pl
from jax.experimental.pallas import tpu as pltpu

OUTPUT_DIM = 11
CHARACTER_SIZE = 251


def _round_up(x, m):
    return (x + m - 1) // m * m


def _pick_block_b(B):
    """<=256 rows (fills the 256-wide MXU) but >=2 grid steps when possible (v7x 2 TCs)."""
    b = min(256, _round_up(B, 8))
    if B > 8:
        b = min(b, _round_up(-(-B // 2), 8))
    return max(b, 8)


def _mlp_onehot_kernel(tok_ref,               # (block_b, L) int32, VMEM block per step
                       w1e_ref,               # (L, Vp, H1p) bf16, resident (emb (.) fc1)
                       b1_ref,                # (1, H1p) f32
                       w2_ref, b2_ref,        # (H1p, H2p) bf16, (1, H2p) f32
                       w3_ref, b3_ref,        # (H2p, Op)  bf16, (1, Op)  f32
                       o_ref):                # (block_b, Op) f32
    block_b, L = tok_ref.shape
    _, Vp, H1p = w1e_ref.shape

    tok = tok_ref[...]                                             # (block_b, L) int32
    iota_v = jax.lax.broadcasted_iota(jnp.int32, (block_b, Vp), 1)

    # Fused embedding gather + fc1: one-hot row selection runs on the MXU.
    h1 = jnp.zeros((block_b, H1p), jnp.float32)
    for l in range(L):                                             # static unroll, L small
        onehot = (tok[:, l:l + 1] == iota_v).astype(jnp.bfloat16)  # (block_b, Vp)
        h1 = h1 + jnp.dot(onehot, w1e_ref[l],
                          preferred_element_type=jnp.float32)
    h1 = h1 + b1_ref[...]                                          # no activation (reference)

    h2 = jnp.dot(h1.astype(jnp.bfloat16), w2_ref[...],
                 preferred_element_type=jnp.float32) + b2_ref[...]
    h2 = jnp.maximum(h2, 0.0)                                      # ReLU only after fc2

    o_ref[...] = jnp.dot(h2.astype(jnp.bfloat16), w3_ref[...],
                         preferred_element_type=jnp.float32) + b3_ref[...]


def classification_forward(tokens, kparams, *, block_b=None):
    """tokens: (B, L) int; kparams: packed (padded) params. Returns (B, 11) f32 logits."""
    w1e = kparams["w1e"]                      # (L, Vp, H1p) bf16
    b1 = kparams["b1"]
    w2, b2 = kparams["w2"], kparams["b2"]
    w3, b3 = kparams["w3"], kparams["b3"]
    out_dim = kparams["output_dim"]

    B, L = tokens.shape
    assert w1e.shape[0] == L
    OP = w3.shape[1]

    if block_b is None:
        block_b = _pick_block_b(B)
    Bp = _round_up(B, block_b)

    # Pad batch to a whole number of blocks; token id 0 selects a valid
    # (discarded) row, and the padded output rows are sliced off below.
    tok = jnp.pad(tokens.astype(jnp.int32), ((0, Bp - B), (0, 0)))

    out = pl.pallas_call(
        _mlp_onehot_kernel,
        out_shape=jax.ShapeDtypeStruct((Bp, OP), jnp.float32),
        grid_spec=pltpu.PrefetchScalarGridSpec(
            num_scalar_prefetch=0,
            grid=(Bp // block_b,),
            in_specs=[
                pl.BlockSpec((block_b, L), lambda i: (i, 0)),        # per-step token block
                pl.BlockSpec(w1e.shape, lambda i: (0, 0, 0)),         # resident operands
                pl.BlockSpec(b1.shape, lambda i: (0, 0)),
                pl.BlockSpec(w2.shape, lambda i: (0, 0)),
                pl.BlockSpec(b2.shape, lambda i: (0, 0)),
                pl.BlockSpec(w3.shape, lambda i: (0, 0)),
                pl.BlockSpec(b3.shape, lambda i: (0, 0)),
            ],
            out_specs=pl.BlockSpec((block_b, OP), lambda i: (i, 0)),
        ),
        compiler_params=pltpu.CompilerParams(
            dimension_semantics=("parallel",)),
    )(tok, w1e, b1, w2, b2, w3, b3)

    return out[:B, :out_dim]


def init_params(key, embedding_dim, max_length):
    """Logical (unpadded, f32) parameters matching the PyTorch module."""
    in1 = max_length * embedding_dim
    keys = jax.random.split(key, 7)

    def linear_init(kw, kb, fan_in, fan_out):
        # PyTorch nn.Linear default: U(-1/sqrt(fan_in), 1/sqrt(fan_in)); stored transposed.
        bound = 1.0 / float(fan_in) ** 0.5
        w = jax.random.uniform(kw, (fan_in, fan_out), jnp.float32, -bound, bound)
        b = jax.random.uniform(kb, (1, fan_out), jnp.float32, -bound, bound)
        return w, b

    emb = jax.random.normal(keys[0], (CHARACTER_SIZE, embedding_dim), jnp.float32)
    w1, b1 = linear_init(keys[1], keys[2], in1, 200)
    w2, b2 = linear_init(keys[3], keys[4], 200, 100)
    w3, b3 = linear_init(keys[5], keys[6], 100, OUTPUT_DIM)
    return {"embeddings": emb, "w1": w1, "b1": b1, "w2": w2, "b2": b2,
            "w3": w3, "b3": b3}


def pack_params(params, *, vocab_pad=256, h1_pad=256, h2_pad=128, out_pad=128):
    """Precompose emb with fc1, pad widths to lane-aligned sizes, cast matmuls to bf16."""
    def pad2(a, rows, cols):
        z = jnp.zeros((rows, cols), a.dtype)
        return z.at[: a.shape[0], : a.shape[1]].set(a)

    emb = params["embeddings"]                         # (V, E) f32
    V, E = emb.shape
    LE = params["w1"].shape[0]
    L = LE // E

    emb_p = pad2(emb, vocab_pad, E)                    # (Vp, E); padded rows are zero
    w1_p = pad2(params["w1"], LE, h1_pad)              # (L*E, H1p) f32
    # W1e[l, v, :] = emb_p[v, :] @ w1_p[l*E:(l+1)*E, :]  -> (L, Vp, H1p)
    w1e = jnp.einsum("ve,leh->lvh", emb_p, w1_p.reshape(L, E, h1_pad),
                     precision=jax.lax.Precision.HIGHEST)

    return {
        "w1e": w1e.astype(jnp.bfloat16),
        "b1": pad2(params["b1"], 1, h1_pad).astype(jnp.float32),
        "w2": pad2(params["w2"], h1_pad, h2_pad).astype(jnp.bfloat16),
        "b2": pad2(params["b2"], 1, h2_pad).astype(jnp.float32),
        "w3": pad2(params["w3"], h2_pad, out_pad).astype(jnp.bfloat16),
        "b3": pad2(params["b3"], 1, out_pad).astype(jnp.float32),
        "output_dim": params["w3"].shape[1],
    }


if __name__ == "__main__":
    embedding_dim = 32
    max_length = 16
    batch = 2

    key = jax.random.PRNGKey(0)
    k_params, k_data = jax.random.split(key)

    params = init_params(k_params, embedding_dim, max_length)
    kparams = pack_params(params)
    tokens = jax.random.randint(k_data, (batch, max_length), 0, CHARACTER_SIZE,
                                dtype=jnp.int32)

    logits = classification_forward(tokens, kparams)
    logits = jax.block_until_ready(logits)

    # Pure-JAX f32 reference of the full forward pass (unpadded weights).
    x_ref = jnp.take(params["embeddings"], tokens, axis=0).reshape(batch, -1)
    h = x_ref @ params["w1"] + params["b1"]
    h = h @ params["w2"] + params["b2"]
    h = jnp.maximum(h, 0.0)
    ref = h @ params["w3"] + params["b3"]

    assert logits.shape == (batch, OUTPUT_DIM)
    max_err = float(jnp.max(jnp.abs(logits - ref)))
    # bf16 matmul inputs with f32 accumulation -> loosened tolerance vs f32 ref.
    assert jnp.allclose(logits, ref, atol=3e-2, rtol=3e-2), max_err

    print("KERNEL_OK")
</pallas_src>

<mosaic_0001>
module attributes {stable_mosaic.version = 11 : i64} {
  func.func @_mlp_onehot_kernel(%arg0: i32, %arg1: memref<8x16xi32, #tpu.memory_space<vmem>>, %arg2: memref<16x256x256xbf16, #tpu.memory_space<vmem>>, %arg3: memref<1x256xf32, #tpu.memory_space<vmem>>, %arg4: memref<256x128xbf16, #tpu.memory_space<vmem>>, %arg5: memref<1x128xf32, #tpu.memory_space<vmem>>, %arg6: memref<128x128xbf16, #tpu.memory_space<vmem>>, %arg7: memref<1x128xf32, #tpu.memory_space<vmem>>, %arg8: memref<8x128xf32, #tpu.memory_space<vmem>>) attributes {dimension_semantics = [#tpu.dimension_semantics<parallel>], iteration_bounds = array<i64: 1>, scalar_prefetch = 0 : i64, scratch_operands = 0 : i64, tpu.core_type = #tpu.core_type<tc>, window_params = [{transform_indices = @transform_0, window_bounds = array<i64: 8, 16>}, {pipeline_mode = #tpu.pipeline_mode<synchronous>, transform_indices = @transform_1, window_bounds = array<i64: 16, 256, 256>}, {pipeline_mode = #tpu.pipeline_mode<synchronous>, transform_indices = @transform_2, window_bounds = array<i64: 1, 256>}, {pipeline_mode = #tpu.pipeline_mode<synchronous>, transform_indices = @transform_3, window_bounds = array<i64: 256, 128>}, {pipeline_mode = #tpu.pipeline_mode<synchronous>, transform_indices = @transform_4, window_bounds = array<i64: 1, 128>}, {pipeline_mode = #tpu.pipeline_mode<synchronous>, transform_indices = @transform_5, window_bounds = array<i64: 128, 128>}, {pipeline_mode = #tpu.pipeline_mode<synchronous>, transform_indices = @transform_6, window_bounds = array<i64: 1, 128>}, {transform_indices = @transform_7, window_bounds = array<i64: 8, 128>}]} {
    %c0 = arith.constant 0 : index
    %c0_0 = arith.constant 0 : index
    %0 = vector.load %arg1[%c0, %c0_0] : memref<8x16xi32, #tpu.memory_space<vmem>>, vector<8x16xi32>
    %1 = tpu.iota {dimensions = array<i32: 1>} : vector<8x256xi32>
    %cst = arith.constant 0.000000e+00 : f32
    %2 = vector.broadcast %cst : f32 to vector<8x256xf32>
    %3 = vector.extract_strided_slice %0 {offsets = [0, 0], sizes = [8, 1], strides = [1, 1]} : vector<8x16xi32> to vector<8x1xi32>
    %4 = vector.broadcast %3 : vector<8x1xi32> to vector<8x256xi32>
    %5 = arith.cmpi eq, %4, %1 : vector<8x256xi32>
    %6 = arith.extui %5 : vector<8x256xi1> to vector<8x256xi32>
    %7 = arith.sitofp %6 : vector<8x256xi32> to vector<8x256xf32>
    %8 = arith.truncf %7 : vector<8x256xf32> to vector<8x256xbf16>
    %c0_1 = arith.constant 0 : index
    %c0_2 = arith.constant 0 : index
    %c0_3 = arith.constant 0 : index
    %9 = vector.load %arg2[%c0_1, %c0_2, %c0_3] : memref<16x256x256xbf16, #tpu.memory_space<vmem>>, vector<1x256x256xbf16>
    %10 = vector.shape_cast %9 : vector<1x256x256xbf16> to vector<256x256xbf16>
    %cst_4 = arith.constant dense<0.000000e+00> : vector<8x256xf32>
    %11 = tpu.matmul %8, %10, %cst_4 {dimension_numbers = #tpu.dot_dimension_numbers<[1], [0], [0], [1], [0, 0, 1, 1], [], []>} : vector<8x256xbf16>, vector<256x256xbf16>, vector<8x256xf32> -> vector<8x256xf32>
    %12 = arith.addf %2, %11 : vector<8x256xf32>
    %13 = vector.extract_strided_slice %0 {offsets = [0, 1], sizes = [8, 1], strides = [1, 1]} : vector<8x16xi32> to vector<8x1xi32>
    %14 = vector.broadcast %13 : vector<8x1xi32> to vector<8x256xi32>
    %15 = arith.cmpi eq, %14, %1 : vector<8x256xi32>
    %16 = arith.extui %15 : vector<8x256xi1> to vector<8x256xi32>
    %17 = arith.sitofp %16 : vector<8x256xi32> to vector<8x256xf32>
    %18 = arith.truncf %17 : vector<8x256xf32> to vector<8x256xbf16>
    %c1 = arith.constant 1 : index
    %c0_5 = arith.constant 0 : index
    %c0_6 = arith.constant 0 : index
    %19 = vector.load %arg2[%c1, %c0_5, %c0_6] : memref<16x256x256xbf16, #tpu.memory_space<vmem>>, vector<1x256x256xbf16>
    %20 = vector.shape_cast %19 : vector<1x256x256xbf16> to vector<256x256xbf16>
    %cst_7 = arith.constant dense<0.000000e+00> : vector<8x256xf32>
    %21 = tpu.matmul %18, %20, %cst_7 {dimension_numbers = #tpu.dot_dimension_numbers<[1], [0], [0], [1], [0, 0, 1, 1], [], []>} : vector<8x256xbf16>, vector<256x256xbf16>, vector<8x256xf32> -> vector<8x256xf32>
    %22 = arith.addf %12, %21 : vector<8x256xf32>
    %23 = vector.extract_strided_slice %0 {offsets = [0, 2], sizes = [8, 1], strides = [1, 1]} : vector<8x16xi32> to vector<8x1xi32>
    %24 = vector.broadcast %23 : vector<8x1xi32> to vector<8x256xi32>
    %25 = arith.cmpi eq, %24, %1 : vector<8x256xi32>
    %26 = arith.extui %25 : vector<8x256xi1> to vector<8x256xi32>
    %27 = arith.sitofp %26 : vector<8x256xi32> to vector<8x256xf32>
    %28 = arith.truncf %27 : vector<8x256xf32> to vector<8x256xbf16>
    %c2 = arith.constant 2 : index
    %c0_8 = arith.constant 0 : index
    %c0_9 = arith.constant 0 : index
    %29 = vector.load %arg2[%c2, %c0_8, %c0_9] : memref<16x256x256xbf16, #tpu.memory_space<vmem>>, vector<1x256x256xbf16>
    %30 = vector.shape_cast %29 : vector<1x256x256xbf16> to vector<256x256xbf16>
    %cst_10 = arith.constant dense<0.000000e+00> : vector<8x256xf32>
    %31 = tpu.matmul %28, %30, %cst_10 {dimension_numbers = #tpu.dot_dimension_numbers<[1], [0], [0], [1], [0, 0, 1, 1], [], []>} : vector<8x256xbf16>, vector<256x256xbf16>, vector<8x256xf32> -> vector<8x256xf32>
    %32 = arith.addf %22, %31 : vector<8x256xf32>
    %33 = vector.extract_strided_slice %0 {offsets = [0, 3], sizes = [8, 1], strides = [1, 1]} : vector<8x16xi32> to vector<8x1xi32>
    %34 = vector.broadcast %33 : vector<8x1xi32> to vector<8x256xi32>
    %35 = arith.cmpi eq, %34, %1 : vector<8x256xi32>
    %36 = arith.extui %35 : vector<8x256xi1> to vector<8x256xi32>
    %37 = arith.sitofp %36 : vector<8x256xi32> to vector<8x256xf32>
    %38 = arith.truncf %37 : vector<8x256xf32> to vector<8x256xbf16>
    %c3 = arith.constant 3 : index
    %c0_11 = arith.constant 0 : index
    %c0_12 = arith.constant 0 : index
    %39 = vector.load %arg2[%c3, %c0_11, %c0_12] : memref<16x256x256xbf16, #tpu.memory_space<vmem>>, vector<1x256x256xbf16>
    %40 = vector.shape_cast %39 : vector<1x256x256xbf16> to vector<256x256xbf16>
    %cst_13 = arith.constant dense<0.000000e+00> : vector<8x256xf32>
    %41 = tpu.matmul %38, %40, %cst_13 {dimension_numbers = #tpu.dot_dimension_numbers<[1], [0], [0], [1], [0, 0, 1, 1], [], []>} : vector<8x256xbf16>, vector<256x256xbf16>, vector<8x256xf32> -> vector<8x256xf32>
    %42 = arith.addf %32, %41 : vector<8x256xf32>
    %43 = vector.extract_strided_slice %0 {offsets = [0, 4], sizes = [8, 1], strides = [1, 1]} : vector<8x16xi32> to vector<8x1xi32>
    %44 = vector.broadcast %43 : vector<8x1xi32> to vector<8x256xi32>
    %45 = arith.cmpi eq, %44, %1 : vector<8x256xi32>
    %46 = arith.extui %45 : vector<8x256xi1> to vector<8x256xi32>
    %47 = arith.sitofp %46 : vector<8x256xi32> to vector<8x256xf32>
    %48 = arith.truncf %47 : vector<8x256xf32> to vector<8x256xbf16>
    %c4 = arith.constant 4 : index
    %c0_14 = arith.constant 0 : index
    %c0_15 = arith.constant 0 : index
    %49 = vector.load %arg2[%c4, %c0_14, %c0_15] : memref<16x256x256xbf16, #tpu.memory_space<vmem>>, vector<1x256x256xbf16>
    %50 = vector.shape_cast %49 : vector<1x256x256xbf16> to vector<256x256xbf16>
    %cst_16 = arith.constant dense<0.000000e+00> : vector<8x256xf32>
    %51 = tpu.matmul %48, %50, %cst_16 {dimension_numbers = #tpu.dot_dimension_numbers<[1], [0], [0], [1], [0, 0, 1, 1], [], []>} : vector<8x256xbf16>, vector<256x256xbf16>, vector<8x256xf32> -> vector<8x256xf32>
    %52 = arith.addf %42, %51 : vector<8x256xf32>
    %53 = vector.extract_strided_slice %0 {offsets = [0, 5], sizes = [8, 1], strides = [1, 1]} : vector<8x16xi32> to vector<8x1xi32>
    %54 = vector.broadcast %53 : vector<8x1xi32> to vector<8x256xi32>
    %55 = arith.cmpi eq, %54, %1 : vector<8x256xi32>
    %56 = arith.extui %55 : vector<8x256xi1> to vector<8x256xi32>
    %57 = arith.sitofp %56 : vector<8x256xi32> to vector<8x256xf32>
    %58 = arith.truncf %57 : vector<8x256xf32> to vector<8x256xbf16>
    %c5 = arith.constant 5 : index
    %c0_17 = arith.constant 0 : index
    %c0_18 = arith.constant 0 : index
    %59 = vector.load %arg2[%c5, %c0_17, %c0_18] : memref<16x256x256xbf16, #tpu.memory_space<vmem>>, vector<1x256x256xbf16>
    %60 = vector.shape_cast %59 : vector<1x256x256xbf16> to vector<256x256xbf16>
    %cst_19 = arith.constant dense<0.000000e+00> : vector<8x256xf32>
    %61 = tpu.matmul %58, %60, %cst_19 {dimension_numbers = #tpu.dot_dimension_numbers<[1], [0], [0], [1], [0, 0, 1, 1], [], []>} : vector<8x256xbf16>, vector<256x256xbf16>, vector<8x256xf32> -> vector<8x256xf32>
    %62 = arith.addf %52, %61 : vector<8x256xf32>
    %63 = vector.extract_strided_slice %0 {offsets = [0, 6], sizes = [8, 1], strides = [1, 1]} : vector<8x16xi32> to vector<8x1xi32>
    %64 = vector.broadcast %63 : vector<8x1xi32> to vector<8x256xi32>
    %65 = arith.cmpi eq, %64, %1 : vector<8x256xi32>
    %66 = arith.extui %65 : vector<8x256xi1> to vector<8x256xi32>
    %67 = arith.sitofp %66 : vector<8x256xi32> to vector<8x256xf32>
    %68 = arith.truncf %67 : vector<8x256xf32> to vector<8x256xbf16>
    %c6 = arith.constant 6 : index
    %c0_20 = arith.constant 0 : index
    %c0_21 = arith.constant 0 : index
    %69 = vector.load %arg2[%c6, %c0_20, %c0_21] : memref<16x256x256xbf16, #tpu.memory_space<vmem>>, vector<1x256x256xbf16>
    %70 = vector.shape_cast %69 : vector<1x256x256xbf16> to vector<256x256xbf16>
    %cst_22 = arith.constant dense<0.000000e+00> : vector<8x256xf32>
    %71 = tpu.matmul %68, %70, %cst_22 {dimension_numbers = #tpu.dot_dimension_numbers<[1], [0], [0], [1], [0, 0, 1, 1], [], []>} : vector<8x256xbf16>, vector<256x256xbf16>, vector<8x256xf32> -> vector<8x256xf32>
    %72 = arith.addf %62, %71 : vector<8x256xf32>
    %73 = vector.extract_strided_slice %0 {offsets = [0, 7], sizes = [8, 1], strides = [1, 1]} : vector<8x16xi32> to vector<8x1xi32>
    %74 = vector.broadcast %73 : vector<8x1xi32> to vector<8x256xi32>
    %75 = arith.cmpi eq, %74, %1 : vector<8x256xi32>
    %76 = arith.extui %75 : vector<8x256xi1> to vector<8x256xi32>
    %77 = arith.sitofp %76 : vector<8x256xi32> to vector<8x256xf32>
    %78 = arith.truncf %77 : vector<8x256xf32> to vector<8x256xbf16>
    %c7 = arith.constant 7 : index
    %c0_23 = arith.constant 0 : index
    %c0_24 = arith.constant 0 : index
    %79 = vector.load %arg2[%c7, %c0_23, %c0_24] : memref<16x256x256xbf16, #tpu.memory_space<vmem>>, vector<1x256x256xbf16>
    %80 = vector.shape_cast %79 : vector<1x256x256xbf16> to vector<256x256xbf16>
    %cst_25 = arith.constant dense<0.000000e+00> : vector<8x256xf32>
    %81 = tpu.matmul %78, %80, %cst_25 {dimension_numbers = #tpu.dot_dimension_numbers<[1], [0], [0], [1], [0, 0, 1, 1], [], []>} : vector<8x256xbf16>, vector<256x256xbf16>, vector<8x256xf32> -> vector<8x256xf32>
    %82 = arith.addf %72, %81 : vector<8x256xf32>
    %83 = vector.extract_strided_slice %0 {offsets = [0, 8], sizes = [8, 1], strides = [1, 1]} : vector<8x16xi32> to vector<8x1xi32>
    %84 = vector.broadcast %83 : vector<8x1xi32> to vector<8x256xi32>
    %85 = arith.cmpi eq, %84, %1 : vector<8x256xi32>
    %86 = arith.extui %85 : vector<8x256xi1> to vector<8x256xi32>
    %87 = arith.sitofp %86 : vector<8x256xi32> to vector<8x256xf32>
    %88 = arith.truncf %87 : vector<8x256xf32> to vector<8x256xbf16>
    %c8 = arith.constant 8 : index
    %c0_26 = arith.constant 0 : index
    %c0_27 = arith.constant 0 : index
    %89 = vector.load %arg2[%c8, %c0_26, %c0_27] : memref<16x256x256xbf16, #tpu.memory_space<vmem>>, vector<1x256x256xbf16>
    %90 = vector.shape_cast %89 : vector<1x256x256xbf16> to vector<256x256xbf16>
    %cst_28 = arith.constant dense<0.000000e+00> : vector<8x256xf32>
    %91 = tpu.matmul %88, %90, %cst_28 {dimension_numbers = #tpu.dot_dimension_numbers<[1], [0], [0], [1], [0, 0, 1, 1], [], []>} : vector<8x256xbf16>, vector<256x256xbf16>, vector<8x256xf32> -> vector<8x256xf32>
    %92 = arith.addf %82, %91 : vector<8x256xf32>
    %93 = vector.extract_strided_slice %0 {offsets = [0, 9], sizes = [8, 1], strides = [1, 1]} : vector<8x16xi32> to vector<8x1xi32>
    %94 = vector.broadcast %93 : vector<8x1xi32> to vector<8x256xi32>
    %95 = arith.cmpi eq, %94, %1 : vector<8x256xi32>
    %96 = arith.extui %95 : vector<8x256xi1> to vector<8x256xi32>
    %97 = arith.sitofp %96 : vector<8x256xi32> to vector<8x256xf32>
    %98 = arith.truncf %97 : vector<8x256xf32> to vector<8x256xbf16>
    %c9 = arith.constant 9 : index
    %c0_29 = arith.constant 0 : index
    %c0_30 = arith.constant 0 : index
    %99 = vector.load %arg2[%c9, %c0_29, %c0_30] : memref<16x256x256xbf16, #tpu.memory_space<vmem>>, vector<1x256x256xbf16>
    %100 = vector.shape_cast %99 : vector<1x256x256xbf16> to vector<256x256xbf16>
    %cst_31 = arith.constant dense<0.000000e+00> : vector<8x256xf32>
    %101 = tpu.matmul %98, %100, %cst_31 {dimension_numbers = #tpu.dot_dimension_numbers<[1], [0], [0], [1], [0, 0, 1, 1], [], []>} : vector<8x256xbf16>, vector<256x256xbf16>, vector<8x256xf32> -> vector<8x256xf32>
    %102 = arith.addf %92, %101 : vector<8x256xf32>
    %103 = vector.extract_strided_slice %0 {offsets = [0, 10], sizes = [8, 1], strides = [1, 1]} : vector<8x16xi32> to vector<8x1xi32>
    %104 = vector.broadcast %103 : vector<8x1xi32> to vector<8x256xi32>
    %105 = arith.cmpi eq, %104, %1 : vector<8x256xi32>
    %106 = arith.extui %105 : vector<8x256xi1> to vector<8x256xi32>
    %107 = arith.sitofp %106 : vector<8x256xi32> to vector<8x256xf32>
    %108 = arith.truncf %107 : vector<8x256xf32> to vector<8x256xbf16>
    %c10 = arith.constant 10 : index
    %c0_32 = arith.constant 0 : index
    %c0_33 = arith.constant 0 : index
    %109 = vector.load %arg2[%c10, %c0_32, %c0_33] : memref<16x256x256xbf16, #tpu.memory_space<vmem>>, vector<1x256x256xbf16>
    %110 = vector.shape_cast %109 : vector<1x256x256xbf16> to vector<256x256xbf16>
    %cst_34 = arith.constant dense<0.000000e+00> : vector<8x256xf32>
    %111 = tpu.matmul %108, %110, %cst_34 {dimension_numbers = #tpu.dot_dimension_numbers<[1], [0], [0], [1], [0, 0, 1, 1], [], []>} : vector<8x256xbf16>, vector<256x256xbf16>, vector<8x256xf32> -> vector<8x256xf32>
    %112 = arith.addf %102, %111 : vector<8x256xf32>
    %113 = vector.extract_strided_slice %0 {offsets = [0, 11], sizes = [8, 1], strides = [1, 1]} : vector<8x16xi32> to vector<8x1xi32>
    %114 = vector.broadcast %113 : vector<8x1xi32> to vector<8x256xi32>
    %115 = arith.cmpi eq, %114, %1 : vector<8x256xi32>
    %116 = arith.extui %115 : vector<8x256xi1> to vector<8x256xi32>
    %117 = arith.sitofp %116 : vector<8x256xi32> to vector<8x256xf32>
    %118 = arith.truncf %117 : vector<8x256xf32> to vector<8x256xbf16>
    %c11 = arith.constant 11 : index
    %c0_35 = arith.constant 0 : index
    %c0_36 = arith.constant 0 : index
    %119 = vector.load %arg2[%c11, %c0_35, %c0_36] : memref<16x256x256xbf16, #tpu.memory_space<vmem>>, vector<1x256x256xbf16>
    %120 = vector.shape_cast %119 : vector<1x256x256xbf16> to vector<256x256xbf16>
    %cst_37 = arith.constant dense<0.000000e+00> : vector<8x256xf32>
    %121 = tpu.matmul %118, %120, %cst_37 {dimension_numbers = #tpu.dot_dimension_numbers<[1], [0], [0], [1], [0, 0, 1, 1], [], []>} : vector<8x256xbf16>, vector<256x256xbf16>, vector<8x256xf32> -> vector<8x256xf32>
    %122 = arith.addf %112, %121 : vector<8x256xf32>
    %123 = vector.extract_strided_slice %0 {offsets = [0, 12], sizes = [8, 1], strides = [1, 1]} : vector<8x16xi32> to vector<8x1xi32>
    %124 = vector.broadcast %123 : vector<8x1xi32> to vector<8x256xi32>
    %125 = arith.cmpi eq, %124, %1 : vector<8x256xi32>
    %126 = arith.extui %125 : vector<8x256xi1> to vector<8x256xi32>
    %127 = arith.sitofp %126 : vector<8x256xi32> to vector<8x256xf32>
    %128 = arith.truncf %127 : vector<8x256xf32> to vector<8x256xbf16>
    %c12 = arith.constant 12 : index
    %c0_38 = arith.constant 0 : index
    %c0_39 = arith.constant 0 : index
    %129 = vector.load %arg2[%c12, %c0_38, %c0_39] : memref<16x256x256xbf16, #tpu.memory_space<vmem>>, vector<1x256x256xbf16>
    %130 = vector.shape_cast %129 : vector<1x256x256xbf16> to vector<256x256xbf16>
    %cst_40 = arith.constant dense<0.000000e+00> : vector<8x256xf32>
    %131 = tpu.matmul %128, %130, %cst_40 {dimension_numbers = #tpu.dot_dimension_numbers<[1], [0], [0], [1], [0, 0, 1, 1], [], []>} : vector<8x256xbf16>, vector<256x256xbf16>, vector<8x256xf32> -> vector<8x256xf32>
    %132 = arith.addf %122, %131 : vector<8x256xf32>
    %133 = vector.extract_strided_slice %0 {offsets = [0, 13], sizes = [8, 1], strides = [1, 1]} : vector<8x16xi32> to vector<8x1xi32>
    %134 = vector.broadcast %133 : vector<8x1xi32> to vector<8x256xi32>
    %135 = arith.cmpi eq, %134, %1 : vector<8x256xi32>
    %136 = arith.extui %135 : vector<8x256xi1> to vector<8x256xi32>
    %137 = arith.sitofp %136 : vector<8x256xi32> to vector<8x256xf32>
    %138 = arith.truncf %137 : vector<8x256xf32> to vector<8x256xbf16>
    %c13 = arith.constant 13 : index
    %c0_41 = arith.constant 0 : index
    %c0_42 = arith.constant 0 : index
    %139 = vector.load %arg2[%c13, %c0_41, %c0_42] : memref<16x256x256xbf16, #tpu.memory_space<vmem>>, vector<1x256x256xbf16>
    %140 = vector.shape_cast %139 : vector<1x256x256xbf16> to vector<256x256xbf16>
    %cst_43 = arith.constant dense<0.000000e+00> : vector<8x256xf32>
    %141 = tpu.matmul %138, %140, %cst_43 {dimension_numbers = #tpu.dot_dimension_numbers<[1], [0], [0], [1], [0, 0, 1, 1], [], []>} : vector<8x256xbf16>, vector<256x256xbf16>, vector<8x256xf32> -> vector<8x256xf32>
    %142 = arith.addf %132, %141 : vector<8x256xf32>
    %143 = vector.extract_strided_slice %0 {offsets = [0, 14], sizes = [8, 1], strides = [1, 1]} : vector<8x16xi32> to vector<8x1xi32>
    %144 = vector.broadcast %143 : vector<8x1xi32> to vector<8x256xi32>
    %145 = arith.cmpi eq, %144, %1 : vector<8x256xi32>
    %146 = arith.extui %145 : vector<8x256xi1> to vector<8x256xi32>
    %147 = arith.sitofp %146 : vector<8x256xi32> to vector<8x256xf32>
    %148 = arith.truncf %147 : vector<8x256xf32> to vector<8x256xbf16>
    %c14 = arith.constant 14 : index
    %c0_44 = arith.constant 0 : index
    %c0_45 = arith.constant 0 : index
    %149 = vector.load %arg2[%c14, %c0_44, %c0_45] : memref<16x256x256xbf16, #tpu.memory_space<vmem>>, vector<1x256x256xbf16>
    %150 = vector.shape_cast %149 : vector<1x256x256xbf16> to vector<256x256xbf16>
    %cst_46 = arith.constant dense<0.000000e+00> : vector<8x256xf32>
    %151 = tpu.matmul %148, %150, %cst_46 {dimension_numbers = #tpu.dot_dimension_numbers<[1], [0], [0], [1], [0, 0, 1, 1], [], []>} : vector<8x256xbf16>, vector<256x256xbf16>, vector<8x256xf32> -> vector<8x256xf32>
    %152 = arith.addf %142, %151 : vector<8x256xf32>
    %153 = vector.extract_strided_slice %0 {offsets = [0, 15], sizes = [8, 1], strides = [1, 1]} : vector<8x16xi32> to vector<8x1xi32>
    %154 = vector.broadcast %153 : vector<8x1xi32> to vector<8x256xi32>
    %155 = arith.cmpi eq, %154, %1 : vector<8x256xi32>
    %156 = arith.extui %155 : vector<8x256xi1> to vector<8x256xi32>
    %157 = arith.sitofp %156 : vector<8x256xi32> to vector<8x256xf32>
    %158 = arith.truncf %157 : vector<8x256xf32> to vector<8x256xbf16>
    %c15 = arith.constant 15 : index
    %c0_47 = arith.constant 0 : index
    %c0_48 = arith.constant 0 : index
    %159 = vector.load %arg2[%c15, %c0_47, %c0_48] : memref<16x256x256xbf16, #tpu.memory_space<vmem>>, vector<1x256x256xbf16>
    %160 = vector.shape_cast %159 : vector<1x256x256xbf16> to vector<256x256xbf16>
    %cst_49 = arith.constant dense<0.000000e+00> : vector<8x256xf32>
    %161 = tpu.matmul %158, %160, %cst_49 {dimension_numbers = #tpu.dot_dimension_numbers<[1], [0], [0], [1], [0, 0, 1, 1], [], []>} : vector<8x256xbf16>, vector<256x256xbf16>, vector<8x256xf32> -> vector<8x256xf32>
    %162 = arith.addf %152, %161 : vector<8x256xf32>
    %c0_50 = arith.constant 0 : index
    %c0_51 = arith.constant 0 : index
    %163 = vector.load %arg3[%c0_50, %c0_51] : memref<1x256xf32, #tpu.memory_space<vmem>>, vector<1x256xf32>
    %164 = vector.broadcast %163 : vector<1x256xf32> to vector<8x256xf32>
    %165 = arith.addf %162, %164 : vector<8x256xf32>
    %166 = arith.truncf %165 : vector<8x256xf32> to vector<8x256xbf16>
    %c0_52 = arith.constant 0 : index
    %c0_53 = arith.constant 0 : index
    %167 = vector.load %arg4[%c0_52, %c0_53] : memref<256x128xbf16, #tpu.memory_space<vmem>>, vector<256x128xbf16>
    %cst_54 = arith.constant dense<0.000000e+00> : vector<8x128xf32>
    %168 = tpu.matmul %166, %167, %cst_54 {dimension_numbers = #tpu.dot_dimension_numbers<[1], [0], [0], [1], [0, 0, 1, 1], [], []>} : vector<8x256xbf16>, vector<256x128xbf16>, vector<8x128xf32> -> vector<8x128xf32>
    %c0_55 = arith.constant 0 : index
    %c0_56 = arith.constant 0 : index
    %169 = vector.load %arg5[%c0_55, %c0_56] : memref<1x128xf32, #tpu.memory_space<vmem>>, vector<1x128xf32>
    %170 = vector.broadcast %169 : vector<1x128xf32> to vector<8x128xf32>
    %171 = arith.addf %168, %170 : vector<8x128xf32>
    %cst_57 = arith.constant 0.000000e+00 : f32
    %172 = vector.broadcast %cst_57 : f32 to vector<8x128xf32>
    %173 = arith.maximumf %171, %172 : vector<8x128xf32>
    %174 = arith.truncf %173 : vector<8x128xf32> to vector<8x128xbf16>
    %c0_58 = arith.constant 0 : index
    %c0_59 = arith.constant 0 : index
    %175 = vector.load %arg6[%c0_58, %c0_59] : memref<128x128xbf16, #tpu.memory_space<vmem>>, vector<128x128xbf16>
    %cst_60 = arith.constant dense<0.000000e+00> : vector<8x128xf32>
    %176 = tpu.matmul %174, %175, %cst_60 {dimension_numbers = #tpu.dot_dimension_numbers<[1], [0], [0], [1], [0, 0, 1, 1], [], []>} : vector<8x128xbf16>, vector<128x128xbf16>, vector<8x128xf32> -> vector<8x128xf32>
    %c0_61 = arith.constant 0 : index
    %c0_62 = arith.constant 0 : index
    %177 = vector.load %arg7[%c0_61, %c0_62] : memref<1x128xf32, #tpu.memory_space<vmem>>, vector<1x128xf32>
    %178 = vector.broadcast %177 : vector<1x128xf32> to vector<8x128xf32>
    %179 = arith.addf %176, %178 : vector<8x128xf32>
    %c0_63 = arith.constant 0 : index
    %c0_64 = arith.constant 0 : index
    %180 = vector.load %arg8[%c0_63, %c0_64] : memref<8x128xf32, #tpu.memory_space<vmem>>, vector<8x128xf32>
    tpu.vector_store %arg8[%c0_63, %c0_64], %179 {strides = array<i32>} : memref<8x128xf32, #tpu.memory_space<vmem>>, vector<8x128xf32>,
    return
  }
  func.func @transform_0(%arg0: i32) -> (i32, i32) {
    %c0_i32 = arith.constant 0 : i32
    %c0_i32_0 = arith.constant 0 : i32
    return %arg0, %c0_i32 : i32, i32
  }
  func.func @transform_1(%arg0: i32) -> (i32, i32, i32) {
    %c0_i32 = arith.constant 0 : i32
    %c0_i32_0 = arith.constant 0 : i32
    %c0_i32_1 = arith.constant 0 : i32
    %c0_i32_2 = arith.constant 0 : i32
    return %c0_i32, %c0_i32_0, %c0_i32_1 : i32, i32, i32
  }
  func.func @transform_2(%arg0: i32) -> (i32, i32) {
    %c0_i32 = arith.constant 0 : i32
    %c0_i32_0 = arith.constant 0 : i32
    %c0_i32_1 = arith.constant 0 : i32
    return %c0_i32, %c0_i32_0 : i32, i32
  }
  func.func @transform_3(%arg0: i32) -> (i32, i32) {
    %c0_i32 = arith.constant 0 : i32
    %c0_i32_0 = arith.constant 0 : i32
    %c0_i32_1 = arith.constant 0 : i32
    return %c0_i32, %c0_i32_0 : i32, i32
  }
  func.func @transform_4(%arg0: i32) -> (i32, i32) {
    %c0_i32 = arith.constant 0 : i32
    %c0_i32_0 = arith.constant 0 : i32
    %c0_i32_1 = arith.constant 0 : i32
    return %c0_i32, %c0_i32_0 : i32, i32
  }
  func.func @transform_5(%arg0: i32) -> (i32, i32) {
    %c0_i32 = arith.constant 0 : i32
    %c0_i32_0 = arith.constant 0 : i32
    %c0_i32_1 = arith.constant 0 : i32
    return %c0_i32, %c0_i32_0 : i32, i32
  }
  func.func @transform_6(%arg0: i32) -> (i32, i32) {
    %c0_i32 = arith.constant 0 : i32
    %c0_i32_0 = arith.constant 0 : i32
    %c0_i32_1 = arith.constant 0 : i32
    return %c0_i32, %c0_i32_0 : i32, i32
  }
  func.func @transform_7(%arg0: i32) -> (i32, i32) {
    %c0_i32 = arith.constant 0 : i32
    %c0_i32_0 = arith.constant 0 : i32
    return %arg0, %c0_i32 : i32, i32
  }
}

</mosaic_0001>

<llo_original>
// kernel: tpu_custom_call.1
$region0: #{tpu_custom_call.1}
  #allocation0 [shape = 'u32[]', space=smem, size = 0x4, offset = 0x4, fixed_abs, tag = 'smem constant byte address 0x4 - core index']
  #allocation1 [shape = 'u32[144,128]{1,0:T(1,128)}', space=vmem, size = 0x12000, scoped, tag = 'internal scratch']
  %s0 = inlined_call_operand.hbm [shape: s32[8,16], index: 0, kind: input, shape index: {}]
  %s1 = inlined_call_operand.hbm [shape: bf16[16,256,256], index: 1, kind: input, shape index: {}]
  %s2 = inlined_call_operand.hbm [shape: f32[1,256], index: 2, kind: input, shape index: {}]
  %s3 = inlined_call_operand.hbm [shape: bf16[256,128], index: 3, kind: input, shape index: {}]
  %s4 = inlined_call_operand.hbm [shape: f32[1,128], index: 4, kind: input, shape index: {}]
  %s5 = inlined_call_operand.hbm [shape: bf16[128,128], index: 5, kind: input, shape index: {}]
  %s6 = inlined_call_operand.hbm [shape: f32[1,128], index: 6, kind: input, shape index: {}]
  %s7 = inlined_call_operand.hbm [shape: f32[8,128], index: 7, kind: output, shape index: {}]
  %s8 = sld [smem:[#allocation0]]
  $region66: #{tpu_custom_call.1} parent=0
    _
  %s10 = ssub.s32 1, %s8
  %s11 = scalar_select 0, %s10, %s8
  $region1: #{tpu_custom_call.1} parent=0
    #allocation2 [shape = 'u8[4096]{0}', space=vmem, size = 0x1000, scoped, tag = 'input window, operand 0, single buffered']
    #allocation3 [shape = 's32[1]{0}', space=sflag, size = 0x4, scoped, tag = 'scoped memory for tpu_custom_call.1']
    #allocation4 [shape = 's32[1]{0}', space=sflag, size = 0x4, scoped, tag = 'scoped memory for tpu_custom_call.1']
    #allocation5 [shape = 'u8[2097152]{0}', space=vmem, size = 0x200000, scoped, tag = 'input window, operand 1, single buffered']
    #allocation6 [shape = 's32[1]{0}', space=sflag, size = 0x4, scoped, tag = 'scoped memory for tpu_custom_call.1']
    #allocation7 [shape = 'u8[1024]{0}', space=vmem, size = 0x400, scoped, tag = 'input window, operand 2, single buffered']
    #allocation8 [shape = 'u8[65536]{0}', space=vmem, size = 0x10000, scoped, tag = 'input window, operand 3, single buffered']
    #allocation9 [shape = 's32[1]{0}', space=sflag, size = 0x4, scoped, tag = 'scoped memory for tpu_custom_call.1']
    #allocation10 [shape = 'u8[512]{0}', space=vmem, size = 0x400, scoped, tag = 'input window, operand 4, single buffered']
    #allocation11 [shape = 'u8[32768]{0}', space=vmem, size = 0x8000, scoped, tag = 'input window, operand 5, single buffered']
    #allocation12 [shape = 's32[1]{0}', space=sflag, size = 0x4, scoped, tag = 'scoped memory for tpu_custom_call.1']
    #allocation13 [shape = 'u8[512]{0}', space=vmem, size = 0x400, scoped, tag = 'input window, operand 6, single buffered']
    #allocation14 [shape = 'u8[4096]{0}', space=vmem, size = 0x1000, scoped, tag = 'output window, operand 0, single buffered']
    %12 = vsyncpa [#allocation3], 0
    %13 = vsyncpa [#allocation6], 0
    %14 = vsyncpa [#allocation9], 0
    %15 = vsyncpa [#allocation12], 0
    %16 = vsyncpa [#allocation4], 0
    // Predicated region
    $region2: #{tpu_custom_call.1} parent=1 // pred_check
      _
    $region3: #{tpu_custom_call.1} parent=1 // pred_check_branch
      %18 = sbr.rel (0) target = $region5
    $region4: #{tpu_custom_call.1} parent=1 // pred_region
      %s20 = ssub.s32 128, 128
      %21 = vsyncadd [#allocation3], %s20
      %s23 = sshll.u32 [#allocation2], 4
      %s24 = int_to_ptr.vmem [resolvable:$true] %s23
      %26 = dma.hbm_to_vmem [thread:$0]  %s0, 128, %s24, [#allocation3]
    $region5: #{tpu_custom_call.1} parent=1 // pred_fallthru
      _
    // Predicated region
    $region6: #{tpu_custom_call.1} parent=1 // pred_check
      _
    $region7: #{tpu_custom_call.1} parent=1 // pred_check_branch
      %28 = sbr.rel (0) target = $region9
    $region8: #{tpu_custom_call.1} parent=1 // pred_region
      %s30 = ssub.s32 65536, 65536
      %31 = vsyncadd [#allocation6], %s30
      %s32 = sshll.u32 [#allocation5], 4
      %s33 = int_to_ptr.vmem [resolvable:$true] %s32
      %38 = dma.hbm_to_vmem [thread:$0]  %s1, 65536, %s33, [#allocation6], 128, 128, 8
    $region9: #{tpu_custom_call.1} parent=1 // pred_fallthru
      _
    // Predicated region
    $region10: #{tpu_custom_call.1} parent=1 // pred_check
      _
    $region11: #{tpu_custom_call.1} parent=1 // pred_check_branch
      %40 = sbr.rel (0) target = $region13
    $region12: #{tpu_custom_call.1} parent=1 // pred_region
      %s42 = ssub.s32 32, 32
      %43 = vsyncadd [#allocation6], %s42
      %s45 = sshll.u32 [#allocation7], 4
      %s46 = int_to_ptr.vmem [resolvable:$true] %s45
      %48 = dma.hbm_to_vmem [thread:$0]  %s2, 32, %s46, [#allocation6]
    $region13: #{tpu_custom_call.1} parent=1 // pred_fallthru
      _
    // Predicated region
    $region14: #{tpu_custom_call.1} parent=1 // pred_check
      _
    $region15: #{tpu_custom_call.1} parent=1 // pred_check_branch
      %50 = sbr.rel (0) target = $region17
    $region16: #{tpu_custom_call.1} parent=1 // pred_region
      %s52 = ssub.s32 2048, 2048
      %53 = vsyncadd [#allocation9], %s52
      %s54 = sshll.u32 [#allocation8], 4
      %s55 = int_to_ptr.vmem [resolvable:$true] %s54
      %60 = dma.hbm_to_vmem [thread:$0]  %s3, 2048, %s55, [#allocation9], 64, 64, 4
    $region17: #{tpu_custom_call.1} parent=1 // pred_fallthru
      _
    // Predicated region
    $region18: #{tpu_custom_call.1} parent=1 // pred_check
      _
    $region19: #{tpu_custom_call.1} parent=1 // pred_check_branch
      %62 = sbr.rel (0) target = $region21
    $region20: #{tpu_custom_call.1} parent=1 // pred_region
      %s64 = ssub.s32 16, 16
      %65 = vsyncadd [#allocation9], %s64
      %s67 = sshll.u32 [#allocation10], 4
      %s68 = int_to_ptr.vmem [resolvable:$true] %s67
      %70 = dma.hbm_to_vmem [thread:$0]  %s4, 16, %s68, [#allocation9]
    $region21: #{tpu_custom_call.1} parent=1 // pred_fallthru
      _
    // Predicated region
    $region22: #{tpu_custom_call.1} parent=1 // pred_check
      _
    $region23: #{tpu_custom_call.1} parent=1 // pred_check_branch
      %72 = sbr.rel (0) target = $region25
    $region24: #{tpu_custom_call.1} parent=1 // pred_region
      %s74 = ssub.s32 1024, 1024
      %75 = vsyncadd [#allocation12], %s74
      %s76 = sshll.u32 [#allocation11], 4
      %s77 = int_to_ptr.vmem [resolvable:$true] %s76
      %82 = dma.hbm_to_vmem [thread:$0]  %s5, 1024, %s77, [#allocation12], 64, 64, 4
    $region25: #{tpu_custom_call.1} parent=1 // pred_fallthru
      _
    // Predicated region
    $region26: #{tpu_custom_call.1} parent=1 // pred_check
      _
    $region27: #{tpu_custom_call.1} parent=1 // pred_check_branch
      %84 = sbr.rel (0) target = $region29
    $region28: #{tpu_custom_call.1} parent=1 // pred_region
      %s86 = ssub.s32 16, 16
      %87 = vsyncadd [#allocation12], %s86
      %s89 = sshll.u32 [#allocation13], 4
      %s90 = int_to_ptr.vmem [resolvable:$true] %s89
      %92 = dma.hbm_to_vmem [thread:$0]  %s6, 16, %s90, [#allocation12]
    $region29: #{tpu_custom_call.1} parent=1 // pred_fallthru
      _
    // Predicated region
    $region30: #{tpu_custom_call.1} parent=1 // pred_check
      _
    $region31: #{tpu_custom_call.1} parent=1 // pred_check_branch
      %94 = sbr.rel (0) target = $region33
    $region32: #{tpu_custom_call.1} parent=1 // pred_region
      %95 = dma.done [#allocation3], 128
    $region33: #{tpu_custom_call.1} parent=1 // pred_fallthru
      _
    // Predicated region
    $region34: #{tpu_custom_call.1} parent=1 // pred_check
      _
    $region35: #{tpu_custom_call.1} parent=1 // pred_check_branch
      %97 = sbr.rel (0) target = $region37
    $region36: #{tpu_custom_call.1} parent=1 // pred_region
      %98 = dma.done [#allocation6], 65536
    $region37: #{tpu_custom_call.1} parent=1 // pred_fallthru
      _
    // Predicated region
    $region38: #{tpu_custom_call.1} parent=1 // pred_check
      _
    $region39: #{tpu_custom_call.1} parent=1 // pred_check_branch
      %100 = sbr.rel (0) target = $region41
    $region40: #{tpu_custom_call.1} parent=1 // pred_region
      %101 = dma.done [#allocation6], 32
    $region41: #{tpu_custom_call.1} parent=1 // pred_fallthru
      _
    // Predicated region
    $region42: #{tpu_custom_call.1} parent=1 // pred_check
      _
    $region43: #{tpu_custom_call.1} parent=1 // pred_check_branch
      %103 = sbr.rel (0) target = $region45
    $region44: #{tpu_custom_call.1} parent=1 // pred_region
      %104 = dma.done [#allocation9], 2048
    $region45: #{tpu_custom_call.1} parent=1 // pred_fallthru
      _
    // Predicated region
    $region46: #{tpu_custom_call.1} parent=1 // pred_check
      _
    $region47: #{tpu_custom_call.1} parent=1 // pred_check_branch
      %106 = sbr.rel (0) target = $region49
    $region48: #{tpu_custom_call.1} parent=1 // pred_region
      %107 = dma.done [#allocation9], 16
    $region49: #{tpu_custom_call.1} parent=1 // pred_fallthru
      _
    // Predicated region
    $region50: #{tpu_custom_call.1} parent=1 // pred_check
      _
    $region51: #{tpu_custom_call.1} parent=1 // pred_check_branch
      %109 = sbr.rel (0) target = $region53
    $region52: #{tpu_custom_call.1} parent=1 // pred_region
      %110 = dma.done [#allocation12], 1024
    $region53: #{tpu_custom_call.1} parent=1 // pred_fallthru
      _
    // Predicated region
    $region54: #{tpu_custom_call.1} parent=1 // pred_check
      _
    $region55: #{tpu_custom_call.1} parent=1 // pred_check_branch
      %112 = sbr.rel (0) target = $region57
    $region56: #{tpu_custom_call.1} parent=1 // pred_region
      %113 = dma.done [#allocation12], 16
    $region57: #{tpu_custom_call.1} parent=1 // pred_fallthru
      _
    %v115 = vld [vmem:[#allocation2] sm:$0xff]
    %v116 = vlaneseq
    %v117 = vand.u32 %v116, 127
    %v118 = vadd.s32 %v117, 128
    %119 = vset.pattern.permute.xlu0 0
    %120 = vperm.xlu0 %119, %v115
    %v121 = vpop.permute.xlu0 %120
    %vm122 = vcmp.eq.s32.totalorder %v121, %v117
    %vm123 = vcmp.eq.s32.totalorder %v121, %v118
    %v124 = vsel %vm122, 1, 0
    %v125 = vsel %vm123, 1, 0
    %v126 = vcvt.s32.f32 %v124
    %v127 = vcvt.s32.f32 %v125
    %v128 = vpack.c.bf16 %v126, %v126
    %v129 = vpack.c.bf16 %v127, %v127
    %v130 = vld [vmem:[#allocation5] sm:$0xff]
    %v131 = vld [vmem:[#allocation5 + $0x8] sm:$0xff]
    %v132 = vld [vmem:[#allocation5 + $0x10] sm:$0xff]
    %v133 = vld [vmem:[#allocation5 + $0x18] sm:$0xff]
    %v134 = vld [vmem:[#allocation5 + $0x20] sm:$0xff]
    %v135 = vld [vmem:[#allocation5 + $0x28] sm:$0xff]
    %v136 = vld [vmem:[#allocation5 + $0x30] sm:$0xff]
    %v137 = vld [vmem:[#allocation5 + $0x38] sm:$0xff]
    %v138 = vld [vmem:[#allocation5 + $0x40] sm:$0xff]
    %v139 = vld [vmem:[#allocation5 + $0x48] sm:$0xff]
    %v140 = vld [vmem:[#allocation5 + $0x50] sm:$0xff]
    %v141 = vld [vmem:[#allocation5 + $0x58] sm:$0xff]
    %v142 = vld [vmem:[#allocation5 + $0x60] sm:$0xff]
    %v143 = vld [vmem:[#allocation5 + $0x68] sm:$0xff]
    %v144 = vld [vmem:[#allocation5 + $0x70] sm:$0xff]
    %v145 = vld [vmem:[#allocation5 + $0x78] sm:$0xff]
    %v146 = vld [vmem:[#allocation5 + $0x80] sm:$0xff]
    %v147 = vld [vmem:[#allocation5 + $0x88] sm:$0xff]
    %v148 = vld [vmem:[#allocation5 + $0x90] sm:$0xff]
    %v149 = vld [vmem:[#allocation5 + $0x98] sm:$0xff]
    %v150 = vld [vmem:[#allocation5 + $0xa0] sm:$0xff]
    %v151 = vld [vmem:[#allocation5 + $0xa8] sm:$0xff]
    %v152 = vld [vmem:[#allocation5 + $0xb0] sm:$0xff]
    %v153 = vld [vmem:[#allocation5 + $0xb8] sm:$0xff]
    %v154 = vld [vmem:[#allocation5 + $0xc0] sm:$0xff]
    %v155 = vld [vmem:[#allocation5 + $0xc8] sm:$0xff]
    %v156 = vld [vmem:[#allocation5 + $0xd0] sm:$0xff]
    %v157 = vld [vmem:[#allocation5 + $0xd8] sm:$0xff]
    %v158 = vld [vmem:[#allocation5 + $0xe0] sm:$0xff]
    %v159 = vld [vmem:[#allocation5 + $0xe8] sm:$0xff]
    %v160 = vld [vmem:[#allocation5 + $0xf0] sm:$0xff]
    %v161 = vld [vmem:[#allocation5 + $0xf8] sm:$0xff]
    %162 = vset.pattern.permute.xlu0 1
    %163 = vperm.xlu0 %162, %v115
    %v164 = vpop.permute.xlu0 %163
    %vm165 = vcmp.eq.s32.totalorder %v164, %v117
    %vm166 = vcmp.eq.s32.totalorder %v164, %v118
    %v167 = vsel %vm165, 1, 0
    %v168 = vsel %vm166, 1, 0
    %v169 = vcvt.s32.f32 %v167
    %v170 = vcvt.s32.f32 %v168
    %v171 = vpack.c.bf16 %v169, %v169
    %v172 = vpack.c.bf16 %v170, %v170
    %s173 = scalar_lea.vmem [#allocation5], 256
    %v174 = vld [vmem:[%s173] sm:$0xff]
    %v175 = vld [vmem:[%s173 + $0x8] sm:$0xff]
    %v176 = vld [vmem:[%s173 + $0x10] sm:$0xff]
    %v177 = vld [vmem:[%s173 + $0x18] sm:$0xff]
    %v178 = vld [vmem:[%s173 + $0x20] sm:$0xff]
    %v179 = vld [vmem:[%s173 + $0x28] sm:$0xff]
    %v180 = vld [vmem:[%s173 + $0x30] sm:$0xff]
    %v181 = vld [vmem:[%s173 + $0x38] sm:$0xff]
    %v182 = vld [vmem:[%s173 + $0x40] sm:$0xff]
    %v183 = vld [vmem:[%s173 + $0x48] sm:$0xff]
    %v184 = vld [vmem:[%s173 + $0x50] sm:$0xff]
    %v185 = vld [vmem:[%s173 + $0x58] sm:$0xff]
    %v186 = vld [vmem:[%s173 + $0x60] sm:$0xff]
    %v187 = vld [vmem:[%s173 + $0x68] sm:$0xff]
    %v188 = vld [vmem:[%s173 + $0x70] sm:$0xff]
    %v189 = vld [vmem:[%s173 + $0x78] sm:$0xff]
    %v190 = vld [vmem:[%s173 + $0x80] sm:$0xff]
    %v191 = vld [vmem:[%s173 + $0x88] sm:$0xff]
    %v192 = vld [vmem:[%s173 + $0x90] sm:$0xff]
    %v193 = vld [vmem:[%s173 + $0x98] sm:$0xff]
    %v194 = vld [vmem:[%s173 + $0xa0] sm:$0xff]
    %v195 = vld [vmem:[%s173 + $0xa8] sm:$0xff]
    %v196 = vld [vmem:[%s173 + $0xb0] sm:$0xff]
    %v197 = vld [vmem:[%s173 + $0xb8] sm:$0xff]
    %v198 = vld [vmem:[%s173 + $0xc0] sm:$0xff]
    %v199 = vld [vmem:[%s173 + $0xc8] sm:$0xff]
    %v200 = vld [vmem:[%s173 + $0xd0] sm:$0xff]
    %v201 = vld [vmem:[%s173 + $0xd8] sm:$0xff]
    %v202 = vld [vmem:[%s173 + $0xe0] sm:$0xff]
    %v203 = vld [vmem:[%s173 + $0xe8] sm:$0xff]
    %v204 = vld [vmem:[%s173 + $0xf0] sm:$0xff]
    %v205 = vld [vmem:[%s173 + $0xf8] sm:$0xff]
    %v238 = vunpack.c.l.b16 %v174
    %v239 = vunpack.c.h.b16 %v174
    %v240 = vunpack.c.l.b16 %v175
    %v241 = vunpack.c.h.b16 %v175
    %v242 = vunpack.c.l.b16 %v176
    %v243 = vunpack.c.h.b16 %v176
    %v244 = vunpack.c.l.b16 %v177
    %v245 = vunpack.c.h.b16 %v177
    %v246 = vunpack.c.l.b16 %v178
    %v247 = vunpack.c.h.b16 %v178
    %v248 = vunpack.c.l.b16 %v179
    %v249 = vunpack.c.h.b16 %v179
    %v250 = vunpack.c.l.b16 %v180
    %v251 = vunpack.c.h.b16 %v180
    %v252 = vunpack.c.l.b16 %v181
    %v253 = vunpack.c.h.b16 %v181
    %v254 = vunpack.c.l.b16 %v182
    %v255 = vunpack.c.h.b16 %v182
    %v256 = vunpack.c.l.b16 %v183
    %v257 = vunpack.c.h.b16 %v183
    %v258 = vunpack.c.l.b16 %v184
    %v259 = vunpack.c.h.b16 %v184
    %v260 = vunpack.c.l.b16 %v185
    %v261 = vunpack.c.h.b16 %v185
    %v262 = vunpack.c.l.b16 %v186
    %v263 = vunpack.c.h.b16 %v186
    %v264 = vunpack.c.l.b16 %v187
    %v265 = vunpack.c.h.b16 %v187
    %v266 = vunpack.c.l.b16 %v188
    %v267 = vunpack.c.h.b16 %v188
    %v268 = vunpack.c.l.b16 %v189
    %v269 = vunpack.c.h.b16 %v189
    %v270 = vunpack.c.l.b16 %v190
    %v271 = vunpack.c.h.b16 %v190
    %v272 = vunpack.c.l.b16 %v191
    %v273 = vunpack.c.h.b16 %v191
    %v274 = vunpack.c.l.b16 %v192
    %v275 = vunpack.c.h.b16 %v192
    %v276 = vunpack.c.l.b16 %v193
    %v277 = vunpack.c.h.b16 %v193
    %v278 = vunpack.c.l.b16 %v194
    %v279 = vunpack.c.h.b16 %v194
    %v280 = vunpack.c.l.b16 %v195
    %v281 = vunpack.c.h.b16 %v195
    %v282 = vunpack.c.l.b16 %v196
    %v283 = vunpack.c.h.b16 %v196
    %v284 = vunpack.c.l.b16 %v197
    %v285 = vunpack.c.h.b16 %v197
    %v286 = vunpack.c.l.b16 %v198
    %v287 = vunpack.c.h.b16 %v198
    %v288 = vunpack.c.l.b16 %v199
    %v289 = vunpack.c.h.b16 %v199
    %v290 = vunpack.c.l.b16 %v200
    %v291 = vunpack.c.h.b16 %v200
    %v292 = vunpack.c.l.b16 %v201
    %v293 = vunpack.c.h.b16 %v201
    %v294 = vunpack.c.l.b16 %v202
    %v295 = vunpack.c.h.b16 %v202
    %v296 = vunpack.c.l.b16 %v203
    %v297 = vunpack.c.h.b16 %v203
    %v298 = vunpack.c.l.b16 %v204
    %v299 = vunpack.c.h.b16 %v204
    %v300 = vunpack.c.l.b16 %v205
    %v301 = vunpack.c.h.b16 %v205
    %v302 = vpack.c.b16 %v240, %v238
    %v303 = vpack.c.b16 %v241, %v239
    %v304 = vpack.c.b16 %v244, %v242
    %v305 = vpack.c.b16 %v245, %v243
    %v306 = vpack.c.b16 %v248, %v246
    %v307 = vpack.c.b16 %v249, %v247
    %v308 = vpack.c.b16 %v252, %v250
    %v309 = vpack.c.b16 %v253, %v251
    %v310 = vpack.c.b16 %v256, %v254
    %v311 = vpack.c.b16 %v257, %v255
    %v312 = vpack.c.b16 %v260, %v258
    %v313 = vpack.c.b16 %v261, %v259
    %v314 = vpack.c.b16 %v264, %v262
    %v315 = vpack.c.b16 %v265, %v263
    %v316 = vpack.c.b16 %v268, %v266
    %v317 = vpack.c.b16 %v269, %v267
    %v318 = vpack.c.b16 %v272, %v270
    %v319 = vpack.c.b16 %v273, %v271
    %v320 = vpack.c.b16 %v276, %v274
    %v321 = vpack.c.b16 %v277, %v275
    %v322 = vpack.c.b16 %v280, %v278
    %v323 = vpack.c.b16 %v281, %v279
    %v324 = vpack.c.b16 %v284, %v282
    %v325 = vpack.c.b16 %v285, %v283
    %v326 = vpack.c.b16 %v288, %v286
    %v327 = vpack.c.b16 %v289, %v287
    %v328 = vpack.c.b16 %v292, %v290
    %v329 = vpack.c.b16 %v293, %v291
    %v330 = vpack.c.b16 %v296, %v294
    %v331 = vpack.c.b16 %v297, %v295
    %v332 = vpack.c.b16 %v300, %v298
    %v333 = vpack.c.b16 %v301, %v299
    %366 = vmatprep.subr.bf16.mxu0 %v317
    %367 = vmatpush1.bf16.msra.mxu0 %v316
    %368 = vmatprep.subr.bf16.mxu0 %v315
    %369 = vmatpush1.bf16.msra.mxu0 %v314
    %370 = vmatprep.subr.bf16.mxu0 %v313
    %371 = vmatpush1.bf16.msra.mxu0 %v312
    %372 = vmatprep.subr.bf16.mxu0 %v311
    %373 = vmatpush1.bf16.msra.mxu0 %v310
    %374 = vmatprep.subr.bf16.mxu0 %v309
    %375 = vmatpush1.bf16.msra.mxu0 %v308
    %376 = vmatprep.subr.bf16.mxu0 %v307
    %377 = vmatpush1.bf16.msra.mxu0 %v306
    %378 = vmatprep.subr.bf16.mxu0 %v305
    %379 = vmatpush1.bf16.msra.mxu0 %v304
    %380 = vmatprep.subr.bf16.mxu0 %v303
    %381 = vmatpush1.bf16.msra.mxu0 %v302
    %382 = vmatprep.subr.bf16.mxu0 %v333
    %383 = vmatpush2.bf16.msra.mxu0 %v332
    %384 = vmatprep.subr.bf16.mxu0 %v331
    %385 = vmatpush2.bf16.msra.mxu0 %v330
    %386 = vmatprep.subr.bf16.mxu0 %v329
    %387 = vmatpush2.bf16.msra.mxu0 %v328
    %388 = vmatprep.subr.bf16.mxu0 %v327
    %389 = vmatpush2.bf16.msra.mxu0 %v326
    %390 = vmatprep.subr.bf16.mxu0 %v325
    %391 = vmatpush2.bf16.msra.mxu0 %v324
    %392 = vmatprep.subr.bf16.mxu0 %v323
    %393 = vmatpush2.bf16.msra.mxu0 %v322
    %394 = vmatprep.subr.bf16.mxu0 %v321
    %395 = vmatpush2.bf16.msra.mxu0 %v320
    %396 = vmatprep.subr.bf16.mxu0 %v319
    %397 = vmatpush2.bf16.msra.mxu0 %v318
    %398 = vmatprep.mubr.bf16.mxu0 %v172
    %399 = vmatmul.mubr.bf16.gmra.mxu0 %v171
    %v400 = vpop.f32.mrf.mxu0
    %v401 = vadd.f32 0.0, %v400
    %v402 = vpop.f32.mrf.mxu0
    %v403 = vadd.f32 0.0, %v402
    %v404 = vpop.f32.mrf.mxu0
    %v405 = vpop.f32.mrf.mxu0
    %406 = vdwg.mxu0
    %v439 = vunpack.c.l.b16 %v130
    %v440 = vunpack.c.h.b16 %v130
    %v441 = vunpack.c.l.b16 %v131
    %v442 = vunpack.c.h.b16 %v131
    %v443 = vunpack.c.l.b16 %v132
    %v444 = vunpack.c.h.b16 %v132
    %v445 = vunpack.c.l.b16 %v133
    %v446 = vunpack.c.h.b16 %v133
    %v447 = vunpack.c.l.b16 %v134
    %v448 = vunpack.c.h.b16 %v134
    %v449 = vunpack.c.l.b16 %v135
    %v450 = vunpack.c.h.b16 %v135
    %v451 = vunpack.c.l.b16 %v136
    %v452 = vunpack.c.h.b16 %v136
    %v453 = vunpack.c.l.b16 %v137
    %v454 = vunpack.c.h.b16 %v137
    %v455 = vunpack.c.l.b16 %v138
    %v456 = vunpack.c.h.b16 %v138
    %v457 = vunpack.c.l.b16 %v139
    %v458 = vunpack.c.h.b16 %v139
    %v459 = vunpack.c.l.b16 %v140
    %v460 = vunpack.c.h.b16 %v140
    %v461 = vunpack.c.l.b16 %v141
    %v462 = vunpack.c.h.b16 %v141
    %v463 = vunpack.c.l.b16 %v142
    %v464 = vunpack.c.h.b16 %v142
    %v465 = vunpack.c.l.b16 %v143
    %v466 = vunpack.c.h.b16 %v143
    %v467 = vunpack.c.l.b16 %v144
    %v468 = vunpack.c.h.b16 %v144
    %v469 = vunpack.c.l.b16 %v145
    %v470 = vunpack.c.h.b16 %v145
    %v471 = vunpack.c.l.b16 %v146
    %v472 = vunpack.c.h.b16 %v146
    %v473 = vunpack.c.l.b16 %v147
    %v474 = vunpack.c.h.b16 %v147
    %v475 = vunpack.c.l.b16 %v148
    %v476 = vunpack.c.h.b16 %v148
    %v477 = vunpack.c.l.b16 %v149
    %v478 = vunpack.c.h.b16 %v149
    %v479 = vunpack.c.l.b16 %v150
    %v480 = vunpack.c.h.b16 %v150
    %v481 = vunpack.c.l.b16 %v151
    %v482 = vunpack.c.h.b16 %v151
    %v483 = vunpack.c.l.b16 %v152
    %v484 = vunpack.c.h.b16 %v152
    %v485 = vunpack.c.l.b16 %v153
    %v486 = vunpack.c.h.b16 %v153
    %v487 = vunpack.c.l.b16 %v154
    %v488 = vunpack.c.h.b16 %v154
    %v489 = vunpack.c.l.b16 %v155
    %v490 = vunpack.c.h.b16 %v155
    %v491 = vunpack.c.l.b16 %v156
    %v492 = vunpack.c.h.b16 %v156
    %v493 = vunpack.c.l.b16 %v157
    %v494 = vunpack.c.h.b16 %v157
    %v495 = vunpack.c.l.b16 %v158
    %v496 = vunpack.c.h.b16 %v158
    %v497 = vunpack.c.l.b16 %v159
    %v498 = vunpack.c.h.b16 %v159
    %v499 = vunpack.c.l.b16 %v160
    %v500 = vunpack.c.h.b16 %v160
    %v501 = vunpack.c.l.b16 %v161
    %v502 = vunpack.c.h.b16 %v161
    %v503 = vpack.c.b16 %v441, %v439
    %v504 = vpack.c.b16 %v442, %v440
    %v505 = vpack.c.b16 %v445, %v443
    %v506 = vpack.c.b16 %v446, %v444
    %v507 = vpack.c.b16 %v449, %v447
    %v508 = vpack.c.b16 %v450, %v448
    %v509 = vpack.c.b16 %v453, %v451
    %v510 = vpack.c.b16 %v454, %v452
    %v511 = vpack.c.b16 %v457, %v455
    %v512 = vpack.c.b16 %v458, %v456
    %v513 = vpack.c.b16 %v461, %v459
    %v514 = vpack.c.b16 %v462, %v460
    %v515 = vpack.c.b16 %v465, %v463
    %v516 = vpack.c.b16 %v466, %v464
    %v517 = vpack.c.b16 %v469, %v467
    %v518 = vpack.c.b16 %v470, %v468
    %v519 = vpack.c.b16 %v473, %v471
    %v520 = vpack.c.b16 %v474, %v472
    %v521 = vpack.c.b16 %v477, %v475
    %v522 = vpack.c.b16 %v478, %v476
    %v523 = vpack.c.b16 %v481, %v479
    %v524 = vpack.c.b16 %v482, %v480
    %v525 = vpack.c.b16 %v485, %v483
    %v526 = vpack.c.b16 %v486, %v484
    %v527 = vpack.c.b16 %v489, %v487
    %v528 = vpack.c.b16 %v490, %v488
    %v529 = vpack.c.b16 %v493, %v491
    %v530 = vpack.c.b16 %v494, %v492
    %v531 = vpack.c.b16 %v497, %v495
    %v532 = vpack.c.b16 %v498, %v496
    %v533 = vpack.c.b16 %v501, %v499
    %v534 = vpack.c.b16 %v502, %v500
    %567 = vmatprep.subr.bf16.mxu0 %v518
    %568 = vmatpush1.bf16.msra.mxu0 %v517
    %569 = vmatprep.subr.bf16.mxu0 %v516
    %570 = vmatpush1.bf16.msra.mxu0 %v515
    %571 = vmatprep.subr.bf16.mxu0 %v514
    %572 = vmatpush1.bf16.msra.mxu0 %v513
    %573 = vmatprep.subr.bf16.mxu0 %v512
    %574 = vmatpush1.bf16.msra.mxu0 %v511
    %575 = vmatprep.subr.bf16.mxu0 %v510
    %576 = vmatpush1.bf16.msra.mxu0 %v509
    %577 = vmatprep.subr.bf16.mxu0 %v508
    %578 = vmatpush1.bf16.msra.mxu0 %v507
    %579 = vmatprep.subr.bf16.mxu0 %v506
    %580 = vmatpush1.bf16.msra.mxu0 %v505
    %581 = vmatprep.subr.bf16.mxu0 %v504
    %582 = vmatpush1.bf16.msra.mxu0 %v503
    %583 = vmatprep.subr.bf16.mxu0 %v534
    %584 = vmatpush2.bf16.msra.mxu0 %v533
    %585 = vmatprep.subr.bf16.mxu0 %v532
    %586 = vmatpush2.bf16.msra.mxu0 %v531
    %587 = vmatprep.subr.bf16.mxu0 %v530
    %588 = vmatpush2.bf16.msra.mxu0 %v529
    %589 = vmatprep.subr.bf16.mxu0 %v528
    %590 = vmatpush2.bf16.msra.mxu0 %v527
    %591 = vmatprep.subr.bf16.mxu0 %v526
    %592 = vmatpush2.bf16.msra.mxu0 %v525
    %593 = vmatprep.subr.bf16.mxu0 %v524
    %594 = vmatpush2.bf16.msra.mxu0 %v523
    %595 = vmatprep.subr.bf16.mxu0 %v522
    %596 = vmatpush2.bf16.msra.mxu0 %v521
    %597 = vmatprep.subr.bf16.mxu0 %v520
    %598 = vmatpush2.bf16.msra.mxu0 %v519
    %599 = vmatprep.mubr.bf16.mxu0 %v129
    %600 = vmatmul.mubr.bf16.gmra.mxu0 %v128
    %v601 = vpop.f32.mrf.mxu0
    %v602 = vadd.f32 %v401, %v601
    %v603 = vpop.f32.mrf.mxu0
    %v604 = vadd.f32 %v403, %v603
    %v605 = vpop.f32.mrf.mxu0
    %v606 = vpop.f32.mrf.mxu0
    %607 = vdwg.mxu0
    %608 = vset.pattern.permute.xlu0 2
    %609 = vperm.xlu0 %608, %v115
    %v610 = vpop.permute.xlu0 %609
    %vm611 = vcmp.eq.s32.totalorder %v610, %v117
    %vm612 = vcmp.eq.s32.totalorder %v610, %v118
    %v613 = vsel %vm611, 1, 0
    %v614 = vsel %vm612, 1, 0
    %v615 = vcvt.s32.f32 %v613
    %v616 = vcvt.s32.f32 %v614
    %v617 = vpack.c.bf16 %v615, %v615
    %v618 = vpack.c.bf16 %v616, %v616
    %s619 = scalar_lea.vmem [#allocation5], 512
    %v620 = vld [vmem:[%s619] sm:$0xff]
    %v621 = vld [vmem:[%s619 + $0x8] sm:$0xff]
    %v622 = vld [vmem:[%s619 + $0x10] sm:$0xff]
    %v623 = vld [vmem:[%s619 + $0x18] sm:$0xff]
    %v624 = vld [vmem:[%s619 + $0x20] sm:$0xff]
    %v625 = vld [vmem:[%s619 + $0x28] sm:$0xff]
    %v626 = vld [vmem:[%s619 + $0x30] sm:$0xff]
    %v627 = vld [vmem:[%s619 + $0x38] sm:$0xff]
    %v628 = vld [vmem:[%s619 + $0x40] sm:$0xff]
    %v629 = vld [vmem:[%s619 + $0x48] sm:$0xff]
    %v630 = vld [vmem:[%s619 + $0x50] sm:$0xff]
    %v631 = vld [vmem:[%s619 + $0x58] sm:$0xff]
    %v632 = vld [vmem:[%s619 + $0x60] sm:$0xff]
    %v633 = vld [vmem:[%s619 + $0x68] sm:$0xff]
    %v634 = vld [vmem:[%s619 + $0x70] sm:$0xff]
    %v635 = vld [vmem:[%s619 + $0x78] sm:$0xff]
    %v636 = vld [vmem:[%s619 + $0x80] sm:$0xff]
    %v637 = vld [vmem:[%s619 + $0x88] sm:$0xff]
    %v638 = vld [vmem:[%s619 + $0x90] sm:$0xff]
    %v639 = vld [vmem:[%s619 + $0x98] sm:$0xff]
    %v640 = vld [vmem:[%s619 + $0xa0] sm:$0xff]
    %v641 = vld [vmem:[%s619 + $0xa8] sm:$0xff]
    %v642 = vld [vmem:[%s619 + $0xb0] sm:$0xff]
    %v643 = vld [vmem:[%s619 + $0xb8] sm:$0xff]
    %v644 = vld [vmem:[%s619 + $0xc0] sm:$0xff]
    %v645 = vld [vmem:[%s619 + $0xc8] sm:$0xff]
    %v646 = vld [vmem:[%s619 + $0xd0] sm:$0xff]
    %v647 = vld [vmem:[%s619 + $0xd8] sm:$0xff]
    %v648 = vld [vmem:[%s619 + $0xe0] sm:$0xff]
    %v649 = vld [vmem:[%s619 + $0xe8] sm:$0xff]
    %v650 = vld [vmem:[%s619 + $0xf0] sm:$0xff]
    %v651 = vld [vmem:[%s619 + $0xf8] sm:$0xff]
    %v684 = vunpack.c.l.b16 %v620
    %v685 = vunpack.c.h.b16 %v620
    %v686 = vunpack.c.l.b16 %v621
    %v687 = vunpack.c.h.b16 %v621
    %v688 = vunpack.c.l.b16 %v622
    %v689 = vunpack.c.h.b16 %v622
    %v690 = vunpack.c.l.b16 %v623
    %v691 = vunpack.c.h.b16 %v623
    %v692 = vunpack.c.l.b16 %v624
    %v693 = vunpack.c.h.b16 %v624
    %v694 = vunpack.c.l.b16 %v625
    %v695 = vunpack.c.h.b16 %v625
    %v696 = vunpack.c.l.b16 %v626
    %v697 = vunpack.c.h.b16 %v626
    %v698 = vunpack.c.l.b16 %v627
    %v699 = vunpack.c.h.b16 %v627
    %v700 = vunpack.c.l.b16 %v628
    %v701 = vunpack.c.h.b16 %v628
    %v702 = vunpack.c.l.b16 %v629
    %v703 = vunpack.c.h.b16 %v629
    %v704 = vunpack.c.l.b16 %v630
    %v705 = vunpack.c.h.b16 %v630
    %v706 = vunpack.c.l.b16 %v631
    %v707 = vunpack.c.h.b16 %v631
    %v708 = vunpack.c.l.b16 %v632
    %v709 = vunpack.c.h.b16 %v632
    %v710 = vunpack.c.l.b16 %v633
    %v711 = vunpack.c.h.b16 %v633
    %v712 = vunpack.c.l.b16 %v634
    %v713 = vunpack.c.h.b16 %v634
    %v714 = vunpack.c.l.b16 %v635
    %v715 = vunpack.c.h.b16 %v635
    %v716 = vunpack.c.l.b16 %v636
    %v717 = vunpack.c.h.b16 %v636
    %v718 = vunpack.c.l.b16 %v637
    %v719 = vunpack.c.h.b16 %v637
    %v720 = vunpack.c.l.b16 %v638
    %v721 = vunpack.c.h.b16 %v638
    %v722 = vunpack.c.l.b16 %v639
    %v723 = vunpack.c.h.b16 %v639
    %v724 = vunpack.c.l.b16 %v640
    %v725 = vunpack.c.h.b16 %v640
    %v726 = vunpack.c.l.b16 %v641
    %v727 = vunpack.c.h.b16 %v641
    %v728 = vunpack.c.l.b16 %v642
    %v729 = vunpack.c.h.b16 %v642
    %v730 = vunpack.c.l.b16 %v643
    %v731 = vunpack.c.h.b16 %v643
    %v732 = vunpack.c.l.b16 %v644
    %v733 = vunpack.c.h.b16 %v644
    %v734 = vunpack.c.l.b16 %v645
    %v735 = vunpack.c.h.b16 %v645
    %v736 = vunpack.c.l.b16 %v646
    %v737 = vunpack.c.h.b16 %v646
    %v738 = vunpack.c.l.b16 %v647
    %v739 = vunpack.c.h.b16 %v647
    %v740 = vunpack.c.l.b16 %v648
    %v741 = vunpack.c.h.b16 %v648
    %v742 = vunpack.c.l.b16 %v649
    %v743 = vunpack.c.h.b16 %v649
    %v744 = vunpack.c.l.b16 %v650
    %v745 = vunpack.c.h.b16 %v650
    %v746 = vunpack.c.l.b16 %v651
    %v747 = vunpack.c.h.b16 %v651
    %v748 = vpack.c.b16 %v686, %v684
    %v749 = vpack.c.b16 %v687, %v685
    %v750 = vpack.c.b16 %v690, %v688
    %v751 = vpack.c.b16 %v691, %v689
    %v752 = vpack.c.b16 %v694, %v692
    %v753 = vpack.c.b16 %v695, %v693
    %v754 = vpack.c.b16 %v698, %v696
    %v755 = vpack.c.b16 %v699, %v697
    %v756 = vpack.c.b16 %v702, %v700
    %v757 = vpack.c.b16 %v703, %v701
    %v758 = vpack.c.b16 %v706, %v704
    %v759 = vpack.c.b16 %v707, %v705
    %v760 = vpack.c.b16 %v710, %v708
    %v761 = vpack.c.b16 %v711, %v709
    %v762 = vpack.c.b16 %v714, %v712
    %v763 = vpack.c.b16 %v715, %v713
    %v764 = vpack.c.b16 %v718, %v716
    %v765 = vpack.c.b16 %v719, %v717
    %v766 = vpack.c.b16 %v722, %v720
    %v767 = vpack.c.b16 %v723, %v721
    %v768 = vpack.c.b16 %v726, %v724
    %v769 = vpack.c.b16 %v727, %v725
    %v770 = vpack.c.b16 %v730, %v728
    %v771 = vpack.c.b16 %v731, %v729
    %v772 = vpack.c.b16 %v734, %v732
    %v773 = vpack.c.b16 %v735, %v733
    %v774 = vpack.c.b16 %v738, %v736
    %v775 = vpack.c.b16 %v739, %v737
    %v776 = vpack.c.b16 %v742, %v740
    %v777 = vpack.c.b16 %v743, %v741
    %v778 = vpack.c.b16 %v746, %v744
    %v779 = vpack.c.b16 %v747, %v745
    %812 = vmatprep.subr.bf16.mxu0 %v763
    %813 = vmatpush1.bf16.msra.mxu0 %v762
    %814 = vmatprep.subr.bf16.mxu0 %v761
    %815 = vmatpush1.bf16.msra.mxu0 %v760
    %816 = vmatprep.subr.bf16.mxu0 %v759
    %817 = vmatpush1.bf16.msra.mxu0 %v758
    %818 = vmatprep.subr.bf16.mxu0 %v757
    %819 = vmatpush1.bf16.msra.mxu0 %v756
    %820 = vmatprep.subr.bf16.mxu0 %v755
    %821 = vmatpush1.bf16.msra.mxu0 %v754
    %822 = vmatprep.subr.bf16.mxu0 %v753
    %823 = vmatpush1.bf16.msra.mxu0 %v752
    %824 = vmatprep.subr.bf16.mxu0 %v751
    %825 = vmatpush1.bf16.msra.mxu0 %v750
    %826 = vmatprep.subr.bf16.mxu0 %v749
    %827 = vmatpush1.bf16.msra.mxu0 %v748
    %828 = vmatprep.subr.bf16.mxu0 %v779
    %829 = vmatpush2.bf16.msra.mxu0 %v778
    %830 = vmatprep.subr.bf16.mxu0 %v777
    %831 = vmatpush2.bf16.msra.mxu0 %v776
    %832 = vmatprep.subr.bf16.mxu0 %v775
    %833 = vmatpush2.bf16.msra.mxu0 %v774
    %834 = vmatprep.subr.bf16.mxu0 %v773
    %835 = vmatpush2.bf16.msra.mxu0 %v772
    %836 = vmatprep.subr.bf16.mxu0 %v771
    %837 = vmatpush2.bf16.msra.mxu0 %v770
    %838 = vmatprep.subr.bf16.mxu0 %v769
    %839 = vmatpush2.bf16.msra.mxu0 %v768
    %840 = vmatprep.subr.bf16.mxu0 %v767
    %841 = vmatpush2.bf16.msra.mxu0 %v766
    %842 = vmatprep.subr.bf16.mxu0 %v765
    %843 = vmatpush2.bf16.msra.mxu0 %v764
    %844 = vmatprep.mubr.bf16.mxu0 %v618
    %845 = vmatmul.mubr.bf16.gmra.mxu0 %v617
    %v846 = vpop.f32.mrf.mxu0
    %v847 = vadd.f32 0.0, %v846
    %v848 = vpop.f32.mrf.mxu0
    %v849 = vadd.f32 0.0, %v848
    %v850 = vpop.f32.mrf.mxu0
    %v851 = vpop.f32.mrf.mxu0
    %852 = vdwg.mxu0
    %v853 = vadd.f32 %v602, %v847
    %v854 = vadd.f32 %v604, %v849
    %855 = vset.pattern.permute.xlu0 3
    %856 = vperm.xlu0 %855, %v115
    %v857 = vpop.permute.xlu0 %856
    %vm858 = vcmp.eq.s32.totalorder %v857, %v117
    %vm859 = vcmp.eq.s32.totalorder %v857, %v118
    %v860 = vsel %vm858, 1, 0
    %v861 = vsel %vm859, 1, 0
    %v862 = vcvt.s32.f32 %v860
    %v863 = vcvt.s32.f32 %v861
    %v864 = vpack.c.bf16 %v862, %v862
    %v865 = vpack.c.bf16 %v863, %v863
    %s866 = scalar_lea.vmem [#allocation5], 768
    %v867 = vld [vmem:[%s866] sm:$0xff]
    %v868 = vld [vmem:[%s866 + $0x8] sm:$0xff]
    %v869 = vld [vmem:[%s866 + $0x10] sm:$0xff]
    %v870 = vld [vmem:[%s866 + $0x18] sm:$0xff]
    %v871 = vld [vmem:[%s866 + $0x20] sm:$0xff]
    %v872 = vld [vmem:[%s866 + $0x28] sm:$0xff]
    %v873 = vld [vmem:[%s866 + $0x30] sm:$0xff]
    %v874 = vld [vmem:[%s866 + $0x38] sm:$0xff]
    %v875 = vld [vmem:[%s866 + $0x40] sm:$0xff]
    %v876 = vld [vmem:[%s866 + $0x48] sm:$0xff]
    %v877 = vld [vmem:[%s866 + $0x50] sm:$0xff]
    %v878 = vld [vmem:[%s866 + $0x58] sm:$0xff]
    %v879 = vld [vmem:[%s866 + $0x60] sm:$0xff]
    %v880 = vld [vmem:[%s866 + $0x68] sm:$0xff]
    %v881 = vld [vmem:[%s866 + $0x70] sm:$0xff]
    %v882 = vld [vmem:[%s866 + $0x78] sm:$0xff]
    %v883 = vld [vmem:[%s866 + $0x80] sm:$0xff]
    %v884 = vld [vmem:[%s866 + $0x88] sm:$0xff]
    %v885 = vld [vmem:[%s866 + $0x90] sm:$0xff]
    %v886 = vld [vmem:[%s866 + $0x98] sm:$0xff]
    %v887 = vld [vmem:[%s866 + $0xa0] sm:$0xff]
    %v888 = vld [vmem:[%s866 + $0xa8] sm:$0xff]
    %v889 = vld [vmem:[%s866 + $0xb0] sm:$0xff]
    %v890 = vld [vmem:[%s866 + $0xb8] sm:$0xff]
    %v891 = vld [vmem:[%s866 + $0xc0] sm:$0xff]
    %v892 = vld [vmem:[%s866 + $0xc8] sm:$0xff]
    %v893 = vld [vmem:[%s866 + $0xd0] sm:$0xff]
    %v894 = vld [vmem:[%s866 + $0xd8] sm:$0xff]
    %v895 = vld [vmem:[%s866 + $0xe0] sm:$0xff]
    %v896 = vld [vmem:[%s866 + $0xe8] sm:$0xff]
    %v897 = vld [vmem:[%s866 + $0xf0] sm:$0xff]
    %v898 = vld [vmem:[%s866 + $0xf8] sm:$0xff]
    %v931 = vunpack.c.l.b16 %v867
    %v932 = vunpack.c.h.b16 %v867
    %v933 = vunpack.c.l.b16 %v868
    %v934 = vunpack.c.h.b16 %v868
    %v935 = vunpack.c.l.b16 %v869
    %v936 = vunpack.c.h.b16 %v869
    %v937 = vunpack.c.l.b16 %v870
    %v938 = vunpack.c.h.b16 %v870
    %v939 = vunpack.c.l.b16 %v871
    %v940 = vunpack.c.h.b16 %v871
    %v941 = vunpack.c.l.b16 %v872
    %v942 = vunpack.c.h.b16 %v872
    %v943 = vunpack.c.l.b16 %v873
    %v944 = vunpack.c.h.b16 %v873
    %v945 = vunpack.c.l.b16 %v874
    %v946 = vunpack.c.h.b16 %v874
    %v947 = vunpack.c.l.b16 %v875
    %v948 = vunpack.c.h.b16 %v875
    %v949 = vunpack.c.l.b16 %v876
    %v950 = vunpack.c.h.b16 %v876
    %v951 = vunpack.c.l.b16 %v877
    %v952 = vunpack.c.h.b16 %v877
    %v953 = vunpack.c.l.b16 %v878
    %v954 = vunpack.c.h.b16 %v878
    %v955 = vunpack.c.l.b16 %v879
    %v956 = vunpack.c.h.b16 %v879
    %v957 = vunpack.c.l.b16 %v880
    %v958 = vunpack.c.h.b16 %v880
    %v959 = vunpack.c.l.b16 %v881
    %v960 = vunpack.c.h.b16 %v881
    %v961 = vunpack.c.l.b16 %v882
    %v962 = vunpack.c.h.b16 %v882
    %v963 = vunpack.c.l.b16 %v883
    %v964 = vunpack.c.h.b16 %v883
    %v965 = vunpack.c.l.b16 %v884
    %v966 = vunpack.c.h.b16 %v884
    %v967 = vunpack.c.l.b16 %v885
    %v968 = vunpack.c.h.b16 %v885
    %v969 = vunpack.c.l.b16 %v886
    %v970 = vunpack.c.h.b16 %v886
    %v971 = vunpack.c.l.b16 %v887
    %v972 = vunpack.c.h.b16 %v887
    %v973 = vunpack.c.l.b16 %v888
    %v974 = vunpack.c.h.b16 %v888
    %v975 = vunpack.c.l.b16 %v889
    %v976 = vunpack.c.h.b16 %v889
    %v977 = vunpack.c.l.b16 %v890
    %v978 = vunpack.c.h.b16 %v890
    %v979 = vunpack.c.l.b16 %v891
    %v980 = vunpack.c.h.b16 %v891
    %v981 = vunpack.c.l.b16 %v892
    %v982 = vunpack.c.h.b16 %v892
    %v983 = vunpack.c.l.b16 %v893
    %v984 = vunpack.c.h.b16 %v893
    %v985 = vunpack.c.l.b16 %v894
    %v986 = vunpack.c.h.b16 %v894
    %v987 = vunpack.c.l.b16 %v895
    %v988 = vunpack.c.h.b16 %v895
    %v989 = vunpack.c.l.b16 %v896
    %v990 = vunpack.c.h.b16 %v896
    %v991 = vunpack.c.l.b16 %v897
    %v992 = vunpack.c.h.b16 %v897
    %v993 = vunpack.c.l.b16 %v898
    %v994 = vunpack.c.h.b16 %v898
    %v995 = vpack.c.b16 %v933, %v931
    %v996 = vpack.c.b16 %v934, %v932
    %v997 = vpack.c.b16 %v937, %v935
    %v998 = vpack.c.b16 %v938, %v936
    %v999 = vpack.c.b16 %v941, %v939
    %v1000 = vpack.c.b16 %v942, %v940
    %v1001 = vpack.c.b16 %v945, %v943
    %v1002 = vpack.c.b16 %v946, %v944
    %v1003 = vpack.c.b16 %v949, %v947
    %v1004 = vpack.c.b16 %v950, %v948
    %v1005 = vpack.c.b16 %v953, %v951
    %v1006 = vpack.c.b16 %v954, %v952
    %v1007 = vpack.c.b16 %v957, %v955
    %v1008 = vpack.c.b16 %v958, %v956
    %v1009 = vpack.c.b16 %v961, %v959
    %v1010 = vpack.c.b16 %v962, %v960
    %v1011 = vpack.c.b16 %v965, %v963
    %v1012 = vpack.c.b16 %v966, %v964
    %v1013 = vpack.c.b16 %v969, %v967
    %v1014 = vpack.c.b16 %v970, %v968
    %v1015 = vpack.c.b16 %v973, %v971
    %v1016 = vpack.c.b16 %v974, %v972
    %v1017 = vpack.c.b16 %v977, %v975
    %v1018 = vpack.c.b16 %v978, %v976
    %v1019 = vpack.c.b16 %v981, %v979
    %v1020 = vpack.c.b16 %v982, %v980
    %v1021 = vpack.c.b16 %v985, %v983
    %v1022 = vpack.c.b16 %v986, %v984
    %v1023 = vpack.c.b16 %v989, %v987
    %v1024 = vpack.c.b16 %v990, %v988
    %v1025 = vpack.c.b16 %v993, %v991
    %v1026 = vpack.c.b16 %v994, %v992
    %1059 = vmatprep.subr.bf16.mxu0 %v1010
    %1060 = vmatpush1.bf16.msra.mxu0 %v1009
    %1061 = vmatprep.subr.bf16.mxu0 %v1008
    %1062 = vmatpush1.bf16.msra.mxu0 %v1007
    %1063 = vmatprep.subr.bf16.mxu0 %v1006
    %1064 = vmatpush1.bf16.msra.mxu0 %v1005
    %1065 = vmatprep.subr.bf16.mxu0 %v1004
    %1066 = vmatpush1.bf16.msra.mxu0 %v1003
    %1067 = vmatprep.subr.bf16.mxu0 %v1002
    %1068 = vmatpush1.bf16.msra.mxu0 %v1001
    %1069 = vmatprep.subr.bf16.mxu0 %v1000
    %1070 = vmatpush1.bf16.msra.mxu0 %v999
    %1071 = vmatprep.subr.bf16.mxu0 %v998
    %1072 = vmatpush1.bf16.msra.mxu0 %v997
    %1073 = vmatprep.subr.bf16.mxu0 %v996
    %1074 = vmatpush1.bf16.msra.mxu0 %v995
    %1075 = vmatprep.subr.bf16.mxu0 %v1026
    %1076 = vmatpush2.bf16.msra.mxu0 %v1025
    %1077 = vmatprep.subr.bf16.mxu0 %v1024
    %1078 = vmatpush2.bf16.msra.mxu0 %v1023
    %1079 = vmatprep.subr.bf16.mxu0 %v1022
    %1080 = vmatpush2.bf16.msra.mxu0 %v1021
    %1081 = vmatprep.subr.bf16.mxu0 %v1020
    %1082 = vmatpush2.bf16.msra.mxu0 %v1019
    %1083 = vmatprep.subr.bf16.mxu0 %v1018
    %1084 = vmatpush2.bf16.msra.mxu0 %v1017
    %1085 = vmatprep.subr.bf16.mxu0 %v1016
    %1086 = vmatpush2.bf16.msra.mxu0 %v1015
    %1087 = vmatprep.subr.bf16.mxu0 %v1014
    %1088 = vmatpush2.bf16.msra.mxu0 %v1013
    %1089 = vmatprep.subr.bf16.mxu0 %v1012
    %1090 = vmatpush2.bf16.msra.mxu0 %v1011
    %1091 = vmatprep.mubr.bf16.mxu0 %v865
    %1092 = vmatmul.mubr.bf16.gmra.mxu0 %v864
    %v1093 = vpop.f32.mrf.mxu0
    %v1094 = vadd.f32 0.0, %v1093
    %v1095 = vpop.f32.mrf.mxu0
    %v1096 = vadd.f32 0.0, %v1095
    %v1097 = vpop.f32.mrf.mxu0
    %v1098 = vpop.f32.mrf.mxu0
    %1099 = vdwg.mxu0
    %v1100 = vadd.f32 %v853, %v1094
    %v1101 = vadd.f32 %v854, %v1096
    %1102 = vset.pattern.permute.xlu0 4
    %1103 = vperm.xlu0 %1102, %v115
    %v1104 = vpop.permute.xlu0 %1103
    %vm1105 = vcmp.eq.s32.totalorder %v1104, %v117
    %vm1106 = vcmp.eq.s32.totalorder %v1104, %v118
    %v1107 = vsel %vm1105, 1, 0
    %v1108 = vsel %vm1106, 1, 0
    %v1109 = vcvt.s32.f32 %v1107
    %v1110 = vcvt.s32.f32 %v1108
    %v1111 = vpack.c.bf16 %v1109, %v1109
    %v1112 = vpack.c.bf16 %v1110, %v1110
    %s1113 = scalar_lea.vmem [#allocation5], 1024
    %v1114 = vld [vmem:[%s1113] sm:$0xff]
    %v1115 = vld [vmem:[%s1113 + $0x8] sm:$0xff]
    %v1116 = vld [vmem:[%s1113 + $0x10] sm:$0xff]
    %v1117 = vld [vmem:[%s1113 + $0x18] sm:$0xff]
    %v1118 = vld [vmem:[%s1113 + $0x20] sm:$0xff]
    %v1119 = vld [vmem:[%s1113 + $0x28] sm:$0xff]
    %v1120 = vld [vmem:[%s1113 + $0x30] sm:$0xff]
    %v1121 = vld [vmem:[%s1113 + $0x38] sm:$0xff]
    %v1122 = vld [vmem:[%s1113 + $0x40] sm:$0xff]
    %v1123 = vld [vmem:[%s1113 + $0x48] sm:$0xff]
    %v1124 = vld [vmem:[%s1113 + $0x50] sm:$0xff]
    %v1125 = vld [vmem:[%s1113 + $0x58] sm:$0xff]
    %v1126 = vld [vmem:[%s1113 + $0x60] sm:$0xff]
    %v1127 = vld [vmem:[%s1113 + $0x68] sm:$0xff]
    %v1128 = vld [vmem:[%s1113 + $0x70] sm:$0xff]
    %v1129 = vld [vmem:[%s1113 + $0x78] sm:$0xff]
    %v1130 = vld [vmem:[%s1113 + $0x80] sm:$0xff]
    %v1131 = vld [vmem:[%s1113 + $0x88] sm:$0xff]
    %v1132 = vld [vmem:[%s1113 + $0x90] sm:$0xff]
    %v1133 = vld [vmem:[%s1113 + $0x98] sm:$0xff]
    %v1134 = vld [vmem:[%s1113 + $0xa0] sm:$0xff]
    %v1135 = vld [vmem:[%s1113 + $0xa8] sm:$0xff]
    %v1136 = vld [vmem:[%s1113 + $0xb0] sm:$0xff]
    %v1137 = vld [vmem:[%s1113 + $0xb8] sm:$0xff]
    %v1138 = vld [vmem:[%s1113 + $0xc0] sm:$0xff]
    %v1139 = vld [vmem:[%s1113 + $0xc8] sm:$0xff]
    %v1140 = vld [vmem:[%s1113 + $0xd0] sm:$0xff]
    %v1141 = vld [vmem:[%s1113 + $0xd8] sm:$0xff]
    %v1142 = vld [vmem:[%s1113 + $0xe0] sm:$0xff]
    %v1143 = vld [vmem:[%s1113 + $0xe8] sm:$0xff]
    %v1144 = vld [vmem:[%s1113 + $0xf0] sm:$0xff]
    %v1145 = vld [vmem:[%s1113 + $0xf8] sm:$0xff]
    %v1178 = vunpack.c.l.b16 %v1114
    %v1179 = vunpack.c.h.b16 %v1114
    %v1180 = vunpack.c.l.b16 %v1115
    %v1181 = vunpack.c.h.b16 %v1115
    %v1182 = vunpack.c.l.b16 %v1116
    %v1183 = vunpack.c.h.b16 %v1116
    %v1184 = vunpack.c.l.b16 %v1117
    %v1185 = vunpack.c.h.b16 %v1117
    %v1186 = vunpack.c.l.b16 %v1118
    %v1187 = vunpack.c.h.b16 %v1118
    %v1188 = vunpack.c.l.b16 %v1119
    %v1189 = vunpack.c.h.b16 %v1119
    %v1190 = vunpack.c.l.b16 %v1120
    %v1191 = vunpack.c.h.b16 %v1120
    %v1192 = vunpack.c.l.b16 %v1121
    %v1193 = vunpack.c.h.b16 %v1121
    %v1194 = vunpack.c.l.b16 %v1122
    %v1195 = vunpack.c.h.b16 %v1122
    %v1196 = vunpack.c.l.b16 %v1123
    %v1197 = vunpack.c.h.b16 %v1123
    %v1198 = vunpack.c.l.b16 %v1124
    %v1199 = vunpack.c.h.b16 %v1124
    %v1200 = vunpack.c.l.b16 %v1125
    %v1201 = vunpack.c.h.b16 %v1125
    %v1202 = vunpack.c.l.b16 %v1126
    %v1203 = vunpack.c.h.b16 %v1126
    %v1204 = vunpack.c.l.b16 %v1127
    %v1205 = vunpack.c.h.b16 %v1127
    %v1206 = vunpack.c.l.b16 %v1128
    %v1207 = vunpack.c.h.b16 %v1128
    %v1208 = vunpack.c.l.b16 %v1129
    %v1209 = vunpack.c.h.b16 %v1129
    %v1210 = vunpack.c.l.b16 %v1130
    %v1211 = vunpack.c.h.b16 %v1130
    %v1212 = vunpack.c.l.b16 %v1131
    %v1213 = vunpack.c.h.b16 %v1131
    %v1214 = vunpack.c.l.b16 %v1132
    %v1215 = vunpack.c.h.b16 %v1132
    %v1216 = vunpack.c.l.b16 %v1133
    %v1217 = vunpack.c.h.b16 %v1133
    %v1218 = vunpack.c.l.b16 %v1134
    %v1219 = vunpack.c.h.b16 %v1134
    %v1220 = vunpack.c.l.b16 %v1135
    %v1221 = vunpack.c.h.b16 %v1135
    %v1222 = vunpack.c.l.b16 %v1136
    %v1223 = vunpack.c.h.b16 %v1136
    %v1224 = vunpack.c.l.b16 %v1137
    %v1225 = vunpack.c.h.b16 %v1137
    %v1226 = vunpack.c.l.b16 %v1138
    %v1227 = vunpack.c.h.b16 %v1138
    %v1228 = vunpack.c.l.b16 %v1139
    %v1229 = vunpack.c.h.b16 %v1139
    %v1230 = vunpack.c.l.b16 %v1140
    %v1231 = vunpack.c.h.b16 %v1140
    %v1232 = vunpack.c.l.b16 %v1141
    %v1233 = vunpack.c.h.b16 %v1141
    %v1234 = vunpack.c.l.b16 %v1142
    %v1235 = vunpack.c.h.b16 %v1142
    %v1236 = vunpack.c.l.b16 %v1143
    %v1237 = vunpack.c.h.b16 %v1143
    %v1238 = vunpack.c.l.b16 %v1144
    %v1239 = vunpack.c.h.b16 %v1144
    %v1240 = vunpack.c.l.b16 %v1145
    %v1241 = vunpack.c.h.b16 %v1145
    %v1242 = vpack.c.b16 %v1180, %v1178
    %v1243 = vpack.c.b16 %v1181, %v1179
    %v1244 = vpack.c.b16 %v1184, %v1182
    %v1245 = vpack.c.b16 %v1185, %v1183
    %v1246 = vpack.c.b16 %v1188, %v1186
    %v1247 = vpack.c.b16 %v1189, %v1187
    %v1248 = vpack.c.b16 %v1192, %v1190
    %v1249 = vpack.c.b16 %v1193, %v1191
    %v1250 = vpack.c.b16 %v1196, %v1194
    %v1251 = vpack.c.b16 %v1197, %v1195
    %v1252 = vpack.c.b16 %v1200, %v1198
    %v1253 = vpack.c.b16 %v1201, %v1199
    %v1254 = vpack.c.b16 %v1204, %v1202
    %v1255 = vpack.c.b16 %v1205, %v1203
    %v1256 = vpack.c.b16 %v1208, %v1206
    %v1257 = vpack.c.b16 %v1209, %v1207
    %v1258 = vpack.c.b16 %v1212, %v1210
    %v1259 = vpack.c.b16 %v1213, %v1211
    %v1260 = vpack.c.b16 %v1216, %v1214
    %v1261 = vpack.c.b16 %v1217, %v1215
    %v1262 = vpack.c.b16 %v1220, %v1218
    %v1263 = vpack.c.b16 %v1221, %v1219
    %v1264 = vpack.c.b16 %v1224, %v1222
    %v1265 = vpack.c.b16 %v1225, %v1223
    %v1266 = vpack.c.b16 %v1228, %v1226
    %v1267 = vpack.c.b16 %v1229, %v1227
    %v1268 = vpack.c.b16 %v1232, %v1230
    %v1269 = vpack.c.b16 %v1233, %v1231
    %v1270 = vpack.c.b16 %v1236, %v1234
    %v1271 = vpack.c.b16 %v1237, %v1235
    %v1272 = vpack.c.b16 %v1240, %v1238
    %v1273 = vpack.c.b16 %v1241, %v1239
    %1306 = vmatprep.subr.bf16.mxu0 %v1257
    %1307 = vmatpush1.bf16.msra.mxu0 %v1256
    %1308 = vmatprep.subr.bf16.mxu0 %v1255
    %1309 = vmatpush1.bf16.msra.mxu0 %v1254
    %1310 = vmatprep.subr.bf16.mxu0 %v1253
    %1311 = vmatpush1.bf16.msra.mxu0 %v1252
    %1312 = vmatprep.subr.bf16.mxu0 %v1251
    %1313 = vmatpush1.bf16.msra.mxu0 %v1250
    %1314 = vmatprep.subr.bf16.mxu0 %v1249
    %1315 = vmatpush1.bf16.msra.mxu0 %v1248
    %1316 = vmatprep.subr.bf16.mxu0 %v1247
    %1317 = vmatpush1.bf16.msra.mxu0 %v1246
    %1318 = vmatprep.subr.bf16.mxu0 %v1245
    %1319 = vmatpush1.bf16.msra.mxu0 %v1244
    %1320 = vmatprep.subr.bf16.mxu0 %v1243
    %1321 = vmatpush1.bf16.msra.mxu0 %v1242
    %1322 = vmatprep.subr.bf16.mxu0 %v1273
    %1323 = vmatpush2.bf16.msra.mxu0 %v1272
    %1324 = vmatprep.subr.bf16.mxu0 %v1271
    %1325 = vmatpush2.bf16.msra.mxu0 %v1270
    %1326 = vmatprep.subr.bf16.mxu0 %v1269
    %1327 = vmatpush2.bf16.msra.mxu0 %v1268
    %1328 = vmatprep.subr.bf16.mxu0 %v1267
    %1329 = vmatpush2.bf16.msra.mxu0 %v1266
    %1330 = vmatprep.subr.bf16.mxu0 %v1265
    %1331 = vmatpush2.bf16.msra.mxu0 %v1264
    %1332 = vmatprep.subr.bf16.mxu0 %v1263
    %1333 = vmatpush2.bf16.msra.mxu0 %v1262
    %1334 = vmatprep.subr.bf16.mxu0 %v1261
    %1335 = vmatpush2.bf16.msra.mxu0 %v1260
    %1336 = vmatprep.subr.bf16.mxu0 %v1259
    %1337 = vmatpush2.bf16.msra.mxu0 %v1258
    %1338 = vmatprep.mubr.bf16.mxu0 %v1112
    %1339 = vmatmul.mubr.bf16.gmra.mxu0 %v1111
    %v1340 = vpop.f32.mrf.mxu0
    %v1341 = vadd.f32 0.0, %v1340
    %v1342 = vpop.f32.mrf.mxu0
    %v1343 = vadd.f32 0.0, %v1342
    %v1344 = vpop.f32.mrf.mxu0
    %v1345 = vpop.f32.mrf.mxu0
    %1346 = vdwg.mxu0
    %v1347 = vadd.f32 %v1100, %v1341
    %v1348 = vadd.f32 %v1101, %v1343
    %1349 = vset.pattern.permute.xlu0 5
    %1350 = vperm.xlu0 %1349, %v115
    %v1351 = vpop.permute.xlu0 %1350
    %vm1352 = vcmp.eq.s32.totalorder %v1351, %v117
    %vm1353 = vcmp.eq.s32.totalorder %v1351, %v118
    %v1354 = vsel %vm1352, 1, 0
    %v1355 = vsel %vm1353, 1, 0
    %v1356 = vcvt.s32.f32 %v1354
    %v1357 = vcvt.s32.f32 %v1355
    %v1358 = vpack.c.bf16 %v1356, %v1356
    %v1359 = vpack.c.bf16 %v1357, %v1357
    %s1360 = scalar_lea.vmem [#allocation5], 1280
    %v1361 = vld [vmem:[%s1360] sm:$0xff]
    %v1362 = vld [vmem:[%s1360 + $0x8] sm:$0xff]
    %v1363 = vld [vmem:[%s1360 + $0x10] sm:$0xff]
    %v1364 = vld [vmem:[%s1360 + $0x18] sm:$0xff]
    %v1365 = vld [vmem:[%s1360 + $0x20] sm:$0xff]
    %v1366 = vld [vmem:[%s1360 + $0x28] sm:$0xff]
    %v1367 = vld [vmem:[%s1360 + $0x30] sm:$0xff]
    %v1368 = vld [vmem:[%s1360 + $0x38] sm:$0xff]
    %v1369 = vld [vmem:[%s1360 + $0x40] sm:$0xff]
    %v1370 = vld [vmem:[%s1360 + $0x48] sm:$0xff]
    %v1371 = vld [vmem:[%s1360 + $0x50] sm:$0xff]
    %v1372 = vld [vmem:[%s1360 + $0x58] sm:$0xff]
    %v1373 = vld [vmem:[%s1360 + $0x60] sm:$0xff]
    %v1374 = vld [vmem:[%s1360 + $0x68] sm:$0xff]
    %v1375 = vld [vmem:[%s1360 + $0x70] sm:$0xff]
    %v1376 = vld [vmem:[%s1360 + $0x78] sm:$0xff]
    %v1377 = vld [vmem:[%s1360 + $0x80] sm:$0xff]
    %v1378 = vld [vmem:[%s1360 + $0x88] sm:$0xff]
    %v1379 = vld [vmem:[%s1360 + $0x90] sm:$0xff]
    %v1380 = vld [vmem:[%s1360 + $0x98] sm:$0xff]
    %v1381 = vld [vmem:[%s1360 + $0xa0] sm:$0xff]
    %v1382 = vld [vmem:[%s1360 + $0xa8] sm:$0xff]
    %v1383 = vld [vmem:[%s1360 + $0xb0] sm:$0xff]
    %v1384 = vld [vmem:[%s1360 + $0xb8] sm:$0xff]
    %v1385 = vld [vmem:[%s1360 + $0xc0] sm:$0xff]
    %v1386 = vld [vmem:[%s1360 + $0xc8] sm:$0xff]
    %v1387 = vld [vmem:[%s1360 + $0xd0] sm:$0xff]
    %v1388 = vld [vmem:[%s1360 + $0xd8] sm:$0xff]
    %v1389 = vld [vmem:[%s1360 + $0xe0] sm:$0xff]
    %v1390 = vld [vmem:[%s1360 + $0xe8] sm:$0xff]
    %v1391 = vld [vmem:[%s1360 + $0xf0] sm:$0xff]
    %v1392 = vld [vmem:[%s1360 + $0xf8] sm:$0xff]
    %v1425 = vunpack.c.l.b16 %v1361
    %v1426 = vunpack.c.h.b16 %v1361
    %v1427 = vunpack.c.l.b16 %v1362
    %v1428 = vunpack.c.h.b16 %v1362
    %v1429 = vunpack.c.l.b16 %v1363
    %v1430 = vunpack.c.h.b16 %v1363
    %v1431 = vunpack.c.l.b16 %v1364
    %v1432 = vunpack.c.h.b16 %v1364
    %v1433 = vunpack.c.l.b16 %v1365
    %v1434 = vunpack.c.h.b16 %v1365
    %v1435 = vunpack.c.l.b16 %v1366
    %v1436 = vunpack.c.h.b16 %v1366
    %v1437 = vunpack.c.l.b16 %v1367
    %v1438 = vunpack.c.h.b16 %v1367
    %v1439 = vunpack.c.l.b16 %v1368
    %v1440 = vunpack.c.h.b16 %v1368
    %v1441 = vunpack.c.l.b16 %v1369
    %v1442 = vunpack.c.h.b16 %v1369
    %v1443 = vunpack.c.l.b16 %v1370
    %v1444 = vunpack.c.h.b16 %v1370
    %v1445 = vunpack.c.l.b16 %v1371
    %v1446 = vunpack.c.h.b16 %v1371
    %v1447 = vunpack.c.l.b16 %v1372
    %v1448 = vunpack.c.h.b16 %v1372
    %v1449 = vunpack.c.l.b16 %v1373
    %v1450 = vunpack.c.h.b16 %v1373
    %v1451 = vunpack.c.l.b16 %v1374
    %v1452 = vunpack.c.h.b16 %v1374
    %v1453 = vunpack.c.l.b16 %v1375
    %v1454 = vunpack.c.h.b16 %v1375
    %v1455 = vunpack.c.l.b16 %v1376
    %v1456 = vunpack.c.h.b16 %v1376
    %v1457 = vunpack.c.l.b16 %v1377
    %v1458 = vunpack.c.h.b16 %v1377
    %v1459 = vunpack.c.l.b16 %v1378
    %v1460 = vunpack.c.h.b16 %v1378
    %v1461 = vunpack.c.l.b16 %v1379
    %v1462 = vunpack.c.h.b16 %v1379
    %v1463 = vunpack.c.l.b16 %v1380
    %v1464 = vunpack.c.h.b16 %v1380
    %v1465 = vunpack.c.l.b16 %v1381
    %v1466 = vunpack.c.h.b16 %v1381
    %v1467 = vunpack.c.l.b16 %v1382
    %v1468 = vunpack.c.h.b16 %v1382
    %v1469 = vunpack.c.l.b16 %v1383
    %v1470 = vunpack.c.h.b16 %v1383
    %v1471 = vunpack.c.l.b16 %v1384
    %v1472 = vunpack.c.h.b16 %v1384
    %v1473 = vunpack.c.l.b16 %v1385
    %v1474 = vunpack.c.h.b16 %v1385
    %v1475 = vunpack.c.l.b16 %v1386
    %v1476 = vunpack.c.h.b16 %v1386
    %v1477 = vunpack.c.l.b16 %v1387
    %v1478 = vunpack.c.h.b16 %v1387
    %v1479 = vunpack.c.l.b16 %v1388
    %v1480 = vunpack.c.h.b16 %v1388
    %v1481 = vunpack.c.l.b16 %v1389
    %v1482 = vunpack.c.h.b16 %v1389
    %v1483 = vunpack.c.l.b16 %v1390
    %v1484 = vunpack.c.h.b16 %v1390
    %v1485 = vunpack.c.l.b16 %v1391
    %v1486 = vunpack.c.h.b16 %v1391
    %v1487 = vunpack.c.l.b16 %v1392
    %v1488 = vunpack.c.h.b16 %v1392
    %v1489 = vpack.c.b16 %v1427, %v1425
    %v1490 = vpack.c.b16 %v1428, %v1426
    %v1491 = vpack.c.b16 %v1431, %v1429
    %v1492 = vpack.c.b16 %v1432, %v1430
    %v1493 = vpack.c.b16 %v1435, %v1433
    %v1494 = vpack.c.b16 %v1436, %v1434
    %v1495 = vpack.c.b16 %v1439, %v1437
    %v1496 = vpack.c.b16 %v1440, %v1438
    %v1497 = vpack.c.b16 %v1443, %v1441
    %v1498 = vpack.c.b16 %v1444, %v1442
    %v1499 = vpack.c.b16 %v1447, %v1445
    %v1500 = vpack.c.b16 %v1448, %v1446
    %v1501 = vpack.c.b16 %v1451, %v1449
    %v1502 = vpack.c.b16 %v1452, %v1450
    %v1503 = vpack.c.b16 %v1455, %v1453
    %v1504 = vpack.c.b16 %v1456, %v1454
    %v1505 = vpack.c.b16 %v1459, %v1457
    %v1506 = vpack.c.b16 %v1460, %v1458
    %v1507 = vpack.c.b16 %v1463, %v1461
    %v1508 = vpack.c.b16 %v1464, %v1462
    %v1509 = vpack.c.b16 %v1467, %v1465
    %v1510 = vpack.c.b16 %v1468, %v1466
    %v1511 = vpack.c.b16 %v1471, %v1469
    %v1512 = vpack.c.b16 %v1472, %v1470
    %v1513 = vpack.c.b16 %v1475, %v1473
    %v1514 = vpack.c.b16 %v1476, %v1474
    %v1515 = vpack.c.b16 %v1479, %v1477
    %v1516 = vpack.c.b16 %v1480, %v1478
    %v1517 = vpack.c.b16 %v1483, %v1481
    %v1518 = vpack.c.b16 %v1484, %v1482
    %v1519 = vpack.c.b16 %v1487, %v1485
    %v1520 = vpack.c.b16 %v1488, %v1486
    %1553 = vmatprep.subr.bf16.mxu0 %v1504
    %1554 = vmatpush1.bf16.msra.mxu0 %v1503
    %1555 = vmatprep.subr.bf16.mxu0 %v1502
    %1556 = vmatpush1.bf16.msra.mxu0 %v1501
    %1557 = vmatprep.subr.bf16.mxu0 %v1500
    %1558 = vmatpush1.bf16.msra.mxu0 %v1499
    %1559 = vmatprep.subr.bf16.mxu0 %v1498
    %1560 = vmatpush1.bf16.msra.mxu0 %v1497
    %1561 = vmatprep.subr.bf16.mxu0 %v1496
    %1562 = vmatpush1.bf16.msra.mxu0 %v1495
    %1563 = vmatprep.subr.bf16.mxu0 %v1494
    %1564 = vmatpush1.bf16.msra.mxu0 %v1493
    %1565 = vmatprep.subr.bf16.mxu0 %v1492
    %1566 = vmatpush1.bf16.msra.mxu0 %v1491
    %1567 = vmatprep.subr.bf16.mxu0 %v1490
    %1568 = vmatpush1.bf16.msra.mxu0 %v1489
    %1569 = vmatprep.subr.bf16.mxu0 %v1520
    %1570 = vmatpush2.bf16.msra.mxu0 %v1519
    %1571 = vmatprep.subr.bf16.mxu0 %v1518
    %1572 = vmatpush2.bf16.msra.mxu0 %v1517
    %1573 = vmatprep.subr.bf16.mxu0 %v1516
    %1574 = vmatpush2.bf16.msra.mxu0 %v1515
    %1575 = vmatprep.subr.bf16.mxu0 %v1514
    %1576 = vmatpush2.bf16.msra.mxu0 %v1513
    %1577 = vmatprep.subr.bf16.mxu0 %v1512
    %1578 = vmatpush2.bf16.msra.mxu0 %v1511
    %1579 = vmatprep.subr.bf16.mxu0 %v1510
    %1580 = vmatpush2.bf16.msra.mxu0 %v1509
    %1581 = vmatprep.subr.bf16.mxu0 %v1508
    %1582 = vmatpush2.bf16.msra.mxu0 %v1507
    %1583 = vmatprep.subr.bf16.mxu0 %v1506
    %1584 = vmatpush2.bf16.msra.mxu0 %v1505
    %1585 = vmatprep.mubr.bf16.mxu0 %v1359
    %1586 = vmatmul.mubr.bf16.gmra.mxu0 %v1358
    %v1587 = vpop.f32.mrf.mxu0
    %v1588 = vadd.f32 0.0, %v1587
    %v1589 = vpop.f32.mrf.mxu0
    %v1590 = vadd.f32 0.0, %v1589
    %v1591 = vpop.f32.mrf.mxu0
    %v1592 = vpop.f32.mrf.mxu0
    %1593 = vdwg.mxu0
    %v1594 = vadd.f32 %v1347, %v1588
    %v1595 = vadd.f32 %v1348, %v1590
    %1596 = vset.pattern.permute.xlu0 6
    %1597 = vperm.xlu0 %1596, %v115
    %v1598 = vpop.permute.xlu0 %1597
    %vm1599 = vcmp.eq.s32.totalorder %v1598, %v117
    %vm1600 = vcmp.eq.s32.totalorder %v1598, %v118
    %v1601 = vsel %vm1599, 1, 0
    %v1602 = vsel %vm1600, 1, 0
    %v1603 = vcvt.s32.f32 %v1601
    %v1604 = vcvt.s32.f32 %v1602
    %v1605 = vpack.c.bf16 %v1603, %v1603
    %v1606 = vpack.c.bf16 %v1604, %v1604
    %s1607 = scalar_lea.vmem [#allocation5], 1536
    %v1608 = vld [vmem:[%s1607] sm:$0xff]
    %v1609 = vld [vmem:[%s1607 + $0x8] sm:$0xff]
    %v1610 = vld [vmem:[%s1607 + $0x10] sm:$0xff]
    %v1611 = vld [vmem:[%s1607 + $0x18] sm:$0xff]
    %v1612 = vld [vmem:[%s1607 + $0x20] sm:$0xff]
    %v1613 = vld [vmem:[%s1607 + $0x28] sm:$0xff]
    %v1614 = vld [vmem:[%s1607 + $0x30] sm:$0xff]
    %v1615 = vld [vmem:[%s1607 + $0x38] sm:$0xff]
    %v1616 = vld [vmem:[%s1607 + $0x40] sm:$0xff]
    %v1617 = vld [vmem:[%s1607 + $0x48] sm:$0xff]
    %v1618 = vld [vmem:[%s1607 + $0x50] sm:$0xff]
    %v1619 = vld [vmem:[%s1607 + $0x58] sm:$0xff]
    %v1620 = vld [vmem:[%s1607 + $0x60] sm:$0xff]
    %v1621 = vld [vmem:[%s1607 + $0x68] sm:$0xff]
    %v1622 = vld [vmem:[%s1607 + $0x70] sm:$0xff]
    %v1623 = vld [vmem:[%s1607 + $0x78] sm:$0xff]
    %v1624 = vld [vmem:[%s1607 + $0x80] sm:$0xff]
    %v1625 = vld [vmem:[%s1607 + $0x88] sm:$0xff]
    %v1626 = vld [vmem:[%s1607 + $0x90] sm:$0xff]
    %v1627 = vld [vmem:[%s1607 + $0x98] sm:$0xff]
    %v1628 = vld [vmem:[%s1607 + $0xa0] sm:$0xff]
    %v1629 = vld [vmem:[%s1607 + $0xa8] sm:$0xff]
    %v1630 = vld [vmem:[%s1607 + $0xb0] sm:$0xff]
    %v1631 = vld [vmem:[%s1607 + $0xb8] sm:$0xff]
    %v1632 = vld [vmem:[%s1607 + $0xc0] sm:$0xff]
    %v1633 = vld [vmem:[%s1607 + $0xc8] sm:$0xff]
    %v1634 = vld [vmem:[%s1607 + $0xd0] sm:$0xff]
    %v1635 = vld [vmem:[%s1607 + $0xd8] sm:$0xff]
    %v1636 = vld [vmem:[%s1607 + $0xe0] sm:$0xff]
    %v1637 = vld [vmem:[%s1607 + $0xe8] sm:$0xff]
    %v1638 = vld [vmem:[%s1607 + $0xf0] sm:$0xff]
    %v1639 = vld [vmem:[%s1607 + $0xf8] sm:$0xff]
    %v1672 = vunpack.c.l.b16 %v1608
    %v1673 = vunpack.c.h.b16 %v1608
    %v1674 = vunpack.c.l.b16 %v1609
    %v1675 = vunpack.c.h.b16 %v1609
    %v1676 = vunpack.c.l.b16 %v1610
    %v1677 = vunpack.c.h.b16 %v1610
    %v1678 = vunpack.c.l.b16 %v1611
    %v1679 = vunpack.c.h.b16 %v1611
    %v1680 = vunpack.c.l.b16 %v1612
    %v1681 = vunpack.c.h.b16 %v1612
    %v1682 = vunpack.c.l.b16 %v1613
    %v1683 = vunpack.c.h.b16 %v1613
    %v1684 = vunpack.c.l.b16 %v1614
    %v1685 = vunpack.c.h.b16 %v1614
    %v1686 = vunpack.c.l.b16 %v1615
    %v1687 = vunpack.c.h.b16 %v1615
    %v1688 = vunpack.c.l.b16 %v1616
    %v1689 = vunpack.c.h.b16 %v1616
    %v1690 = vunpack.c.l.b16 %v1617
    %v1691 = vunpack.c.h.b16 %v1617
    %v1692 = vunpack.c.l.b16 %v1618
    %v1693 = vunpack.c.h.b16 %v1618
    %v1694 = vunpack.c.l.b16 %v1619
    %v1695 = vunpack.c.h.b16 %v1619
    %v1696 = vunpack.c.l.b16 %v1620
    %v1697 = vunpack.c.h.b16 %v1620
    %v1698 = vunpack.c.l.b16 %v1621
    %v1699 = vunpack.c.h.b16 %v1621
    %v1700 = vunpack.c.l.b16 %v1622
    %v1701 = vunpack.c.h.b16 %v1622
    %v1702 = vunpack.c.l.b16 %v1623
    %v1703 = vunpack.c.h.b16 %v1623
    %v1704 = vunpack.c.l.b16 %v1624
    %v1705 = vunpack.c.h.b16 %v1624
    %v1706 = vunpack.c.l.b16 %v1625
    %v1707 = vunpack.c.h.b16 %v1625
    %v1708 = vunpack.c.l.b16 %v1626
    %v1709 = vunpack.c.h.b16 %v1626
    %v1710 = vunpack.c.l.b16 %v1627
    %v1711 = vunpack.c.h.b16 %v1627
    %v1712 = vunpack.c.l.b16 %v1628
    %v1713 = vunpack.c.h.b16 %v1628
    %v1714 = vunpack.c.l.b16 %v1629
    %v1715 = vunpack.c.h.b16 %v1629
    %v1716 = vunpack.c.l.b16 %v1630
    %v1717 = vunpack.c.h.b16 %v1630
    %v1718 = vunpack.c.l.b16 %v1631
    %v1719 = vunpack.c.h.b16 %v1631
    %v1720 = vunpack.c.l.b16 %v1632
    %v1721 = vunpack.c.h.b16 %v1632
    %v1722 = vunpack.c.l.b16 %v1633
    %v1723 = vunpack.c.h.b16 %v1633
    %v1724 = vunpack.c.l.b16 %v1634
    %v1725 = vunpack.c.h.b16 %v1634
    %v1726 = vunpack.c.l.b16 %v1635
    %v1727 = vunpack.c.h.b16 %v1635
    %v1728 = vunpack.c.l.b16 %v1636
    %v1729 = vunpack.c.h.b16 %v1636
    %v1730 = vunpack.c.l.b16 %v1637
    %v1731 = vunpack.c.h.b16 %v1637
    %v1732 = vunpack.c.l.b16 %v1638
    %v1733 = vunpack.c.h.b16 %v1638
    %v1734 = vunpack.c.l.b16 %v1639
    %v1735 = vunpack.c.h.b16 %v1639
    %v1736 = vpack.c.b16 %v1674, %v1672
    %v1737 = vpack.c.b16 %v1675, %v1673
    %v1738 = vpack.c.b16 %v1678, %v1676
    %v1739 = vpack.c.b16 %v1679, %v1677
    %v1740 = vpack.c.b16 %v1682, %v1680
    %v1741 = vpack.c.b16 %v1683, %v1681
    %v1742 = vpack.c.b16 %v1686, %v1684
    %v1743 = vpack.c.b16 %v1687, %v1685
    %v1744 = vpack.c.b16 %v1690, %v1688
    %v1745 = vpack.c.b16 %v1691, %v1689
    %v1746 = vpack.c.b16 %v1694, %v1692
    %v1747 = vpack.c.b16 %v1695, %v1693
    %v1748 = vpack.c.b16 %v1698, %v1696
    %v1749 = vpack.c.b16 %v1699, %v1697
    %v1750 = vpack.c.b16 %v1702, %v1700
    %v1751 = vpack.c.b16 %v1703, %v1701
    %v1752 = vpack.c.b16 %v1706, %v1704
    %v1753 = vpack.c.b16 %v1707, %v1705
    %v1754 = vpack.c.b16 %v1710, %v1708
    %v1755 = vpack.c.b16 %v1711, %v1709
    %v1756 = vpack.c.b16 %v1714, %v1712
    %v1757 = vpack.c.b16 %v1715, %v1713
    %v1758 = vpack.c.b16 %v1718, %v1716
    %v1759 = vpack.c.b16 %v1719, %v1717
    %v1760 = vpack.c.b16 %v1722, %v1720
    %v1761 = vpack.c.b16 %v1723, %v1721
    %v1762 = vpack.c.b16 %v1726, %v1724
    %v1763 = vpack.c.b16 %v1727, %v1725
    %v1764 = vpack.c.b16 %v1730, %v1728
    %v1765 = vpack.c.b16 %v1731, %v1729
    %v1766 = vpack.c.b16 %v1734, %v1732
    %v1767 = vpack.c.b16 %v1735, %v1733
    %1800 = vmatprep.subr.bf16.mxu0 %v1751
    %1801 = vmatpush1.bf16.msra.mxu0 %v1750
    %1802 = vmatprep.subr.bf16.mxu0 %v1749
    %1803 = vmatpush1.bf16.msra.mxu0 %v1748
    %1804 = vmatprep.subr.bf16.mxu0 %v1747
    %1805 = vmatpush1.bf16.msra.mxu0 %v1746
    %1806 = vmatprep.subr.bf16.mxu0 %v1745
    %1807 = vmatpush1.bf16.msra.mxu0 %v1744
    %1808 = vmatprep.subr.bf16.mxu0 %v1743
    %1809 = vmatpush1.bf16.msra.mxu0 %v1742
    %1810 = vmatprep.subr.bf16.mxu0 %v1741
    %1811 = vmatpush1.bf16.msra.mxu0 %v1740
    %1812 = vmatprep.subr.bf16.mxu0 %v1739
    %1813 = vmatpush1.bf16.msra.mxu0 %v1738
    %1814 = vmatprep.subr.bf16.mxu0 %v1737
    %1815 = vmatpush1.bf16.msra.mxu0 %v1736
    %1816 = vmatprep.subr.bf16.mxu0 %v1767
    %1817 = vmatpush2.bf16.msra.mxu0 %v1766
    %1818 = vmatprep.subr.bf16.mxu0 %v1765
    %1819 = vmatpush2.bf16.msra.mxu0 %v1764
    %1820 = vmatprep.subr.bf16.mxu0 %v1763
    %1821 = vmatpush2.bf16.msra.mxu0 %v1762
    %1822 = vmatprep.subr.bf16.mxu0 %v1761
    %1823 = vmatpush2.bf16.msra.mxu0 %v1760
    %1824 = vmatprep.subr.bf16.mxu0 %v1759
    %1825 = vmatpush2.bf16.msra.mxu0 %v1758
    %1826 = vmatprep.subr.bf16.mxu0 %v1757
    %1827 = vmatpush2.bf16.msra.mxu0 %v1756
    %1828 = vmatprep.subr.bf16.mxu0 %v1755
    %1829 = vmatpush2.bf16.msra.mxu0 %v1754
    %1830 = vmatprep.subr.bf16.mxu0 %v1753
    %1831 = vmatpush2.bf16.msra.mxu0 %v1752
    %1832 = vmatprep.mubr.bf16.mxu0 %v1606
    %1833 = vmatmul.mubr.bf16.gmra.mxu0 %v1605
    %v1834 = vpop.f32.mrf.mxu0
    %v1835 = vadd.f32 0.0, %v1834
    %v1836 = vpop.f32.mrf.mxu0
    %v1837 = vadd.f32 0.0, %v1836
    %v1838 = vpop.f32.mrf.mxu0
    %v1839 = vpop.f32.mrf.mxu0
    %1840 = vdwg.mxu0
    %v1841 = vadd.f32 %v1594, %v1835
    %v1842 = vadd.f32 %v1595, %v1837
    %1843 = vset.pattern.permute.xlu0 7
    %1844 = vperm.xlu0 %1843, %v115
    %v1845 = vpop.permute.xlu0 %1844
    %vm1846 = vcmp.eq.s32.totalorder %v1845, %v117
    %vm1847 = vcmp.eq.s32.totalorder %v1845, %v118
    %v1848 = vsel %vm1846, 1, 0
    %v1849 = vsel %vm1847, 1, 0
    %v1850 = vcvt.s32.f32 %v1848
    %v1851 = vcvt.s32.f32 %v1849
    %v1852 = vpack.c.bf16 %v1850, %v1850
    %v1853 = vpack.c.bf16 %v1851, %v1851
    %s1854 = scalar_lea.vmem [#allocation5], 1792
    %v1855 = vld [vmem:[%s1854] sm:$0xff]
    %v1856 = vld [vmem:[%s1854 + $0x8] sm:$0xff]
    %v1857 = vld [vmem:[%s1854 + $0x10] sm:$0xff]
    %v1858 = vld [vmem:[%s1854 + $0x18] sm:$0xff]
    %v1859 = vld [vmem:[%s1854 + $0x20] sm:$0xff]
    %v1860 = vld [vmem:[%s1854 + $0x28] sm:$0xff]
    %v1861 = vld [vmem:[%s1854 + $0x30] sm:$0xff]
    %v1862 = vld [vmem:[%s1854 + $0x38] sm:$0xff]
    %v1863 = vld [vmem:[%s1854 + $0x40] sm:$0xff]
    %v1864 = vld [vmem:[%s1854 + $0x48] sm:$0xff]
    %v1865 = vld [vmem:[%s1854 + $0x50] sm:$0xff]
    %v1866 = vld [vmem:[%s1854 + $0x58] sm:$0xff]
    %v1867 = vld [vmem:[%s1854 + $0x60] sm:$0xff]
    %v1868 = vld [vmem:[%s1854 + $0x68] sm:$0xff]
    %v1869 = vld [vmem:[%s1854 + $0x70] sm:$0xff]
    %v1870 = vld [vmem:[%s1854 + $0x78] sm:$0xff]
    %v1871 = vld [vmem:[%s1854 + $0x80] sm:$0xff]
    %v1872 = vld [vmem:[%s1854 + $0x88] sm:$0xff]
    %v1873 = vld [vmem:[%s1854 + $0x90] sm:$0xff]
    %v1874 = vld [vmem:[%s1854 + $0x98] sm:$0xff]
    %v1875 = vld [vmem:[%s1854 + $0xa0] sm:$0xff]
    %v1876 = vld [vmem:[%s1854 + $0xa8] sm:$0xff]
    %v1877 = vld [vmem:[%s1854 + $0xb0] sm:$0xff]
    %v1878 = vld [vmem:[%s1854 + $0xb8] sm:$0xff]
    %v1879 = vld [vmem:[%s1854 + $0xc0] sm:$0xff]
    %v1880 = vld [vmem:[%s1854 + $0xc8] sm:$0xff]
    %v1881 = vld [vmem:[%s1854 + $0xd0] sm:$0xff]
    %v1882 = vld [vmem:[%s1854 + $0xd8] sm:$0xff]
    %v1883 = vld [vmem:[%s1854 + $0xe0] sm:$0xff]
    %v1884 = vld [vmem:[%s1854 + $0xe8] sm:$0xff]
    %v1885 = vld [vmem:[%s1854 + $0xf0] sm:$0xff]
    %v1886 = vld [vmem:[%s1854 + $0xf8] sm:$0xff]
    %v1919 = vunpack.c.l.b16 %v1855
    %v1920 = vunpack.c.h.b16 %v1855
    %v1921 = vunpack.c.l.b16 %v1856
    %v1922 = vunpack.c.h.b16 %v1856
    %v1923 = vunpack.c.l.b16 %v1857
    %v1924 = vunpack.c.h.b16 %v1857
    %v1925 = vunpack.c.l.b16 %v1858
    %v1926 = vunpack.c.h.b16 %v1858
    %v1927 = vunpack.c.l.b16 %v1859
    %v1928 = vunpack.c.h.b16 %v1859
    %v1929 = vunpack.c.l.b16 %v1860
    %v1930 = vunpack.c.h.b16 %v1860
    %v1931 = vunpack.c.l.b16 %v1861
    %v1932 = vunpack.c.h.b16 %v1861
    %v1933 = vunpack.c.l.b16 %v1862
    %v1934 = vunpack.c.h.b16 %v1862
    %v1935 = vunpack.c.l.b16 %v1863
    %v1936 = vunpack.c.h.b16 %v1863
    %v1937 = vunpack.c.l.b16 %v1864
    %v1938 = vunpack.c.h.b16 %v1864
    %v1939 = vunpack.c.l.b16 %v1865
    %v1940 = vunpack.c.h.b16 %v1865
    %v1941 = vunpack.c.l.b16 %v1866
    %v1942 = vunpack.c.h.b16 %v1866
    %v1943 = vunpack.c.l.b16 %v1867
    %v1944 = vunpack.c.h.b16 %v1867
    %v1945 = vunpack.c.l.b16 %v1868
    %v1946 = vunpack.c.h.b16 %v1868
    %v1947 = vunpack.c.l.b16 %v1869
    %v1948 = vunpack.c.h.b16 %v1869
    %v1949 = vunpack.c.l.b16 %v1870
    %v1950 = vunpack.c.h.b16 %v1870
    %v1951 = vunpack.c.l.b16 %v1871
    %v1952 = vunpack.c.h.b16 %v1871
    %v1953 = vunpack.c.l.b16 %v1872
    %v1954 = vunpack.c.h.b16 %v1872
    %v1955 = vunpack.c.l.b16 %v1873
    %v1956 = vunpack.c.h.b16 %v1873
    %v1957 = vunpack.c.l.b16 %v1874
    %v1958 = vunpack.c.h.b16 %v1874
    %v1959 = vunpack.c.l.b16 %v1875
    %v1960 = vunpack.c.h.b16 %v1875
    %v1961 = vunpack.c.l.b16 %v1876
    %v1962 = vunpack.c.h.b16 %v1876
    %v1963 = vunpack.c.l.b16 %v1877
    %v1964 = vunpack.c.h.b16 %v1877
    %v1965 = vunpack.c.l.b16 %v1878
    %v1966 = vunpack.c.h.b16 %v1878
    %v1967 = vunpack.c.l.b16 %v1879
    %v1968 = vunpack.c.h.b16 %v1879
    %v1969 = vunpack.c.l.b16 %v1880
    %v1970 = vunpack.c.h.b16 %v1880
    %v1971 = vunpack.c.l.b16 %v1881
    %v1972 = vunpack.c.h.b16 %v1881
    %v1973 = vunpack.c.l.b16 %v1882
    %v1974 = vunpack.c.h.b16 %v1882
    %v1975 = vunpack.c.l.b16 %v1883
    %v1976 = vunpack.c.h.b16 %v1883
    %v1977 = vunpack.c.l.b16 %v1884
    %v1978 = vunpack.c.h.b16 %v1884
    %v1979 = vunpack.c.l.b16 %v1885
    %v1980 = vunpack.c.h.b16 %v1885
    %v1981 = vunpack.c.l.b16 %v1886
    %v1982 = vunpack.c.h.b16 %v1886
    %v1983 = vpack.c.b16 %v1921, %v1919
    %v1984 = vpack.c.b16 %v1922, %v1920
    %v1985 = vpack.c.b16 %v1925, %v1923
    %v1986 = vpack.c.b16 %v1926, %v1924
    %v1987 = vpack.c.b16 %v1929, %v1927
    %v1988 = vpack.c.b16 %v1930, %v1928
    %v1989 = vpack.c.b16 %v1933, %v1931
    %v1990 = vpack.c.b16 %v1934, %v1932
    %v1991 = vpack.c.b16 %v1937, %v1935
    %v1992 = vpack.c.b16 %v1938, %v1936
    %v1993 = vpack.c.b16 %v1941, %v1939
    %v1994 = vpack.c.b16 %v1942, %v1940
    %v1995 = vpack.c.b16 %v1945, %v1943
    %v1996 = vpack.c.b16 %v1946, %v1944
    %v1997 = vpack.c.b16 %v1949, %v1947
    %v1998 = vpack.c.b16 %v1950, %v1948
    %v1999 = vpack.c.b16 %v1953, %v1951
    %v2000 = vpack.c.b16 %v1954, %v1952
    %v2001 = vpack.c.b16 %v1957, %v1955
    %v2002 = vpack.c.b16 %v1958, %v1956
    %v2003 = vpack.c.b16 %v1961, %v1959
    %v2004 = vpack.c.b16 %v1962, %v1960
    %v2005 = vpack.c.b16 %v1965, %v1963
    %v2006 = vpack.c.b16 %v1966, %v1964
    %v2007 = vpack.c.b16 %v1969, %v1967
    %v2008 = vpack.c.b16 %v1970, %v1968
    %v2009 = vpack.c.b16 %v1973, %v1971
    %v2010 = vpack.c.b16 %v1974, %v1972
    %v2011 = vpack.c.b16 %v1977, %v1975
    %v2012 = vpack.c.b16 %v1978, %v1976
    %v2013 = vpack.c.b16 %v1981, %v1979
    %v2014 = vpack.c.b16 %v1982, %v1980
    %2047 = vmatprep.subr.bf16.mxu0 %v1998
    %2048 = vmatpush1.bf16.msra.mxu0 %v1997
    %2049 = vmatprep.subr.bf16.mxu0 %v1996
    %2050 = vmatpush1.bf16.msra.mxu0 %v1995
    %2051 = vmatprep.subr.bf16.mxu0 %v1994
    %2052 = vmatpush1.bf16.msra.mxu0 %v1993
    %2053 = vmatprep.subr.bf16.mxu0 %v1992
    %2054 = vmatpush1.bf16.msra.mxu0 %v1991
    %2055 = vmatprep.subr.bf16.mxu0 %v1990
    %2056 = vmatpush1.bf16.msra.mxu0 %v1989
    %2057 = vmatprep.subr.bf16.mxu0 %v1988
    %2058 = vmatpush1.bf16.msra.mxu0 %v1987
    %2059 = vmatprep.subr.bf16.mxu0 %v1986
    %2060 = vmatpush1.bf16.msra.mxu0 %v1985
    %2061 = vmatprep.subr.bf16.mxu0 %v1984
    %2062 = vmatpush1.bf16.msra.mxu0 %v1983
    %2063 = vmatprep.subr.bf16.mxu0 %v2014
    %2064 = vmatpush2.bf16.msra.mxu0 %v2013
    %2065 = vmatprep.subr.bf16.mxu0 %v2012
    %2066 = vmatpush2.bf16.msra.mxu0 %v2011
    %2067 = vmatprep.subr.bf16.mxu0 %v2010
    %2068 = vmatpush2.bf16.msra.mxu0 %v2009
    %2069 = vmatprep.subr.bf16.mxu0 %v2008
    %2070 = vmatpush2.bf16.msra.mxu0 %v2007
    %2071 = vmatprep.subr.bf16.mxu0 %v2006
    %2072 = vmatpush2.bf16.msra.mxu0 %v2005
    %2073 = vmatprep.subr.bf16.mxu0 %v2004
    %2074 = vmatpush2.bf16.msra.mxu0 %v2003
    %2075 = vmatprep.subr.bf16.mxu0 %v2002
    %2076 = vmatpush2.bf16.msra.mxu0 %v2001
    %2077 = vmatprep.subr.bf16.mxu0 %v2000
    %2078 = vmatpush2.bf16.msra.mxu0 %v1999
    %2079 = vmatprep.mubr.bf16.mxu0 %v1853
    %2080 = vmatmul.mubr.bf16.gmra.mxu0 %v1852
    %v2081 = vpop.f32.mrf.mxu0
    %v2082 = vadd.f32 0.0, %v2081
    %v2083 = vpop.f32.mrf.mxu0
    %v2084 = vadd.f32 0.0, %v2083
    %v2085 = vpop.f32.mrf.mxu0
    %v2086 = vpop.f32.mrf.mxu0
    %2087 = vdwg.mxu0
    %v2088 = vadd.f32 %v1841, %v2082
    %v2089 = vadd.f32 %v1842, %v2084
    %2090 = vset.pattern.permute.xlu0 8
    %2091 = vperm.xlu0 %2090, %v115
    %v2092 = vpop.permute.xlu0 %2091
    %vm2093 = vcmp.eq.s32.totalorder %v2092, %v117
    %vm2094 = vcmp.eq.s32.totalorder %v2092, %v118
    %v2095 = vsel %vm2093, 1, 0
    %v2096 = vsel %vm2094, 1, 0
    %v2097 = vcvt.s32.f32 %v2095
    %v2098 = vcvt.s32.f32 %v2096
    %v2099 = vpack.c.bf16 %v2097, %v2097
    %v2100 = vpack.c.bf16 %v2098, %v2098
    %s2101 = scalar_lea.vmem [#allocation5], 2048
    %v2102 = vld [vmem:[%s2101] sm:$0xff]
    %v2103 = vld [vmem:[%s2101 + $0x8] sm:$0xff]
    %v2104 = vld [vmem:[%s2101 + $0x10] sm:$0xff]
    %v2105 = vld [vmem:[%s2101 + $0x18] sm:$0xff]
    %v2106 = vld [vmem:[%s2101 + $0x20] sm:$0xff]
    %v2107 = vld [vmem:[%s2101 + $0x28] sm:$0xff]
    %v2108 = vld [vmem:[%s2101 + $0x30] sm:$0xff]
    %v2109 = vld [vmem:[%s2101 + $0x38] sm:$0xff]
    %v2110 = vld [vmem:[%s2101 + $0x40] sm:$0xff]
    %v2111 = vld [vmem:[%s2101 + $0x48] sm:$0xff]
    %v2112 = vld [vmem:[%s2101 + $0x50] sm:$0xff]
    %v2113 = vld [vmem:[%s2101 + $0x58] sm:$0xff]
    %v2114 = vld [vmem:[%s2101 + $0x60] sm:$0xff]
    %v2115 = vld [vmem:[%s2101 + $0x68] sm:$0xff]
    %v2116 = vld [vmem:[%s2101 + $0x70] sm:$0xff]
    %v2117 = vld [vmem:[%s2101 + $0x78] sm:$0xff]
    %v2118 = vld [vmem:[%s2101 + $0x80] sm:$0xff]
    %v2119 = vld [vmem:[%s2101 + $0x88] sm:$0xff]
    %v2120 = vld [vmem:[%s2101 + $0x90] sm:$0xff]
    %v2121 = vld [vmem:[%s2101 + $0x98] sm:$0xff]
    %v2122 = vld [vmem:[%s2101 + $0xa0] sm:$0xff]
    %v2123 = vld [vmem:[%s2101 + $0xa8] sm:$0xff]
    %v2124 = vld [vmem:[%s2101 + $0xb0] sm:$0xff]
    %v2125 = vld [vmem:[%s2101 + $0xb8] sm:$0xff]
    %v2126 = vld [vmem:[%s2101 + $0xc0] sm:$0xff]
    %v2127 = vld [vmem:[%s2101 + $0xc8] sm:$0xff]
    %v2128 = vld [vmem:[%s2101 + $0xd0] sm:$0xff]
    %v2129 = vld [vmem:[%s2101 + $0xd8] sm:$0xff]
    %v2130 = vld [vmem:[%s2101 + $0xe0] sm:$0xff]
    %v2131 = vld [vmem:[%s2101 + $0xe8] sm:$0xff]
    %v2132 = vld [vmem:[%s2101 + $0xf0] sm:$0xff]
    %v2133 = vld [vmem:[%s2101 + $0xf8] sm:$0xff]
    %v2166 = vunpack.c.l.b16 %v2102
    %v2167 = vunpack.c.h.b16 %v2102
    %v2168 = vunpack.c.l.b16 %v2103
    %v2169 = vunpack.c.h.b16 %v2103
    %v2170 = vunpack.c.l.b16 %v2104
    %v2171 = vunpack.c.h.b16 %v2104
    %v2172 = vunpack.c.l.b16 %v2105
    %v2173 = vunpack.c.h.b16 %v2105
    %v2174 = vunpack.c.l.b16 %v2106
    %v2175 = vunpack.c.h.b16 %v2106
    %v2176 = vunpack.c.l.b16 %v2107
    %v2177 = vunpack.c.h.b16 %v2107
    %v2178 = vunpack.c.l.b16 %v2108
    %v2179 = vunpack.c.h.b16 %v2108
    %v2180 = vunpack.c.l.b16 %v2109
    %v2181 = vunpack.c.h.b16 %v2109
    %v2182 = vunpack.c.l.b16 %v2110
    %v2183 = vunpack.c.h.b16 %v2110
    %v2184 = vunpack.c.l.b16 %v2111
    %v2185 = vunpack.c.h.b16 %v2111
    %v2186 = vunpack.c.l.b16 %v2112
    %v2187 = vunpack.c.h.b16 %v2112
    %v2188 = vunpack.c.l.b16 %v2113
    %v2189 = vunpack.c.h.b16 %v2113
    %v2190 = vunpack.c.l.b16 %v2114
    %v2191 = vunpack.c.h.b16 %v2114
    %v2192 = vunpack.c.l.b16 %v2115
    %v2193 = vunpack.c.h.b16 %v2115
    %v2194 = vunpack.c.l.b16 %v2116
    %v2195 = vunpack.c.h.b16 %v2116
    %v2196 = vunpack.c.l.b16 %v2117
    %v2197 = vunpack.c.h.b16 %v2117
    %v2198 = vunpack.c.l.b16 %v2118
    %v2199 = vunpack.c.h.b16 %v2118
    %v2200 = vunpack.c.l.b16 %v2119
    %v2201 = vunpack.c.h.b16 %v2119
    %v2202 = vunpack.c.l.b16 %v2120
    %v2203 = vunpack.c.h.b16 %v2120
    %v2204 = vunpack.c.l.b16 %v2121
    %v2205 = vunpack.c.h.b16 %v2121
    %v2206 = vunpack.c.l.b16 %v2122
    %v2207 = vunpack.c.h.b16 %v2122
    %v2208 = vunpack.c.l.b16 %v2123
    %v2209 = vunpack.c.h.b16 %v2123
    %v2210 = vunpack.c.l.b16 %v2124
    %v2211 = vunpack.c.h.b16 %v2124
    %v2212 = vunpack.c.l.b16 %v2125
    %v2213 = vunpack.c.h.b16 %v2125
    %v2214 = vunpack.c.l.b16 %v2126
    %v2215 = vunpack.c.h.b16 %v2126
    %v2216 = vunpack.c.l.b16 %v2127
    %v2217 = vunpack.c.h.b16 %v2127
    %v2218 = vunpack.c.l.b16 %v2128
    %v2219 = vunpack.c.h.b16 %v2128
    %v2220 = vunpack.c.l.b16 %v2129
    %v2221 = vunpack.c.h.b16 %v2129
    %v2222 = vunpack.c.l.b16 %v2130
    %v2223 = vunpack.c.h.b16 %v2130
    %v2224 = vunpack.c.l.b16 %v2131
    %v2225 = vunpack.c.h.b16 %v2131
    %v2226 = vunpack.c.l.b16 %v2132
    %v2227 = vunpack.c.h.b16 %v2132
    %v2228 = vunpack.c.l.b16 %v2133
    %v2229 = vunpack.c.h.b16 %v2133
    %v2230 = vpack.c.b16 %v2168, %v2166
    %v2231 = vpack.c.b16 %v2169, %v2167
    %v2232 = vpack.c.b16 %v2172, %v2170
    %v2233 = vpack.c.b16 %v2173, %v2171
    %v2234 = vpack.c.b16 %v2176, %v2174
    %v2235 = vpack.c.b16 %v2177, %v2175
    %v2236 = vpack.c.b16 %v2180, %v2178
    %v2237 = vpack.c.b16 %v2181, %v2179
    %v2238 = vpack.c.b16 %v2184, %v2182
    %v2239 = vpack.c.b16 %v2185, %v2183
    %v2240 = vpack.c.b16 %v2188, %v2186
    %v2241 = vpack.c.b16 %v2189, %v2187
    %v2242 = vpack.c.b16 %v2192, %v2190
    %v2243 = vpack.c.b16 %v2193, %v2191
    %v2244 = vpack.c.b16 %v2196, %v2194
    %v2245 = vpack.c.b16 %v2197, %v2195
    %v2246 = vpack.c.b16 %v2200, %v2198
    %v2247 = vpack.c.b16 %v2201, %v2199
    %v2248 = vpack.c.b16 %v2204, %v2202
    %v2249 = vpack.c.b16 %v2205, %v2203
    %v2250 = vpack.c.b16 %v2208, %v2206
    %v2251 = vpack.c.b16 %v2209, %v2207
    %v2252 = vpack.c.b16 %v2212, %v2210
    %v2253 = vpack.c.b16 %v2213, %v2211
    %v2254 = vpack.c.b16 %v2216, %v2214
    %v2255 = vpack.c.b16 %v2217, %v2215
    %v2256 = vpack.c.b16 %v2220, %v2218
    %v2257 = vpack.c.b16 %v2221, %v2219
    %v2258 = vpack.c.b16 %v2224, %v2222
    %v2259 = vpack.c.b16 %v2225, %v2223
    %v2260 = vpack.c.b16 %v2228, %v2226
    %v2261 = vpack.c.b16 %v2229, %v2227
    %2294 = vmatprep.subr.bf16.mxu0 %v2245
    %2295 = vmatpush1.bf16.msra.mxu0 %v2244
    %2296 = vmatprep.subr.bf16.mxu0 %v2243
    %2297 = vmatpush1.bf16.msra.mxu0 %v2242
    %2298 = vmatprep.subr.bf16.mxu0 %v2241
    %2299 = vmatpush1.bf16.msra.mxu0 %v2240
    %2300 = vmatprep.subr.bf16.mxu0 %v2239
    %2301 = vmatpush1.bf16.msra.mxu0 %v2238
    %2302 = vmatprep.subr.bf16.mxu0 %v2237
    %2303 = vmatpush1.bf16.msra.mxu0 %v2236
    %2304 = vmatprep.subr.bf16.mxu0 %v2235
    %2305 = vmatpush1.bf16.msra.mxu0 %v2234
    %2306 = vmatprep.subr.bf16.mxu0 %v2233
    %2307 = vmatpush1.bf16.msra.mxu0 %v2232
    %2308 = vmatprep.subr.bf16.mxu0 %v2231
    %2309 = vmatpush1.bf16.msra.mxu0 %v2230
    %2310 = vmatprep.subr.bf16.mxu0 %v2261
    %2311 = vmatpush2.bf16.msra.mxu0 %v2260
    %2312 = vmatprep.subr.bf16.mxu0 %v2259
    %2313 = vmatpush2.bf16.msra.mxu0 %v2258
    %2314 = vmatprep.subr.bf16.mxu0 %v2257
    %2315 = vmatpush2.bf16.msra.mxu0 %v2256
    %2316 = vmatprep.subr.bf16.mxu0 %v2255
    %2317 = vmatpush2.bf16.msra.mxu0 %v2254
    %2318 = vmatprep.subr.bf16.mxu0 %v2253
    %2319 = vmatpush2.bf16.msra.mxu0 %v2252
    %2320 = vmatprep.subr.bf16.mxu0 %v2251
    %2321 = vmatpush2.bf16.msra.mxu0 %v2250
    %2322 = vmatprep.subr.bf16.mxu0 %v2249
    %2323 = vmatpush2.bf16.msra.mxu0 %v2248
    %2324 = vmatprep.subr.bf16.mxu0 %v2247
    %2325 = vmatpush2.bf16.msra.mxu0 %v2246
    %2326 = vmatprep.mubr.bf16.mxu0 %v2100
    %2327 = vmatmul.mubr.bf16.gmra.mxu0 %v2099
    %v2328 = vpop.f32.mrf.mxu0
    %v2329 = vadd.f32 0.0, %v2328
    %v2330 = vpop.f32.mrf.mxu0
    %v2331 = vadd.f32 0.0, %v2330
    %v2332 = vpop.f32.mrf.mxu0
    %v2333 = vpop.f32.mrf.mxu0
    %2334 = vdwg.mxu0
    %v2335 = vadd.f32 %v2088, %v2329
    %v2336 = vadd.f32 %v2089, %v2331
    %2337 = vset.pattern.permute.xlu0 9
    %2338 = vperm.xlu0 %2337, %v115
    %v2339 = vpop.permute.xlu0 %2338
    %vm2340 = vcmp.eq.s32.totalorder %v2339, %v117
    %vm2341 = vcmp.eq.s32.totalorder %v2339, %v118
    %v2342 = vsel %vm2340, 1, 0
    %v2343 = vsel %vm2341, 1, 0
    %v2344 = vcvt.s32.f32 %v2342
    %v2345 = vcvt.s32.f32 %v2343
    %v2346 = vpack.c.bf16 %v2344, %v2344
    %v2347 = vpack.c.bf16 %v2345, %v2345
    %s2348 = scalar_lea.vmem [#allocation5], 2304
    %v2349 = vld [vmem:[%s2348] sm:$0xff]
    %v2350 = vld [vmem:[%s2348 + $0x8] sm:$0xff]
    %v2351 = vld [vmem:[%s2348 + $0x10] sm:$0xff]
    %v2352 = vld [vmem:[%s2348 + $0x18] sm:$0xff]
    %v2353 = vld [vmem:[%s2348 + $0x20] sm:$0xff]
    %v2354 = vld [vmem:[%s2348 + $0x28] sm:$0xff]
    %v2355 = vld [vmem:[%s2348 + $0x30] sm:$0xff]
    %v2356 = vld [vmem:[%s2348 + $0x38] sm:$0xff]
    %v2357 = vld [vmem:[%s2348 + $0x40] sm:$0xff]
    %v2358 = vld [vmem:[%s2348 + $0x48] sm:$0xff]
    %v2359 = vld [vmem:[%s2348 + $0x50] sm:$0xff]
    %v2360 = vld [vmem:[%s2348 + $0x58] sm:$0xff]
    %v2361 = vld [vmem:[%s2348 + $0x60] sm:$0xff]
    %v2362 = vld [vmem:[%s2348 + $0x68] sm:$0xff]
    %v2363 = vld [vmem:[%s2348 + $0x70] sm:$0xff]
    %v2364 = vld [vmem:[%s2348 + $0x78] sm:$0xff]
    %v2365 = vld [vmem:[%s2348 + $0x80] sm:$0xff]
    %v2366 = vld [vmem:[%s2348 + $0x88] sm:$0xff]
    %v2367 = vld [vmem:[%s2348 + $0x90] sm:$0xff]
    %v2368 = vld [vmem:[%s2348 + $0x98] sm:$0xff]
    %v2369 = vld [vmem:[%s2348 + $0xa0] sm:$0xff]
    %v2370 = vld [vmem:[%s2348 + $0xa8] sm:$0xff]
    %v2371 = vld [vmem:[%s2348 + $0xb0] sm:$0xff]
    %v2372 = vld [vmem:[%s2348 + $0xb8] sm:$0xff]
    %v2373 = vld [vmem:[%s2348 + $0xc0] sm:$0xff]
    %v2374 = vld [vmem:[%s2348 + $0xc8] sm:$0xff]
    %v2375 = vld [vmem:[%s2348 + $0xd0] sm:$0xff]
    %v2376 = vld [vmem:[%s2348 + $0xd8] sm:$0xff]
    %v2377 = vld [vmem:[%s2348 + $0xe0] sm:$0xff]
    %v2378 = vld [vmem:[%s2348 + $0xe8] sm:$0xff]
    %v2379 = vld [vmem:[%s2348 + $0xf0] sm:$0xff]
    %v2380 = vld [vmem:[%s2348 + $0xf8] sm:$0xff]
    %v2413 = vunpack.c.l.b16 %v2349
    %v2414 = vunpack.c.h.b16 %v2349
    %v2415 = vunpack.c.l.b16 %v2350
    %v2416 = vunpack.c.h.b16 %v2350
    %v2417 = vunpack.c.l.b16 %v2351
    %v2418 = vunpack.c.h.b16 %v2351
    %v2419 = vunpack.c.l.b16 %v2352
    %v2420 = vunpack.c.h.b16 %v2352
    %v2421 = vunpack.c.l.b16 %v2353
    %v2422 = vunpack.c.h.b16 %v2353
    %v2423 = vunpack.c.l.b16 %v2354
    %v2424 = vunpack.c.h.b16 %v2354
    %v2425 = vunpack.c.l.b16 %v2355
    %v2426 = vunpack.c.h.b16 %v2355
    %v2427 = vunpack.c.l.b16 %v2356
    %v2428 = vunpack.c.h.b16 %v2356
    %v2429 = vunpack.c.l.b16 %v2357
    %v2430 = vunpack.c.h.b16 %v2357
    %v2431 = vunpack.c.l.b16 %v2358
    %v2432 = vunpack.c.h.b16 %v2358
    %v2433 = vunpack.c.l.b16 %v2359
    %v2434 = vunpack.c.h.b16 %v2359
    %v2435 = vunpack.c.l.b16 %v2360
    %v2436 = vunpack.c.h.b16 %v2360
    %v2437 = vunpack.c.l.b16 %v2361
    %v2438 = vunpack.c.h.b16 %v2361
    %v2439 = vunpack.c.l.b16 %v2362
    %v2440 = vunpack.c.h.b16 %v2362
    %v2441 = vunpack.c.l.b16 %v2363
    %v2442 = vunpack.c.h.b16 %v2363
    %v2443 = vunpack.c.l.b16 %v2364
    %v2444 = vunpack.c.h.b16 %v2364
    %v2445 = vunpack.c.l.b16 %v2365
    %v2446 = vunpack.c.h.b16 %v2365
    %v2447 = vunpack.c.l.b16 %v2366
    %v2448 = vunpack.c.h.b16 %v2366
    %v2449 = vunpack.c.l.b16 %v2367
    %v2450 = vunpack.c.h.b16 %v2367
    %v2451 = vunpack.c.l.b16 %v2368
    %v2452 = vunpack.c.h.b16 %v2368
    %v2453 = vunpack.c.l.b16 %v2369
    %v2454 = vunpack.c.h.b16 %v2369
    %v2455 = vunpack.c.l.b16 %v2370
    %v2456 = vunpack.c.h.b16 %v2370
    %v2457 = vunpack.c.l.b16 %v2371
    %v2458 = vunpack.c.h.b16 %v2371
    %v2459 = vunpack.c.l.b16 %v2372
    %v2460 = vunpack.c.h.b16 %v2372
    %v2461 = vunpack.c.l.b16 %v2373
    %v2462 = vunpack.c.h.b16 %v2373
    %v2463 = vunpack.c.l.b16 %v2374
    %v2464 = vunpack.c.h.b16 %v2374
    %v2465 = vunpack.c.l.b16 %v2375
    %v2466 = vunpack.c.h.b16 %v2375
    %v2467 = vunpack.c.l.b16 %v2376
    %v2468 = vunpack.c.h.b16 %v2376
    %v2469 = vunpack.c.l.b16 %v2377
    %v2470 = vunpack.c.h.b16 %v2377
    %v2471 = vunpack.c.l.b16 %v2378
    %v2472 = vunpack.c.h.b16 %v2378
    %v2473 = vunpack.c.l.b16 %v2379
    %v2474 = vunpack.c.h.b16 %v2379
    %v2475 = vunpack.c.l.b16 %v2380
    %v2476 = vunpack.c.h.b16 %v2380
    %v2477 = vpack.c.b16 %v2415, %v2413
    %v2478 = vpack.c.b16 %v2416, %v2414
    %v2479 = vpack.c.b16 %v2419, %v2417
    %v2480 = vpack.c.b16 %v2420, %v2418
    %v2481 = vpack.c.b16 %v2423, %v2421
    %v2482 = vpack.c.b16 %v2424, %v2422
    %v2483 = vpack.c.b16 %v2427, %v2425
    %v2484 = vpack.c.b16 %v2428, %v2426
    %v2485 = vpack.c.b16 %v2431, %v2429
    %v2486 = vpack.c.b16 %v2432, %v2430
    %v2487 = vpack.c.b16 %v2435, %v2433
    %v2488 = vpack.c.b16 %v2436, %v2434
    %v2489 = vpack.c.b16 %v2439, %v2437
    %v2490 = vpack.c.b16 %v2440, %v2438
    %v2491 = vpack.c.b16 %v2443, %v2441
    %v2492 = vpack.c.b16 %v2444, %v2442
    %v2493 = vpack.c.b16 %v2447, %v2445
    %v2494 = vpack.c.b16 %v2448, %v2446
    %v2495 = vpack.c.b16 %v2451, %v2449
    %v2496 = vpack.c.b16 %v2452, %v2450
    %v2497 = vpack.c.b16 %v2455, %v2453
    %v2498 = vpack.c.b16 %v2456, %v2454
    %v2499 = vpack.c.b16 %v2459, %v2457
    %v2500 = vpack.c.b16 %v2460, %v2458
    %v2501 = vpack.c.b16 %v2463, %v2461
    %v2502 = vpack.c.b16 %v2464, %v2462
    %v2503 = vpack.c.b16 %v2467, %v2465
    %v2504 = vpack.c.b16 %v2468, %v2466
    %v2505 = vpack.c.b16 %v2471, %v2469
    %v2506 = vpack.c.b16 %v2472, %v2470
    %v2507 = vpack.c.b16 %v2475, %v2473
    %v2508 = vpack.c.b16 %v2476, %v2474
    %2541 = vmatprep.subr.bf16.mxu0 %v2492
    %2542 = vmatpush1.bf16.msra.mxu0 %v2491
    %2543 = vmatprep.subr.bf16.mxu0 %v2490
    %2544 = vmatpush1.bf16.msra.mxu0 %v2489
    %2545 = vmatprep.subr.bf16.mxu0 %v2488
    %2546 = vmatpush1.bf16.msra.mxu0 %v2487
    %2547 = vmatprep.subr.bf16.mxu0 %v2486
    %2548 = vmatpush1.bf16.msra.mxu0 %v2485
    %2549 = vmatprep.subr.bf16.mxu0 %v2484
    %2550 = vmatpush1.bf16.msra.mxu0 %v2483
    %2551 = vmatprep.subr.bf16.mxu0 %v2482
    %2552 = vmatpush1.bf16.msra.mxu0 %v2481
    %2553 = vmatprep.subr.bf16.mxu0 %v2480
    %2554 = vmatpush1.bf16.msra.mxu0 %v2479
    %2555 = vmatprep.subr.bf16.mxu0 %v2478
    %2556 = vmatpush1.bf16.msra.mxu0 %v2477
    %2557 = vmatprep.subr.bf16.mxu0 %v2508
    %2558 = vmatpush2.bf16.msra.mxu0 %v2507
    %2559 = vmatprep.subr.bf16.mxu0 %v2506
    %2560 = vmatpush2.bf16.msra.mxu0 %v2505
    %2561 = vmatprep.subr.bf16.mxu0 %v2504
    %2562 = vmatpush2.bf16.msra.mxu0 %v2503
    %2563 = vmatprep.subr.bf16.mxu0 %v2502
    %2564 = vmatpush2.bf16.msra.mxu0 %v2501
    %2565 = vmatprep.subr.bf16.mxu0 %v2500
    %2566 = vmatpush2.bf16.msra.mxu0 %v2499
    %2567 = vmatprep.subr.bf16.mxu0 %v2498
    %2568 = vmatpush2.bf16.msra.mxu0 %v2497
    %2569 = vmatprep.subr.bf16.mxu0 %v2496
    %2570 = vmatpush2.bf16.msra.mxu0 %v2495
    %2571 = vmatprep.subr.bf16.mxu0 %v2494
    %2572 = vmatpush2.bf16.msra.mxu0 %v2493
    %2573 = vmatprep.mubr.bf16.mxu0 %v2347
    %2574 = vmatmul.mubr.bf16.gmra.mxu0 %v2346
    %v2575 = vpop.f32.mrf.mxu0
    %v2576 = vadd.f32 0.0, %v2575
    %v2577 = vpop.f32.mrf.mxu0
    %v2578 = vadd.f32 0.0, %v2577
    %v2579 = vpop.f32.mrf.mxu0
    %v2580 = vpop.f32.mrf.mxu0
    %2581 = vdwg.mxu0
    %v2582 = vadd.f32 %v2335, %v2576
    %v2583 = vadd.f32 %v2336, %v2578
    %2584 = vset.pattern.permute.xlu0 10
    %2585 = vperm.xlu0 %2584, %v115
    %v2586 = vpop.permute.xlu0 %2585
    %vm2587 = vcmp.eq.s32.totalorder %v2586, %v117
    %vm2588 = vcmp.eq.s32.totalorder %v2586, %v118
    %v2589 = vsel %vm2587, 1, 0
    %v2590 = vsel %vm2588, 1, 0
    %v2591 = vcvt.s32.f32 %v2589
    %v2592 = vcvt.s32.f32 %v2590
    %v2593 = vpack.c.bf16 %v2591, %v2591
    %v2594 = vpack.c.bf16 %v2592, %v2592
    %s2595 = scalar_lea.vmem [#allocation5], 2560
    %v2596 = vld [vmem:[%s2595] sm:$0xff]
    %v2597 = vld [vmem:[%s2595 + $0x8] sm:$0xff]
    %v2598 = vld [vmem:[%s2595 + $0x10] sm:$0xff]
    %v2599 = vld [vmem:[%s2595 + $0x18] sm:$0xff]
    %v2600 = vld [vmem:[%s2595 + $0x20] sm:$0xff]
    %v2601 = vld [vmem:[%s2595 + $0x28] sm:$0xff]
    %v2602 = vld [vmem:[%s2595 + $0x30] sm:$0xff]
    %v2603 = vld [vmem:[%s2595 + $0x38] sm:$0xff]
    %v2604 = vld [vmem:[%s2595 + $0x40] sm:$0xff]
    %v2605 = vld [vmem:[%s2595 + $0x48] sm:$0xff]
    %v2606 = vld [vmem:[%s2595 + $0x50] sm:$0xff]
    %v2607 = vld [vmem:[%s2595 + $0x58] sm:$0xff]
    %v2608 = vld [vmem:[%s2595 + $0x60] sm:$0xff]
    %v2609 = vld [vmem:[%s2595 + $0x68] sm:$0xff]
    %v2610 = vld [vmem:[%s2595 + $0x70] sm:$0xff]
    %v2611 = vld [vmem:[%s2595 + $0x78] sm:$0xff]
    %v2612 = vld [vmem:[%s2595 + $0x80] sm:$0xff]
    %v2613 = vld [vmem:[%s2595 + $0x88] sm:$0xff]
    %v2614 = vld [vmem:[%s2595 + $0x90] sm:$0xff]
    %v2615 = vld [vmem:[%s2595 + $0x98] sm:$0xff]
    %v2616 = vld [vmem:[%s2595 + $0xa0] sm:$0xff]
    %v2617 = vld [vmem:[%s2595 + $0xa8] sm:$0xff]
    %v2618 = vld [vmem:[%s2595 + $0xb0] sm:$0xff]
    %v2619 = vld [vmem:[%s2595 + $0xb8] sm:$0xff]
    %v2620 = vld [vmem:[%s2595 + $0xc0] sm:$0xff]
    %v2621 = vld [vmem:[%s2595 + $0xc8] sm:$0xff]
    %v2622 = vld [vmem:[%s2595 + $0xd0] sm:$0xff]
    %v2623 = vld [vmem:[%s2595 + $0xd8] sm:$0xff]
    %v2624 = vld [vmem:[%s2595 + $0xe0] sm:$0xff]
    %v2625 = vld [vmem:[%s2595 + $0xe8] sm:$0xff]
    %v2626 = vld [vmem:[%s2595 + $0xf0] sm:$0xff]
    %v2627 = vld [vmem:[%s2595 + $0xf8] sm:$0xff]
    %v2660 = vunpack.c.l.b16 %v2596
    %v2661 = vunpack.c.h.b16 %v2596
    %v2662 = vunpack.c.l.b16 %v2597
    %v2663 = vunpack.c.h.b16 %v2597
    %v2664 = vunpack.c.l.b16 %v2598
    %v2665 = vunpack.c.h.b16 %v2598
    %v2666 = vunpack.c.l.b16 %v2599
    %v2667 = vunpack.c.h.b16 %v2599
    %v2668 = vunpack.c.l.b16 %v2600
    %v2669 = vunpack.c.h.b16 %v2600
    %v2670 = vunpack.c.l.b16 %v2601
    %v2671 = vunpack.c.h.b16 %v2601
    %v2672 = vunpack.c.l.b16 %v2602
    %v2673 = vunpack.c.h.b16 %v2602
    %v2674 = vunpack.c.l.b16 %v2603
    %v2675 = vunpack.c.h.b16 %v2603
    %v2676 = vunpack.c.l.b16 %v2604
    %v2677 = vunpack.c.h.b16 %v2604
    %v2678 = vunpack.c.l.b16 %v2605
    %v2679 = vunpack.c.h.b16 %v2605
    %v2680 = vunpack.c.l.b16 %v2606
    %v2681 = vunpack.c.h.b16 %v2606
    %v2682 = vunpack.c.l.b16 %v2607
    %v2683 = vunpack.c.h.b16 %v2607
    %v2684 = vunpack.c.l.b16 %v2608
    %v2685 = vunpack.c.h.b16 %v2608
    %v2686 = vunpack.c.l.b16 %v2609
    %v2687 = vunpack.c.h.b16 %v2609
    %v2688 = vunpack.c.l.b16 %v2610
    %v2689 = vunpack.c.h.b16 %v2610
    %v2690 = vunpack.c.l.b16 %v2611
    %v2691 = vunpack.c.h.b16 %v2611
    %v2692 = vunpack.c.l.b16 %v2612
    %v2693 = vunpack.c.h.b16 %v2612
    %v2694 = vunpack.c.l.b16 %v2613
    %v2695 = vunpack.c.h.b16 %v2613
    %v2696 = vunpack.c.l.b16 %v2614
    %v2697 = vunpack.c.h.b16 %v2614
    %v2698 = vunpack.c.l.b16 %v2615
    %v2699 = vunpack.c.h.b16 %v2615
    %v2700 = vunpack.c.l.b16 %v2616
    %v2701 = vunpack.c.h.b16 %v2616
    %v2702 = vunpack.c.l.b16 %v2617
    %v2703 = vunpack.c.h.b16 %v2617
    %v2704 = vunpack.c.l.b16 %v2618
    %v2705 = vunpack.c.h.b16 %v2618
    %v2706 = vunpack.c.l.b16 %v2619
    %v2707 = vunpack.c.h.b16 %v2619
    %v2708 = vunpack.c.l.b16 %v2620
    %v2709 = vunpack.c.h.b16 %v2620
    %v2710 = vunpack.c.l.b16 %v2621
    %v2711 = vunpack.c.h.b16 %v2621
    %v2712 = vunpack.c.l.b16 %v2622
    %v2713 = vunpack.c.h.b16 %v2622
    %v2714 = vunpack.c.l.b16 %v2623
    %v2715 = vunpack.c.h.b16 %v2623
    %v2716 = vunpack.c.l.b16 %v2624
    %v2717 = vunpack.c.h.b16 %v2624
    %v2718 = vunpack.c.l.b16 %v2625
    %v2719 = vunpack.c.h.b16 %v2625
    %v2720 = vunpack.c.l.b16 %v2626
    %v2721 = vunpack.c.h.b16 %v2626
    %v2722 = vunpack.c.l.b16 %v2627
    %v2723 = vunpack.c.h.b16 %v2627
    %v2724 = vpack.c.b16 %v2662, %v2660
    %v2725 = vpack.c.b16 %v2663, %v2661
    %v2726 = vpack.c.b16 %v2666, %v2664
    %v2727 = vpack.c.b16 %v2667, %v2665
    %v2728 = vpack.c.b16 %v2670, %v2668
    %v2729 = vpack.c.b16 %v2671, %v2669
    %v2730 = vpack.c.b16 %v2674, %v2672
    %v2731 = vpack.c.b16 %v2675, %v2673
    %v2732 = vpack.c.b16 %v2678, %v2676
    %v2733 = vpack.c.b16 %v2679, %v2677
    %v2734 = vpack.c.b16 %v2682, %v2680
    %v2735 = vpack.c.b16 %v2683, %v2681
    %v2736 = vpack.c.b16 %v2686, %v2684
    %v2737 = vpack.c.b16 %v2687, %v2685
    %v2738 = vpack.c.b16 %v2690, %v2688
    %v2739 = vpack.c.b16 %v2691, %v2689
    %v2740 = vpack.c.b16 %v2694, %v2692
    %v2741 = vpack.c.b16 %v2695, %v2693
    %v2742 = vpack.c.b16 %v2698, %v2696
    %v2743 = vpack.c.b16 %v2699, %v2697
    %v2744 = vpack.c.b16 %v2702, %v2700
    %v2745 = vpack.c.b16 %v2703, %v2701
    %v2746 = vpack.c.b16 %v2706, %v2704
    %v2747 = vpack.c.b16 %v2707, %v2705
    %v2748 = vpack.c.b16 %v2710, %v2708
    %v2749 = vpack.c.b16 %v2711, %v2709
    %v2750 = vpack.c.b16 %v2714, %v2712
    %v2751 = vpack.c.b16 %v2715, %v2713
    %v2752 = vpack.c.b16 %v2718, %v2716
    %v2753 = vpack.c.b16 %v2719, %v2717
    %v2754 = vpack.c.b16 %v2722, %v2720
    %v2755 = vpack.c.b16 %v2723, %v2721
    %2788 = vmatprep.subr.bf16.mxu0 %v2739
    %2789 = vmatpush1.bf16.msra.mxu0 %v2738
    %2790 = vmatprep.subr.bf16.mxu0 %v2737
    %2791 = vmatpush1.bf16.msra.mxu0 %v2736
    %2792 = vmatprep.subr.bf16.mxu0 %v2735
    %2793 = vmatpush1.bf16.msra.mxu0 %v2734
    %2794 = vmatprep.subr.bf16.mxu0 %v2733
    %2795 = vmatpush1.bf16.msra.mxu0 %v2732
    %2796 = vmatprep.subr.bf16.mxu0 %v2731
    %2797 = vmatpush1.bf16.msra.mxu0 %v2730
    %2798 = vmatprep.subr.bf16.mxu0 %v2729
    %2799 = vmatpush1.bf16.msra.mxu0 %v2728
    %2800 = vmatprep.subr.bf16.mxu0 %v2727
    %2801 = vmatpush1.bf16.msra.mxu0 %v2726
    %2802 = vmatprep.subr.bf16.mxu0 %v2725
    %2803 = vmatpush1.bf16.msra.mxu0 %v2724
    %2804 = vmatprep.subr.bf16.mxu0 %v2755
    %2805 = vmatpush2.bf16.msra.mxu0 %v2754
    %2806 = vmatprep.subr.bf16.mxu0 %v2753
    %2807 = vmatpush2.bf16.msra.mxu0 %v2752
    %2808 = vmatprep.subr.bf16.mxu0 %v2751
    %2809 = vmatpush2.bf16.msra.mxu0 %v2750
    %2810 = vmatprep.subr.bf16.mxu0 %v2749
    %2811 = vmatpush2.bf16.msra.mxu0 %v2748
    %2812 = vmatprep.subr.bf16.mxu0 %v2747
    %2813 = vmatpush2.bf16.msra.mxu0 %v2746
    %2814 = vmatprep.subr.bf16.mxu0 %v2745
    %2815 = vmatpush2.bf16.msra.mxu0 %v2744
    %2816 = vmatprep.subr.bf16.mxu0 %v2743
    %2817 = vmatpush2.bf16.msra.mxu0 %v2742
    %2818 = vmatprep.subr.bf16.mxu0 %v2741
    %2819 = vmatpush2.bf16.msra.mxu0 %v2740
    %2820 = vmatprep.mubr.bf16.mxu0 %v2594
    %2821 = vmatmul.mubr.bf16.gmra.mxu0 %v2593
    %v2822 = vpop.f32.mrf.mxu0
    %v2823 = vadd.f32 0.0, %v2822
    %v2824 = vpop.f32.mrf.mxu0
    %v2825 = vadd.f32 0.0, %v2824
    %v2826 = vpop.f32.mrf.mxu0
    %v2827 = vpop.f32.mrf.mxu0
    %2828 = vdwg.mxu0
    %v2829 = vadd.f32 %v2582, %v2823
    %v2830 = vadd.f32 %v2583, %v2825
    %2831 = vset.pattern.permute.xlu0 11
    %2832 = vperm.xlu0 %2831, %v115
    %v2833 = vpop.permute.xlu0 %2832
    %vm2834 = vcmp.eq.s32.totalorder %v2833, %v117
    %vm2835 = vcmp.eq.s32.totalorder %v2833, %v118
    %v2836 = vsel %vm2834, 1, 0
    %v2837 = vsel %vm2835, 1, 0
    %v2838 = vcvt.s32.f32 %v2836
    %v2839 = vcvt.s32.f32 %v2837
    %v2840 = vpack.c.bf16 %v2838, %v2838
    %v2841 = vpack.c.bf16 %v2839, %v2839
    %s2842 = scalar_lea.vmem [#allocation5], 2816
    %v2843 = vld [vmem:[%s2842] sm:$0xff]
    %v2844 = vld [vmem:[%s2842 + $0x8] sm:$0xff]
    %v2845 = vld [vmem:[%s2842 + $0x10] sm:$0xff]
    %v2846 = vld [vmem:[%s2842 + $0x18] sm:$0xff]
    %v2847 = vld [vmem:[%s2842 + $0x20] sm:$0xff]
    %v2848 = vld [vmem:[%s2842 + $0x28] sm:$0xff]
    %v2849 = vld [vmem:[%s2842 + $0x30] sm:$0xff]
    %v2850 = vld [vmem:[%s2842 + $0x38] sm:$0xff]
    %v2851 = vld [vmem:[%s2842 + $0x40] sm:$0xff]
    %v2852 = vld [vmem:[%s2842 + $0x48] sm:$0xff]
    %v2853 = vld [vmem:[%s2842 + $0x50] sm:$0xff]
    %v2854 = vld [vmem:[%s2842 + $0x58] sm:$0xff]
    %v2855 = vld [vmem:[%s2842 + $0x60] sm:$0xff]
    %v2856 = vld [vmem:[%s2842 + $0x68] sm:$0xff]
    %v2857 = vld [vmem:[%s2842 + $0x70] sm:$0xff]
    %v2858 = vld [vmem:[%s2842 + $0x78] sm:$0xff]
    %v2859 = vld [vmem:[%s2842 + $0x80] sm:$0xff]
    %v2860 = vld [vmem:[%s2842 + $0x88] sm:$0xff]
    %v2861 = vld [vmem:[%s2842 + $0x90] sm:$0xff]
    %v2862 = vld [vmem:[%s2842 + $0x98] sm:$0xff]
    %v2863 = vld [vmem:[%s2842 + $0xa0] sm:$0xff]
    %v2864 = vld [vmem:[%s2842 + $0xa8] sm:$0xff]
    %v2865 = vld [vmem:[%s2842 + $0xb0] sm:$0xff]
    %v2866 = vld [vmem:[%s2842 + $0xb8] sm:$0xff]
    %v2867 = vld [vmem:[%s2842 + $0xc0] sm:$0xff]
    %v2868 = vld [vmem:[%s2842 + $0xc8] sm:$0xff]
    %v2869 = vld [vmem:[%s2842 + $0xd0] sm:$0xff]
    %v2870 = vld [vmem:[%s2842 + $0xd8] sm:$0xff]
    %v2871 = vld [vmem:[%s2842 + $0xe0] sm:$0xff]
    %v2872 = vld [vmem:[%s2842 + $0xe8] sm:$0xff]
    %v2873 = vld [vmem:[%s2842 + $0xf0] sm:$0xff]
    %v2874 = vld [vmem:[%s2842 + $0xf8] sm:$0xff]
    %v2907 = vunpack.c.l.b16 %v2843
    %v2908 = vunpack.c.h.b16 %v2843
    %v2909 = vunpack.c.l.b16 %v2844
    %v2910 = vunpack.c.h.b16 %v2844
    %v2911 = vunpack.c.l.b16 %v2845
    %v2912 = vunpack.c.h.b16 %v2845
    %v2913 = vunpack.c.l.b16 %v2846
    %v2914 = vunpack.c.h.b16 %v2846
    %v2915 = vunpack.c.l.b16 %v2847
    %v2916 = vunpack.c.h.b16 %v2847
    %v2917 = vunpack.c.l.b16 %v2848
    %v2918 = vunpack.c.h.b16 %v2848
    %v2919 = vunpack.c.l.b16 %v2849
    %v2920 = vunpack.c.h.b16 %v2849
    %v2921 = vunpack.c.l.b16 %v2850
    %v2922 = vunpack.c.h.b16 %v2850
    %v2923 = vunpack.c.l.b16 %v2851
    %v2924 = vunpack.c.h.b16 %v2851
    %v2925 = vunpack.c.l.b16 %v2852
    %v2926 = vunpack.c.h.b16 %v2852
    %v2927 = vunpack.c.l.b16 %v2853
    %v2928 = vunpack.c.h.b16 %v2853
    %v2929 = vunpack.c.l.b16 %v2854
    %v2930 = vunpack.c.h.b16 %v2854
    %v2931 = vunpack.c.l.b16 %v2855
    %v2932 = vunpack.c.h.b16 %v2855
    %v2933 = vunpack.c.l.b16 %v2856
    %v2934 = vunpack.c.h.b16 %v2856
    %v2935 = vunpack.c.l.b16 %v2857
    %v2936 = vunpack.c.h.b16 %v2857
    %v2937 = vunpack.c.l.b16 %v2858
    %v2938 = vunpack.c.h.b16 %v2858
    %v2939 = vunpack.c.l.b16 %v2859
    %v2940 = vunpack.c.h.b16 %v2859
    %v2941 = vunpack.c.l.b16 %v2860
    %v2942 = vunpack.c.h.b16 %v2860
    %v2943 = vunpack.c.l.b16 %v2861
    %v2944 = vunpack.c.h.b16 %v2861
    %v2945 = vunpack.c.l.b16 %v2862
    %v2946 = vunpack.c.h.b16 %v2862
    %v2947 = vunpack.c.l.b16 %v2863
    %v2948 = vunpack.c.h.b16 %v2863
    %v2949 = vunpack.c.l.b16 %v2864
    %v2950 = vunpack.c.h.b16 %v2864
    %v2951 = vunpack.c.l.b16 %v2865
    %v2952 = vunpack.c.h.b16 %v2865
    %v2953 = vunpack.c.l.b16 %v2866
    %v2954 = vunpack.c.h.b16 %v2866
    %v2955 = vunpack.c.l.b16 %v2867
    %v2956 = vunpack.c.h.b16 %v2867
    %v2957 = vunpack.c.l.b16 %v2868
    %v2958 = vunpack.c.h.b16 %v2868
    %v2959 = vunpack.c.l.b16 %v2869
    %v2960 = vunpack.c.h.b16 %v2869
    %v2961 = vunpack.c.l.b16 %v2870
    %v2962 = vunpack.c.h.b16 %v2870
    %v2963 = vunpack.c.l.b16 %v2871
    %v2964 = vunpack.c.h.b16 %v2871
    %v2965 = vunpack.c.l.b16 %v2872
    %v2966 = vunpack.c.h.b16 %v2872
    %v2967 = vunpack.c.l.b16 %v2873
    %v2968 = vunpack.c.h.b16 %v2873
    %v2969 = vunpack.c.l.b16 %v2874
    %v2970 = vunpack.c.h.b16 %v2874
    %v2971 = vpack.c.b16 %v2909, %v2907
    %v2972 = vpack.c.b16 %v2910, %v2908
    %v2973 = vpack.c.b16 %v2913, %v2911
    %v2974 = vpack.c.b16 %v2914, %v2912
    %v2975 = vpack.c.b16 %v2917, %v2915
    %v2976 = vpack.c.b16 %v2918, %v2916
    %v2977 = vpack.c.b16 %v2921, %v2919
    %v2978 = vpack.c.b16 %v2922, %v2920
    %v2979 = vpack.c.b16 %v2925, %v2923
    %v2980 = vpack.c.b16 %v2926, %v2924
    %v2981 = vpack.c.b16 %v2929, %v2927
    %v2982 = vpack.c.b16 %v2930, %v2928
    %v2983 = vpack.c.b16 %v2933, %v2931
    %v2984 = vpack.c.b16 %v2934, %v2932
    %v2985 = vpack.c.b16 %v2937, %v2935
    %v2986 = vpack.c.b16 %v2938, %v2936
    %v2987 = vpack.c.b16 %v2941, %v2939
    %v2988 = vpack.c.b16 %v2942, %v2940
    %v2989 = vpack.c.b16 %v2945, %v2943
    %v2990 = vpack.c.b16 %v2946, %v2944
    %v2991 = vpack.c.b16 %v2949, %v2947
    %v2992 = vpack.c.b16 %v2950, %v2948
    %v2993 = vpack.c.b16 %v2953, %v2951
    %v2994 = vpack.c.b16 %v2954, %v2952
    %v2995 = vpack.c.b16 %v2957, %v2955
    %v2996 = vpack.c.b16 %v2958, %v2956
    %v2997 = vpack.c.b16 %v2961, %v2959
    %v2998 = vpack.c.b16 %v2962, %v2960
    %v2999 = vpack.c.b16 %v2965, %v2963
    %v3000 = vpack.c.b16 %v2966, %v2964
    %v3001 = vpack.c.b16 %v2969, %v2967
    %v3002 = vpack.c.b16 %v2970, %v2968
    %3035 = vmatprep.subr.bf16.mxu0 %v2986
    %3036 = vmatpush1.bf16.msra.mxu0 %v2985
    %3037 = vmatprep.subr.bf16.mxu0 %v2984
    %3038 = vmatpush1.bf16.msra.mxu0 %v2983
    %3039 = vmatprep.subr.bf16.mxu0 %v2982
    %3040 = vmatpush1.bf16.msra.mxu0 %v2981
    %3041 = vmatprep.subr.bf16.mxu0 %v2980
    %3042 = vmatpush1.bf16.msra.mxu0 %v2979
    %3043 = vmatprep.subr.bf16.mxu0 %v2978
    %3044 = vmatpush1.bf16.msra.mxu0 %v2977
    %3045 = vmatprep.subr.bf16.mxu0 %v2976
    %3046 = vmatpush1.bf16.msra.mxu0 %v2975
    %3047 = vmatprep.subr.bf16.mxu0 %v2974
    %3048 = vmatpush1.bf16.msra.mxu0 %v2973
    %3049 = vmatprep.subr.bf16.mxu0 %v2972
    %3050 = vmatpush1.bf16.msra.mxu0 %v2971
    %3051 = vmatprep.subr.bf16.mxu0 %v3002
    %3052 = vmatpush2.bf16.msra.mxu0 %v3001
    %3053 = vmatprep.subr.bf16.mxu0 %v3000
    %3054 = vmatpush2.bf16.msra.mxu0 %v2999
    %3055 = vmatprep.subr.bf16.mxu0 %v2998
    %3056 = vmatpush2.bf16.msra.mxu0 %v2997
    %3057 = vmatprep.subr.bf16.mxu0 %v2996
    %3058 = vmatpush2.bf16.msra.mxu0 %v2995
    %3059 = vmatprep.subr.bf16.mxu0 %v2994
    %3060 = vmatpush2.bf16.msra.mxu0 %v2993
    %3061 = vmatprep.subr.bf16.mxu0 %v2992
    %3062 = vmatpush2.bf16.msra.mxu0 %v2991
    %3063 = vmatprep.subr.bf16.mxu0 %v2990
    %3064 = vmatpush2.bf16.msra.mxu0 %v2989
    %3065 = vmatprep.subr.bf16.mxu0 %v2988
    %3066 = vmatpush2.bf16.msra.mxu0 %v2987
    %3067 = vmatprep.mubr.bf16.mxu0 %v2841
    %3068 = vmatmul.mubr.bf16.gmra.mxu0 %v2840
    %v3069 = vpop.f32.mrf.mxu0
    %v3070 = vadd.f32 0.0, %v3069
    %v3071 = vpop.f32.mrf.mxu0
    %v3072 = vadd.f32 0.0, %v3071
    %v3073 = vpop.f32.mrf.mxu0
    %v3074 = vpop.f32.mrf.mxu0
    %3075 = vdwg.mxu0
    %v3076 = vadd.f32 %v2829, %v3070
    %v3077 = vadd.f32 %v2830, %v3072
    %3078 = vset.pattern.permute.xlu0 12
    %3079 = vperm.xlu0 %3078, %v115
    %v3080 = vpop.permute.xlu0 %3079
    %vm3081 = vcmp.eq.s32.totalorder %v3080, %v117
    %vm3082 = vcmp.eq.s32.totalorder %v3080, %v118
    %v3083 = vsel %vm3081, 1, 0
    %v3084 = vsel %vm3082, 1, 0
    %v3085 = vcvt.s32.f32 %v3083
    %v3086 = vcvt.s32.f32 %v3084
    %v3087 = vpack.c.bf16 %v3085, %v3085
    %v3088 = vpack.c.bf16 %v3086, %v3086
    %s3089 = scalar_lea.vmem [#allocation5], 3072
    %v3090 = vld [vmem:[%s3089] sm:$0xff]
    %v3091 = vld [vmem:[%s3089 + $0x8] sm:$0xff]
    %v3092 = vld [vmem:[%s3089 + $0x10] sm:$0xff]
    %v3093 = vld [vmem:[%s3089 + $0x18] sm:$0xff]
    %v3094 = vld [vmem:[%s3089 + $0x20] sm:$0xff]
    %v3095 = vld [vmem:[%s3089 + $0x28] sm:$0xff]
    %v3096 = vld [vmem:[%s3089 + $0x30] sm:$0xff]
    %v3097 = vld [vmem:[%s3089 + $0x38] sm:$0xff]
    %v3098 = vld [vmem:[%s3089 + $0x40] sm:$0xff]
    %v3099 = vld [vmem:[%s3089 + $0x48] sm:$0xff]
    %v3100 = vld [vmem:[%s3089 + $0x50] sm:$0xff]
    %v3101 = vld [vmem:[%s3089 + $0x58] sm:$0xff]
    %v3102 = vld [vmem:[%s3089 + $0x60] sm:$0xff]
    %v3103 = vld [vmem:[%s3089 + $0x68] sm:$0xff]
    %v3104 = vld [vmem:[%s3089 + $0x70] sm:$0xff]
    %v3105 = vld [vmem:[%s3089 + $0x78] sm:$0xff]
    %v3106 = vld [vmem:[%s3089 + $0x80] sm:$0xff]
    %v3107 = vld [vmem:[%s3089 + $0x88] sm:$0xff]
    %v3108 = vld [vmem:[%s3089 + $0x90] sm:$0xff]
    %v3109 = vld [vmem:[%s3089 + $0x98] sm:$0xff]
    %v3110 = vld [vmem:[%s3089 + $0xa0] sm:$0xff]
    %v3111 = vld [vmem:[%s3089 + $0xa8] sm:$0xff]
    %v3112 = vld [vmem:[%s3089 + $0xb0] sm:$0xff]
    %v3113 = vld [vmem:[%s3089 + $0xb8] sm:$0xff]
    %v3114 = vld [vmem:[%s3089 + $0xc0] sm:$0xff]
    %v3115 = vld [vmem:[%s3089 + $0xc8] sm:$0xff]
    %v3116 = vld [vmem:[%s3089 + $0xd0] sm:$0xff]
    %v3117 = vld [vmem:[%s3089 + $0xd8] sm:$0xff]
    %v3118 = vld [vmem:[%s3089 + $0xe0] sm:$0xff]
    %v3119 = vld [vmem:[%s3089 + $0xe8] sm:$0xff]
    %v3120 = vld [vmem:[%s3089 + $0xf0] sm:$0xff]
    %v3121 = vld [vmem:[%s3089 + $0xf8] sm:$0xff]
    %v3154 = vunpack.c.l.b16 %v3090
    %v3155 = vunpack.c.h.b16 %v3090
    %v3156 = vunpack.c.l.b16 %v3091
    %v3157 = vunpack.c.h.b16 %v3091
    %v3158 = vunpack.c.l.b16 %v3092
    %v3159 = vunpack.c.h.b16 %v3092
    %v3160 = vunpack.c.l.b16 %v3093
    %v3161 = vunpack.c.h.b16 %v3093
    %v3162 = vunpack.c.l.b16 %v3094
    %v3163 = vunpack.c.h.b16 %v3094
    %v3164 = vunpack.c.l.b16 %v3095
    %v3165 = vunpack.c.h.b16 %v3095
    %v3166 = vunpack.c.l.b16 %v3096
    %v3167 = vunpack.c.h.b16 %v3096
    %v3168 = vunpack.c.l.b16 %v3097
    %v3169 = vunpack.c.h.b16 %v3097
    %v3170 = vunpack.c.l.b16 %v3098
    %v3171 = vunpack.c.h.b16 %v3098
    %v3172 = vunpack.c.l.b16 %v3099
    %v3173 = vunpack.c.h.b16 %v3099
    %v3174 = vunpack.c.l.b16 %v3100
    %v3175 = vunpack.c.h.b16 %v3100
    %v3176 = vunpack.c.l.b16 %v3101
    %v3177 = vunpack.c.h.b16 %v3101
    %v3178 = vunpack.c.l.b16 %v3102
    %v3179 = vunpack.c.h.b16 %v3102
    %v3180 = vunpack.c.l.b16 %v3103
    %v3181 = vunpack.c.h.b16 %v3103
    %v3182 = vunpack.c.l.b16 %v3104
    %v3183 = vunpack.c.h.b16 %v3104
    %v3184 = vunpack.c.l.b16 %v3105
    %v3185 = vunpack.c.h.b16 %v3105
    %v3186 = vunpack.c.l.b16 %v3106
    %v3187 = vunpack.c.h.b16 %v3106
    %v3188 = vunpack.c.l.b16 %v3107
    %v3189 = vunpack.c.h.b16 %v3107
    %v3190 = vunpack.c.l.b16 %v3108
    %v3191 = vunpack.c.h.b16 %v3108
    %v3192 = vunpack.c.l.b16 %v3109
    %v3193 = vunpack.c.h.b16 %v3109
    %v3194 = vunpack.c.l.b16 %v3110
    %v3195 = vunpack.c.h.b16 %v3110
    %v3196 = vunpack.c.l.b16 %v3111
    %v3197 = vunpack.c.h.b16 %v3111
    %v3198 = vunpack.c.l.b16 %v3112
    %v3199 = vunpack.c.h.b16 %v3112
    %v3200 = vunpack.c.l.b16 %v3113
    %v3201 = vunpack.c.h.b16 %v3113
    %v3202 = vunpack.c.l.b16 %v3114
    %v3203 = vunpack.c.h.b16 %v3114
    %v3204 = vunpack.c.l.b16 %v3115
    %v3205 = vunpack.c.h.b16 %v3115
    %v3206 = vunpack.c.l.b16 %v3116
    %v3207 = vunpack.c.h.b16 %v3116
    %v3208 = vunpack.c.l.b16 %v3117
    %v3209 = vunpack.c.h.b16 %v3117
    %v3210 = vunpack.c.l.b16 %v3118
    %v3211 = vunpack.c.h.b16 %v3118
    %v3212 = vunpack.c.l.b16 %v3119
    %v3213 = vunpack.c.h.b16 %v3119
    %v3214 = vunpack.c.l.b16 %v3120
    %v3215 = vunpack.c.h.b16 %v3120
    %v3216 = vunpack.c.l.b16 %v3121
    %v3217 = vunpack.c.h.b16 %v3121
    %v3218 = vpack.c.b16 %v3156, %v3154
    %v3219 = vpack.c.b16 %v3157, %v3155
    %v3220 = vpack.c.b16 %v3160, %v3158
    %v3221 = vpack.c.b16 %v3161, %v3159
    %v3222 = vpack.c.b16 %v3164, %v3162
    %v3223 = vpack.c.b16 %v3165, %v3163
    %v3224 = vpack.c.b16 %v3168, %v3166
    %v3225 = vpack.c.b16 %v3169, %v3167
    %v3226 = vpack.c.b16 %v3172, %v3170
    %v3227 = vpack.c.b16 %v3173, %v3171
    %v3228 = vpack.c.b16 %v3176, %v3174
    %v3229 = vpack.c.b16 %v3177, %v3175
    %v3230 = vpack.c.b16 %v3180, %v3178
    %v3231 = vpack.c.b16 %v3181, %v3179
    %v3232 = vpack.c.b16 %v3184, %v3182
    %v3233 = vpack.c.b16 %v3185, %v3183
    %v3234 = vpack.c.b16 %v3188, %v3186
    %v3235 = vpack.c.b16 %v3189, %v3187
    %v3236 = vpack.c.b16 %v3192, %v3190
    %v3237 = vpack.c.b16 %v3193, %v3191
    %v3238 = vpack.c.b16 %v3196, %v3194
    %v3239 = vpack.c.b16 %v3197, %v3195
    %v3240 = vpack.c.b16 %v3200, %v3198
    %v3241 = vpack.c.b16 %v3201, %v3199
    %v3242 = vpack.c.b16 %v3204, %v3202
    %v3243 = vpack.c.b16 %v3205, %v3203
    %v3244 = vpack.c.b16 %v3208, %v3206
    %v3245 = vpack.c.b16 %v3209, %v3207
    %v3246 = vpack.c.b16 %v3212, %v3210
    %v3247 = vpack.c.b16 %v3213, %v3211
    %v3248 = vpack.c.b16 %v3216, %v3214
    %v3249 = vpack.c.b16 %v3217, %v3215
    %3282 = vmatprep.subr.bf16.mxu0 %v3233
    %3283 = vmatpush1.bf16.msra.mxu0 %v3232
    %3284 = vmatprep.subr.bf16.mxu0 %v3231
    %3285 = vmatpush1.bf16.msra.mxu0 %v3230
    %3286 = vmatprep.subr.bf16.mxu0 %v3229
    %3287 = vmatpush1.bf16.msra.mxu0 %v3228
    %3288 = vmatprep.subr.bf16.mxu0 %v3227
    %3289 = vmatpush1.bf16.msra.mxu0 %v3226
    %3290 = vmatprep.subr.bf16.mxu0 %v3225
    %3291 = vmatpush1.bf16.msra.mxu0 %v3224
    %3292 = vmatprep.subr.bf16.mxu0 %v3223
    %3293 = vmatpush1.bf16.msra.mxu0 %v3222
    %3294 = vmatprep.subr.bf16.mxu0 %v3221
    %3295 = vmatpush1.bf16.msra.mxu0 %v3220
    %3296 = vmatprep.subr.bf16.mxu0 %v3219
    %3297 = vmatpush1.bf16.msra.mxu0 %v3218
    %3298 = vmatprep.subr.bf16.mxu0 %v3249
    %3299 = vmatpush2.bf16.msra.mxu0 %v3248
    %3300 = vmatprep.subr.bf16.mxu0 %v3247
    %3301 = vmatpush2.bf16.msra.mxu0 %v3246
    %3302 = vmatprep.subr.bf16.mxu0 %v3245
    %3303 = vmatpush2.bf16.msra.mxu0 %v3244
    %3304 = vmatprep.subr.bf16.mxu0 %v3243
    %3305 = vmatpush2.bf16.msra.mxu0 %v3242
    %3306 = vmatprep.subr.bf16.mxu0 %v3241
    %3307 = vmatpush2.bf16.msra.mxu0 %v3240
    %3308 = vmatprep.subr.bf16.mxu0 %v3239
    %3309 = vmatpush2.bf16.msra.mxu0 %v3238
    %3310 = vmatprep.subr.bf16.mxu0 %v3237
    %3311 = vmatpush2.bf16.msra.mxu0 %v3236
    %3312 = vmatprep.subr.bf16.mxu0 %v3235
    %3313 = vmatpush2.bf16.msra.mxu0 %v3234
    %3314 = vmatprep.mubr.bf16.mxu0 %v3088
    %3315 = vmatmul.mubr.bf16.gmra.mxu0 %v3087
    %v3316 = vpop.f32.mrf.mxu0
    %v3317 = vadd.f32 0.0, %v3316
    %v3318 = vpop.f32.mrf.mxu0
    %v3319 = vadd.f32 0.0, %v3318
    %v3320 = vpop.f32.mrf.mxu0
    %v3321 = vpop.f32.mrf.mxu0
    %3322 = vdwg.mxu0
    %v3323 = vadd.f32 %v3076, %v3317
    %v3324 = vadd.f32 %v3077, %v3319
    %3325 = vset.pattern.permute.xlu0 13
    %3326 = vperm.xlu0 %3325, %v115
    %v3327 = vpop.permute.xlu0 %3326
    %vm3328 = vcmp.eq.s32.totalorder %v3327, %v117
    %vm3329 = vcmp.eq.s32.totalorder %v3327, %v118
    %v3330 = vsel %vm3328, 1, 0
    %v3331 = vsel %vm3329, 1, 0
    %v3332 = vcvt.s32.f32 %v3330
    %v3333 = vcvt.s32.f32 %v3331
    %v3334 = vpack.c.bf16 %v3332, %v3332
    %v3335 = vpack.c.bf16 %v3333, %v3333
    %s3336 = scalar_lea.vmem [#allocation5], 3328
    %v3337 = vld [vmem:[%s3336] sm:$0xff]
    %v3338 = vld [vmem:[%s3336 + $0x8] sm:$0xff]
    %v3339 = vld [vmem:[%s3336 + $0x10] sm:$0xff]
    %v3340 = vld [vmem:[%s3336 + $0x18] sm:$0xff]
    %v3341 = vld [vmem:[%s3336 + $0x20] sm:$0xff]
    %v3342 = vld [vmem:[%s3336 + $0x28] sm:$0xff]
    %v3343 = vld [vmem:[%s3336 + $0x30] sm:$0xff]
    %v3344 = vld [vmem:[%s3336 + $0x38] sm:$0xff]
    %v3345 = vld [vmem:[%s3336 + $0x40] sm:$0xff]
    %v3346 = vld [vmem:[%s3336 + $0x48] sm:$0xff]
    %v3347 = vld [vmem:[%s3336 + $0x50] sm:$0xff]
    %v3348 = vld [vmem:[%s3336 + $0x58] sm:$0xff]
    %v3349 = vld [vmem:[%s3336 + $0x60] sm:$0xff]
    %v3350 = vld [vmem:[%s3336 + $0x68] sm:$0xff]
    %v3351 = vld [vmem:[%s3336 + $0x70] sm:$0xff]
    %v3352 = vld [vmem:[%s3336 + $0x78] sm:$0xff]
    %v3353 = vld [vmem:[%s3336 + $0x80] sm:$0xff]
    %v3354 = vld [vmem:[%s3336 + $0x88] sm:$0xff]
    %v3355 = vld [vmem:[%s3336 + $0x90] sm:$0xff]
    %v3356 = vld [vmem:[%s3336 + $0x98] sm:$0xff]
    %v3357 = vld [vmem:[%s3336 + $0xa0] sm:$0xff]
    %v3358 = vld [vmem:[%s3336 + $0xa8] sm:$0xff]
    %v3359 = vld [vmem:[%s3336 + $0xb0] sm:$0xff]
    %v3360 = vld [vmem:[%s3336 + $0xb8] sm:$0xff]
    %v3361 = vld [vmem:[%s3336 + $0xc0] sm:$0xff]
    %v3362 = vld [vmem:[%s3336 + $0xc8] sm:$0xff]
    %v3363 = vld [vmem:[%s3336 + $0xd0] sm:$0xff]
    %v3364 = vld [vmem:[%s3336 + $0xd8] sm:$0xff]
    %v3365 = vld [vmem:[%s3336 + $0xe0] sm:$0xff]
    %v3366 = vld [vmem:[%s3336 + $0xe8] sm:$0xff]
    %v3367 = vld [vmem:[%s3336 + $0xf0] sm:$0xff]
    %v3368 = vld [vmem:[%s3336 + $0xf8] sm:$0xff]
    %v3401 = vunpack.c.l.b16 %v3337
    %v3402 = vunpack.c.h.b16 %v3337
    %v3403 = vunpack.c.l.b16 %v3338
    %v3404 = vunpack.c.h.b16 %v3338
    %v3405 = vunpack.c.l.b16 %v3339
    %v3406 = vunpack.c.h.b16 %v3339
    %v3407 = vunpack.c.l.b16 %v3340
    %v3408 = vunpack.c.h.b16 %v3340
    %v3409 = vunpack.c.l.b16 %v3341
    %v3410 = vunpack.c.h.b16 %v3341
    %v3411 = vunpack.c.l.b16 %v3342
    %v3412 = vunpack.c.h.b16 %v3342
    %v3413 = vunpack.c.l.b16 %v3343
    %v3414 = vunpack.c.h.b16 %v3343
    %v3415 = vunpack.c.l.b16 %v3344
    %v3416 = vunpack.c.h.b16 %v3344
    %v3417 = vunpack.c.l.b16 %v3345
    %v3418 = vunpack.c.h.b16 %v3345
    %v3419 = vunpack.c.l.b16 %v3346
    %v3420 = vunpack.c.h.b16 %v3346
    %v3421 = vunpack.c.l.b16 %v3347
    %v3422 = vunpack.c.h.b16 %v3347
    %v3423 = vunpack.c.l.b16 %v3348
    %v3424 = vunpack.c.h.b16 %v3348
    %v3425 = vunpack.c.l.b16 %v3349
    %v3426 = vunpack.c.h.b16 %v3349
    %v3427 = vunpack.c.l.b16 %v3350
    %v3428 = vunpack.c.h.b16 %v3350
    %v3429 = vunpack.c.l.b16 %v3351
    %v3430 = vunpack.c.h.b16 %v3351
    %v3431 = vunpack.c.l.b16 %v3352
    %v3432 = vunpack.c.h.b16 %v3352
    %v3433 = vunpack.c.l.b16 %v3353
    %v3434 = vunpack.c.h.b16 %v3353
    %v3435 = vunpack.c.l.b16 %v3354
    %v3436 = vunpack.c.h.b16 %v3354
    %v3437 = vunpack.c.l.b16 %v3355
    %v3438 = vunpack.c.h.b16 %v3355
    %v3439 = vunpack.c.l.b16 %v3356
    %v3440 = vunpack.c.h.b16 %v3356
    %v3441 = vunpack.c.l.b16 %v3357
    %v3442 = vunpack.c.h.b16 %v3357
    %v3443 = vunpack.c.l.b16 %v3358
    %v3444 = vunpack.c.h.b16 %v3358
    %v3445 = vunpack.c.l.b16 %v3359
    %v3446 = vunpack.c.h.b16 %v3359
    %v3447 = vunpack.c.l.b16 %v3360
    %v3448 = vunpack.c.h.b16 %v3360
    %v3449 = vunpack.c.l.b16 %v3361
    %v3450 = vunpack.c.h.b16 %v3361
    %v3451 = vunpack.c.l.b16 %v3362
    %v3452 = vunpack.c.h.b16 %v3362
    %v3453 = vunpack.c.l.b16 %v3363
    %v3454 = vunpack.c.h.b16 %v3363
    %v3455 = vunpack.c.l.b16 %v3364
    %v3456 = vunpack.c.h.b16 %v3364
    %v3457 = vunpack.c.l.b16 %v3365
    %v3458 = vunpack.c.h.b16 %v3365
    %v3459 = vunpack.c.l.b16 %v3366
    %v3460 = vunpack.c.h.b16 %v3366
    %v3461 = vunpack.c.l.b16 %v3367
    %v3462 = vunpack.c.h.b16 %v3367
    %v3463 = vunpack.c.l.b16 %v3368
    %v3464 = vunpack.c.h.b16 %v3368
    %v3465 = vpack.c.b16 %v3403, %v3401
    %v3466 = vpack.c.b16 %v3404, %v3402
    %v3467 = vpack.c.b16 %v3407, %v3405
    %v3468 = vpack.c.b16 %v3408, %v3406
    %v3469 = vpack.c.b16 %v3411, %v3409
    %v3470 = vpack.c.b16 %v3412, %v3410
    %v3471 = vpack.c.b16 %v3415, %v3413
    %v3472 = vpack.c.b16 %v3416, %v3414
    %v3473 = vpack.c.b16 %v3419, %v3417
    %v3474 = vpack.c.b16 %v3420, %v3418
    %v3475 = vpack.c.b16 %v3423, %v3421
    %v3476 = vpack.c.b16 %v3424, %v3422
    %v3477 = vpack.c.b16 %v3427, %v3425
    %v3478 = vpack.c.b16 %v3428, %v3426
    %v3479 = vpack.c.b16 %v3431, %v3429
    %v3480 = vpack.c.b16 %v3432, %v3430
    %v3481 = vpack.c.b16 %v3435, %v3433
    %v3482 = vpack.c.b16 %v3436, %v3434
    %v3483 = vpack.c.b16 %v3439, %v3437
    %v3484 = vpack.c.b16 %v3440, %v3438
    %v3485 = vpack.c.b16 %v3443, %v3441
    %v3486 = vpack.c.b16 %v3444, %v3442
    %v3487 = vpack.c.b16 %v3447, %v3445
    %v3488 = vpack.c.b16 %v3448, %v3446
    %v3489 = vpack.c.b16 %v3451, %v3449
    %v3490 = vpack.c.b16 %v3452, %v3450
    %v3491 = vpack.c.b16 %v3455, %v3453
    %v3492 = vpack.c.b16 %v3456, %v3454
    %v3493 = vpack.c.b16 %v3459, %v3457
    %v3494 = vpack.c.b16 %v3460, %v3458
    %v3495 = vpack.c.b16 %v3463, %v3461
    %v3496 = vpack.c.b16 %v3464, %v3462
    %3529 = vmatprep.subr.bf16.mxu0 %v3480
    %3530 = vmatpush1.bf16.msra.mxu0 %v3479
    %3531 = vmatprep.subr.bf16.mxu0 %v3478
    %3532 = vmatpush1.bf16.msra.mxu0 %v3477
    %3533 = vmatprep.subr.bf16.mxu0 %v3476
    %3534 = vmatpush1.bf16.msra.mxu0 %v3475
    %3535 = vmatprep.subr.bf16.mxu0 %v3474
    %3536 = vmatpush1.bf16.msra.mxu0 %v3473
    %3537 = vmatprep.subr.bf16.mxu0 %v3472
    %3538 = vmatpush1.bf16.msra.mxu0 %v3471
    %3539 = vmatprep.subr.bf16.mxu0 %v3470
    %3540 = vmatpush1.bf16.msra.mxu0 %v3469
    %3541 = vmatprep.subr.bf16.mxu0 %v3468
    %3542 = vmatpush1.bf16.msra.mxu0 %v3467
    %3543 = vmatprep.subr.bf16.mxu0 %v3466
    %3544 = vmatpush1.bf16.msra.mxu0 %v3465
    %3545 = vmatprep.subr.bf16.mxu0 %v3496
    %3546 = vmatpush2.bf16.msra.mxu0 %v3495
    %3547 = vmatprep.subr.bf16.mxu0 %v3494
    %3548 = vmatpush2.bf16.msra.mxu0 %v3493
    %3549 = vmatprep.subr.bf16.mxu0 %v3492
    %3550 = vmatpush2.bf16.msra.mxu0 %v3491
    %3551 = vmatprep.subr.bf16.mxu0 %v3490
    %3552 = vmatpush2.bf16.msra.mxu0 %v3489
    %3553 = vmatprep.subr.bf16.mxu0 %v3488
    %3554 = vmatpush2.bf16.msra.mxu0 %v3487
    %3555 = vmatprep.subr.bf16.mxu0 %v3486
    %3556 = vmatpush2.bf16.msra.mxu0 %v3485
    %3557 = vmatprep.subr.bf16.mxu0 %v3484
    %3558 = vmatpush2.bf16.msra.mxu0 %v3483
    %3559 = vmatprep.subr.bf16.mxu0 %v3482
    %3560 = vmatpush2.bf16.msra.mxu0 %v3481
    %3561 = vmatprep.mubr.bf16.mxu0 %v3335
    %3562 = vmatmul.mubr.bf16.gmra.mxu0 %v3334
    %v3563 = vpop.f32.mrf.mxu0
    %v3564 = vadd.f32 0.0, %v3563
    %v3565 = vpop.f32.mrf.mxu0
    %v3566 = vadd.f32 0.0, %v3565
    %v3567 = vpop.f32.mrf.mxu0
    %v3568 = vpop.f32.mrf.mxu0
    %3569 = vdwg.mxu0
    %v3570 = vadd.f32 %v3323, %v3564
    %v3571 = vadd.f32 %v3324, %v3566
    %3572 = vset.pattern.permute.xlu0 14
    %3573 = vperm.xlu0 %3572, %v115
    %v3574 = vpop.permute.xlu0 %3573
    %vm3575 = vcmp.eq.s32.totalorder %v3574, %v117
    %vm3576 = vcmp.eq.s32.totalorder %v3574, %v118
    %v3577 = vsel %vm3575, 1, 0
    %v3578 = vsel %vm3576, 1, 0
    %v3579 = vcvt.s32.f32 %v3577
    %v3580 = vcvt.s32.f32 %v3578
    %v3581 = vpack.c.bf16 %v3579, %v3579
    %v3582 = vpack.c.bf16 %v3580, %v3580
    %s3583 = scalar_lea.vmem [#allocation5], 3584
    %v3584 = vld [vmem:[%s3583] sm:$0xff]
    %v3585 = vld [vmem:[%s3583 + $0x8] sm:$0xff]
    %v3586 = vld [vmem:[%s3583 + $0x10] sm:$0xff]
    %v3587 = vld [vmem:[%s3583 + $0x18] sm:$0xff]
    %v3588 = vld [vmem:[%s3583 + $0x20] sm:$0xff]
    %v3589 = vld [vmem:[%s3583 + $0x28] sm:$0xff]
    %v3590 = vld [vmem:[%s3583 + $0x30] sm:$0xff]
    %v3591 = vld [vmem:[%s3583 + $0x38] sm:$0xff]
    %v3592 = vld [vmem:[%s3583 + $0x40] sm:$0xff]
    %v3593 = vld [vmem:[%s3583 + $0x48] sm:$0xff]
    %v3594 = vld [vmem:[%s3583 + $0x50] sm:$0xff]
    %v3595 = vld [vmem:[%s3583 + $0x58] sm:$0xff]
    %v3596 = vld [vmem:[%s3583 + $0x60] sm:$0xff]
    %v3597 = vld [vmem:[%s3583 + $0x68] sm:$0xff]
    %v3598 = vld [vmem:[%s3583 + $0x70] sm:$0xff]
    %v3599 = vld [vmem:[%s3583 + $0x78] sm:$0xff]
    %v3600 = vld [vmem:[%s3583 + $0x80] sm:$0xff]
    %v3601 = vld [vmem:[%s3583 + $0x88] sm:$0xff]
    %v3602 = vld [vmem:[%s3583 + $0x90] sm:$0xff]
    %v3603 = vld [vmem:[%s3583 + $0x98] sm:$0xff]
    %v3604 = vld [vmem:[%s3583 + $0xa0] sm:$0xff]
    %v3605 = vld [vmem:[%s3583 + $0xa8] sm:$0xff]
    %v3606 = vld [vmem:[%s3583 + $0xb0] sm:$0xff]
    %v3607 = vld [vmem:[%s3583 + $0xb8] sm:$0xff]
    %v3608 = vld [vmem:[%s3583 + $0xc0] sm:$0xff]
    %v3609 = vld [vmem:[%s3583 + $0xc8] sm:$0xff]
    %v3610 = vld [vmem:[%s3583 + $0xd0] sm:$0xff]
    %v3611 = vld [vmem:[%s3583 + $0xd8] sm:$0xff]
    %v3612 = vld [vmem:[%s3583 + $0xe0] sm:$0xff]
    %v3613 = vld [vmem:[%s3583 + $0xe8] sm:$0xff]
    %v3614 = vld [vmem:[%s3583 + $0xf0] sm:$0xff]
    %v3615 = vld [vmem:[%s3583 + $0xf8] sm:$0xff]
    %v3648 = vunpack.c.l.b16 %v3584
    %v3649 = vunpack.c.h.b16 %v3584
    %v3650 = vunpack.c.l.b16 %v3585
    %v3651 = vunpack.c.h.b16 %v3585
    %v3652 = vunpack.c.l.b16 %v3586
    %v3653 = vunpack.c.h.b16 %v3586
    %v3654 = vunpack.c.l.b16 %v3587
    %v3655 = vunpack.c.h.b16 %v3587
    %v3656 = vunpack.c.l.b16 %v3588
    %v3657 = vunpack.c.h.b16 %v3588
    %v3658 = vunpack.c.l.b16 %v3589
    %v3659 = vunpack.c.h.b16 %v3589
    %v3660 = vunpack.c.l.b16 %v3590
    %v3661 = vunpack.c.h.b16 %v3590
    %v3662 = vunpack.c.l.b16 %v3591
    %v3663 = vunpack.c.h.b16 %v3591
    %v3664 = vunpack.c.l.b16 %v3592
    %v3665 = vunpack.c.h.b16 %v3592
    %v3666 = vunpack.c.l.b16 %v3593
    %v3667 = vunpack.c.h.b16 %v3593
    %v3668 = vunpack.c.l.b16 %v3594
    %v3669 = vunpack.c.h.b16 %v3594
    %v3670 = vunpack.c.l.b16 %v3595
    %v3671 = vunpack.c.h.b16 %v3595
    %v3672 = vunpack.c.l.b16 %v3596
    %v3673 = vunpack.c.h.b16 %v3596
    %v3674 = vunpack.c.l.b16 %v3597
    %v3675 = vunpack.c.h.b16 %v3597
    %v3676 = vunpack.c.l.b16 %v3598
    %v3677 = vunpack.c.h.b16 %v3598
    %v3678 = vunpack.c.l.b16 %v3599
    %v3679 = vunpack.c.h.b16 %v3599
    %v3680 = vunpack.c.l.b16 %v3600
    %v3681 = vunpack.c.h.b16 %v3600
    %v3682 = vunpack.c.l.b16 %v3601
    %v3683 = vunpack.c.h.b16 %v3601
    %v3684 = vunpack.c.l.b16 %v3602
    %v3685 = vunpack.c.h.b16 %v3602
    %v3686 = vunpack.c.l.b16 %v3603
    %v3687 = vunpack.c.h.b16 %v3603
    %v3688 = vunpack.c.l.b16 %v3604
    %v3689 = vunpack.c.h.b16 %v3604
    %v3690 = vunpack.c.l.b16 %v3605
    %v3691 = vunpack.c.h.b16 %v3605
    %v3692 = vunpack.c.l.b16 %v3606
    %v3693 = vunpack.c.h.b16 %v3606
    %v3694 = vunpack.c.l.b16 %v3607
    %v3695 = vunpack.c.h.b16 %v3607
    %v3696 = vunpack.c.l.b16 %v3608
    %v3697 = vunpack.c.h.b16 %v3608
    %v3698 = vunpack.c.l.b16 %v3609
    %v3699 = vunpack.c.h.b16 %v3609
    %v3700 = vunpack.c.l.b16 %v3610
    %v3701 = vunpack.c.h.b16 %v3610
    %v3702 = vunpack.c.l.b16 %v3611
    %v3703 = vunpack.c.h.b16 %v3611
    %v3704 = vunpack.c.l.b16 %v3612
    %v3705 = vunpack.c.h.b16 %v3612
    %v3706 = vunpack.c.l.b16 %v3613
    %v3707 = vunpack.c.h.b16 %v3613
    %v3708 = vunpack.c.l.b16 %v3614
    %v3709 = vunpack.c.h.b16 %v3614
    %v3710 = vunpack.c.l.b16 %v3615
    %v3711 = vunpack.c.h.b16 %v3615
    %v3712 = vpack.c.b16 %v3650, %v3648
    %v3713 = vpack.c.b16 %v3651, %v3649
    %v3714 = vpack.c.b16 %v3654, %v3652
    %v3715 = vpack.c.b16 %v3655, %v3653
    %v3716 = vpack.c.b16 %v3658, %v3656
    %v3717 = vpack.c.b16 %v3659, %v3657
    %v3718 = vpack.c.b16 %v3662, %v3660
    %v3719 = vpack.c.b16 %v3663, %v3661
    %v3720 = vpack.c.b16 %v3666, %v3664
    %v3721 = vpack.c.b16 %v3667, %v3665
    %v3722 = vpack.c.b16 %v3670, %v3668
    %v3723 = vpack.c.b16 %v3671, %v3669
    %v3724 = vpack.c.b16 %v3674, %v3672
    %v3725 = vpack.c.b16 %v3675, %v3673
    %v3726 = vpack.c.b16 %v3678, %v3676
    %v3727 = vpack.c.b16 %v3679, %v3677
    %v3728 = vpack.c.b16 %v3682, %v3680
    %v3729 = vpack.c.b16 %v3683, %v3681
    %v3730 = vpack.c.b16 %v3686, %v3684
    %v3731 = vpack.c.b16 %v3687, %v3685
    %v3732 = vpack.c.b16 %v3690, %v3688
    %v3733 = vpack.c.b16 %v3691, %v3689
    %v3734 = vpack.c.b16 %v3694, %v3692
    %v3735 = vpack.c.b16 %v3695, %v3693
    %v3736 = vpack.c.b16 %v3698, %v3696
    %v3737 = vpack.c.b16 %v3699, %v3697
    %v3738 = vpack.c.b16 %v3702, %v3700
    %v3739 = vpack.c.b16 %v3703, %v3701
    %v3740 = vpack.c.b16 %v3706, %v3704
    %v3741 = vpack.c.b16 %v3707, %v3705
    %v3742 = vpack.c.b16 %v3710, %v3708
    %v3743 = vpack.c.b16 %v3711, %v3709
    %3776 = vmatprep.subr.bf16.mxu0 %v3727
    %3777 = vmatpush1.bf16.msra.mxu0 %v3726
    %3778 = vmatprep.subr.bf16.mxu0 %v3725
    %3779 = vmatpush1.bf16.msra.mxu0 %v3724
    %3780 = vmatprep.subr.bf16.mxu0 %v3723
    %3781 = vmatpush1.bf16.msra.mxu0 %v3722
    %3782 = vmatprep.subr.bf16.mxu0 %v3721
    %3783 = vmatpush1.bf16.msra.mxu0 %v3720
    %3784 = vmatprep.subr.bf16.mxu0 %v3719
    %3785 = vmatpush1.bf16.msra.mxu0 %v3718
    %3786 = vmatprep.subr.bf16.mxu0 %v3717
    %3787 = vmatpush1.bf16.msra.mxu0 %v3716
    %3788 = vmatprep.subr.bf16.mxu0 %v3715
    %3789 = vmatpush1.bf16.msra.mxu0 %v3714
    %3790 = vmatprep.subr.bf16.mxu0 %v3713
    %3791 = vmatpush1.bf16.msra.mxu0 %v3712
    %3792 = vmatprep.subr.bf16.mxu0 %v3743
    %3793 = vmatpush2.bf16.msra.mxu0 %v3742
    %3794 = vmatprep.subr.bf16.mxu0 %v3741
    %3795 = vmatpush2.bf16.msra.mxu0 %v3740
    %3796 = vmatprep.subr.bf16.mxu0 %v3739
    %3797 = vmatpush2.bf16.msra.mxu0 %v3738
    %3798 = vmatprep.subr.bf16.mxu0 %v3737
    %3799 = vmatpush2.bf16.msra.mxu0 %v3736
    %3800 = vmatprep.subr.bf16.mxu0 %v3735
    %3801 = vmatpush2.bf16.msra.mxu0 %v3734
    %3802 = vmatprep.subr.bf16.mxu0 %v3733
    %3803 = vmatpush2.bf16.msra.mxu0 %v3732
    %3804 = vmatprep.subr.bf16.mxu0 %v3731
    %3805 = vmatpush2.bf16.msra.mxu0 %v3730
    %3806 = vmatprep.subr.bf16.mxu0 %v3729
    %3807 = vmatpush2.bf16.msra.mxu0 %v3728
    %3808 = vmatprep.mubr.bf16.mxu0 %v3582
    %3809 = vmatmul.mubr.bf16.gmra.mxu0 %v3581
    %v3810 = vpop.f32.mrf.mxu0
    %v3811 = vadd.f32 0.0, %v3810
    %v3812 = vpop.f32.mrf.mxu0
    %v3813 = vadd.f32 0.0, %v3812
    %v3814 = vpop.f32.mrf.mxu0
    %v3815 = vpop.f32.mrf.mxu0
    %3816 = vdwg.mxu0
    %v3817 = vadd.f32 %v3570, %v3811
    %v3818 = vadd.f32 %v3571, %v3813
    %3819 = vset.pattern.permute.xlu0 15
    %3820 = vperm.xlu0 %3819, %v115
    %v3821 = vpop.permute.xlu0 %3820
    %vm3822 = vcmp.eq.s32.totalorder %v3821, %v117
    %vm3823 = vcmp.eq.s32.totalorder %v3821, %v118
    %v3824 = vsel %vm3822, 1, 0
    %v3825 = vsel %vm3823, 1, 0
    %v3826 = vcvt.s32.f32 %v3824
    %v3827 = vcvt.s32.f32 %v3825
    %v3828 = vpack.c.bf16 %v3826, %v3826
    %v3829 = vpack.c.bf16 %v3827, %v3827
    %s3830 = scalar_lea.vmem [#allocation5], 3840
    %v3831 = vld [vmem:[%s3830] sm:$0xff]
    %v3832 = vld [vmem:[%s3830 + $0x8] sm:$0xff]
    %v3833 = vld [vmem:[%s3830 + $0x10] sm:$0xff]
    %v3834 = vld [vmem:[%s3830 + $0x18] sm:$0xff]
    %v3835 = vld [vmem:[%s3830 + $0x20] sm:$0xff]
    %v3836 = vld [vmem:[%s3830 + $0x28] sm:$0xff]
    %v3837 = vld [vmem:[%s3830 + $0x30] sm:$0xff]
    %v3838 = vld [vmem:[%s3830 + $0x38] sm:$0xff]
    %v3839 = vld [vmem:[%s3830 + $0x40] sm:$0xff]
    %v3840 = vld [vmem:[%s3830 + $0x48] sm:$0xff]
    %v3841 = vld [vmem:[%s3830 + $0x50] sm:$0xff]
    %v3842 = vld [vmem:[%s3830 + $0x58] sm:$0xff]
    %v3843 = vld [vmem:[%s3830 + $0x60] sm:$0xff]
    %v3844 = vld [vmem:[%s3830 + $0x68] sm:$0xff]
    %v3845 = vld [vmem:[%s3830 + $0x70] sm:$0xff]
    %v3846 = vld [vmem:[%s3830 + $0x78] sm:$0xff]
    %v3847 = vld [vmem:[%s3830 + $0x80] sm:$0xff]
    %v3848 = vld [vmem:[%s3830 + $0x88] sm:$0xff]
    %v3849 = vld [vmem:[%s3830 + $0x90] sm:$0xff]
    %v3850 = vld [vmem:[%s3830 + $0x98] sm:$0xff]
    %v3851 = vld [vmem:[%s3830 + $0xa0] sm:$0xff]
    %v3852 = vld [vmem:[%s3830 + $0xa8] sm:$0xff]
    %v3853 = vld [vmem:[%s3830 + $0xb0] sm:$0xff]
    %v3854 = vld [vmem:[%s3830 + $0xb8] sm:$0xff]
    %v3855 = vld [vmem:[%s3830 + $0xc0] sm:$0xff]
    %v3856 = vld [vmem:[%s3830 + $0xc8] sm:$0xff]
    %v3857 = vld [vmem:[%s3830 + $0xd0] sm:$0xff]
    %v3858 = vld [vmem:[%s3830 + $0xd8] sm:$0xff]
    %v3859 = vld [vmem:[%s3830 + $0xe0] sm:$0xff]
    %v3860 = vld [vmem:[%s3830 + $0xe8] sm:$0xff]
    %v3861 = vld [vmem:[%s3830 + $0xf0] sm:$0xff]
    %v3862 = vld [vmem:[%s3830 + $0xf8] sm:$0xff]
    %v3895 = vunpack.c.l.b16 %v3831
    %v3896 = vunpack.c.h.b16 %v3831
    %v3897 = vunpack.c.l.b16 %v3832
    %v3898 = vunpack.c.h.b16 %v3832
    %v3899 = vunpack.c.l.b16 %v3833
    %v3900 = vunpack.c.h.b16 %v3833
    %v3901 = vunpack.c.l.b16 %v3834
    %v3902 = vunpack.c.h.b16 %v3834
    %v3903 = vunpack.c.l.b16 %v3835
    %v3904 = vunpack.c.h.b16 %v3835
    %v3905 = vunpack.c.l.b16 %v3836
    %v3906 = vunpack.c.h.b16 %v3836
    %v3907 = vunpack.c.l.b16 %v3837
    %v3908 = vunpack.c.h.b16 %v3837
    %v3909 = vunpack.c.l.b16 %v3838
    %v3910 = vunpack.c.h.b16 %v3838
    %v3911 = vunpack.c.l.b16 %v3839
    %v3912 = vunpack.c.h.b16 %v3839
    %v3913 = vunpack.c.l.b16 %v3840
    %v3914 = vunpack.c.h.b16 %v3840
    %v3915 = vunpack.c.l.b16 %v3841
    %v3916 = vunpack.c.h.b16 %v3841
    %v3917 = vunpack.c.l.b16 %v3842
    %v3918 = vunpack.c.h.b16 %v3842
    %v3919 = vunpack.c.l.b16 %v3843
    %v3920 = vunpack.c.h.b16 %v3843
    %v3921 = vunpack.c.l.b16 %v3844
    %v3922 = vunpack.c.h.b16 %v3844
    %v3923 = vunpack.c.l.b16 %v3845
    %v3924 = vunpack.c.h.b16 %v3845
    %v3925 = vunpack.c.l.b16 %v3846
    %v3926 = vunpack.c.h.b16 %v3846
    %v3927 = vunpack.c.l.b16 %v3847
    %v3928 = vunpack.c.h.b16 %v3847
    %v3929 = vunpack.c.l.b16 %v3848
    %v3930 = vunpack.c.h.b16 %v3848
    %v3931 = vunpack.c.l.b16 %v3849
    %v3932 = vunpack.c.h.b16 %v3849
    %v3933 = vunpack.c.l.b16 %v3850
    %v3934 = vunpack.c.h.b16 %v3850
    %v3935 = vunpack.c.l.b16 %v3851
    %v3936 = vunpack.c.h.b16 %v3851
    %v3937 = vunpack.c.l.b16 %v3852
    %v3938 = vunpack.c.h.b16 %v3852
    %v3939 = vunpack.c.l.b16 %v3853
    %v3940 = vunpack.c.h.b16 %v3853
    %v3941 = vunpack.c.l.b16 %v3854
    %v3942 = vunpack.c.h.b16 %v3854
    %v3943 = vunpack.c.l.b16 %v3855
    %v3944 = vunpack.c.h.b16 %v3855
    %v3945 = vunpack.c.l.b16 %v3856
    %v3946 = vunpack.c.h.b16 %v3856
    %v3947 = vunpack.c.l.b16 %v3857
    %v3948 = vunpack.c.h.b16 %v3857
    %v3949 = vunpack.c.l.b16 %v3858
    %v3950 = vunpack.c.h.b16 %v3858
    %v3951 = vunpack.c.l.b16 %v3859
    %v3952 = vunpack.c.h.b16 %v3859
    %v3953 = vunpack.c.l.b16 %v3860
    %v3954 = vunpack.c.h.b16 %v3860
    %v3955 = vunpack.c.l.b16 %v3861
    %v3956 = vunpack.c.h.b16 %v3861
    %v3957 = vunpack.c.l.b16 %v3862
    %v3958 = vunpack.c.h.b16 %v3862
    %v3959 = vpack.c.b16 %v3897, %v3895
    %v3960 = vpack.c.b16 %v3898, %v3896
    %v3961 = vpack.c.b16 %v3901, %v3899
    %v3962 = vpack.c.b16 %v3902, %v3900
    %v3963 = vpack.c.b16 %v3905, %v3903
    %v3964 = vpack.c.b16 %v3906, %v3904
    %v3965 = vpack.c.b16 %v3909, %v3907
    %v3966 = vpack.c.b16 %v3910, %v3908
    %v3967 = vpack.c.b16 %v3913, %v3911
    %v3968 = vpack.c.b16 %v3914, %v3912
    %v3969 = vpack.c.b16 %v3917, %v3915
    %v3970 = vpack.c.b16 %v3918, %v3916
    %v3971 = vpack.c.b16 %v3921, %v3919
    %v3972 = vpack.c.b16 %v3922, %v3920
    %v3973 = vpack.c.b16 %v3925, %v3923
    %v3974 = vpack.c.b16 %v3926, %v3924
    %v3975 = vpack.c.b16 %v3929, %v3927
    %v3976 = vpack.c.b16 %v3930, %v3928
    %v3977 = vpack.c.b16 %v3933, %v3931
    %v3978 = vpack.c.b16 %v3934, %v3932
    %v3979 = vpack.c.b16 %v3937, %v3935
    %v3980 = vpack.c.b16 %v3938, %v3936
    %v3981 = vpack.c.b16 %v3941, %v3939
    %v3982 = vpack.c.b16 %v3942, %v3940
    %v3983 = vpack.c.b16 %v3945, %v3943
    %v3984 = vpack.c.b16 %v3946, %v3944
    %v3985 = vpack.c.b16 %v3949, %v3947
    %v3986 = vpack.c.b16 %v3950, %v3948
    %v3987 = vpack.c.b16 %v3953, %v3951
    %v3988 = vpack.c.b16 %v3954, %v3952
    %v3989 = vpack.c.b16 %v3957, %v3955
    %v3990 = vpack.c.b16 %v3958, %v3956
    %4023 = vmatprep.subr.bf16.mxu0 %v3974
    %4024 = vmatpush1.bf16.msra.mxu0 %v3973
    %4025 = vmatprep.subr.bf16.mxu0 %v3972
    %4026 = vmatpush1.bf16.msra.mxu0 %v3971
    %4027 = vmatprep.subr.bf16.mxu0 %v3970
    %4028 = vmatpush1.bf16.msra.mxu0 %v3969
    %4029 = vmatprep.subr.bf16.mxu0 %v3968
    %4030 = vmatpush1.bf16.msra.mxu0 %v3967
    %4031 = vmatprep.subr.bf16.mxu0 %v3966
    %4032 = vmatpush1.bf16.msra.mxu0 %v3965
    %4033 = vmatprep.subr.bf16.mxu0 %v3964
    %4034 = vmatpush1.bf16.msra.mxu0 %v3963
    %4035 = vmatprep.subr.bf16.mxu0 %v3962
    %4036 = vmatpush1.bf16.msra.mxu0 %v3961
    %4037 = vmatprep.subr.bf16.mxu0 %v3960
    %4038 = vmatpush1.bf16.msra.mxu0 %v3959
    %4039 = vmatprep.subr.bf16.mxu0 %v3990
    %4040 = vmatpush2.bf16.msra.mxu0 %v3989
    %4041 = vmatprep.subr.bf16.mxu0 %v3988
    %4042 = vmatpush2.bf16.msra.mxu0 %v3987
    %4043 = vmatprep.subr.bf16.mxu0 %v3986
    %4044 = vmatpush2.bf16.msra.mxu0 %v3985
    %4045 = vmatprep.subr.bf16.mxu0 %v3984
    %4046 = vmatpush2.bf16.msra.mxu0 %v3983
    %4047 = vmatprep.subr.bf16.mxu0 %v3982
    %4048 = vmatpush2.bf16.msra.mxu0 %v3981
    %4049 = vmatprep.subr.bf16.mxu0 %v3980
    %4050 = vmatpush2.bf16.msra.mxu0 %v3979
    %4051 = vmatprep.subr.bf16.mxu0 %v3978
    %4052 = vmatpush2.bf16.msra.mxu0 %v3977
    %4053 = vmatprep.subr.bf16.mxu0 %v3976
    %4054 = vmatpush2.bf16.msra.mxu0 %v3975
    %4055 = vmatprep.mubr.bf16.mxu0 %v3829
    %4056 = vmatmul.mubr.bf16.gmra.mxu0 %v3828
    %v4057 = vpop.f32.mrf.mxu0
    %v4058 = vadd.f32 0.0, %v4057
    %v4059 = vpop.f32.mrf.mxu0
    %v4060 = vadd.f32 0.0, %v4059
    %v4061 = vpop.f32.mrf.mxu0
    %v4062 = vpop.f32.mrf.mxu0
    %4063 = vdwg.mxu0
    %v4064 = vadd.f32 %v3817, %v4058
    %v4065 = vadd.f32 %v3818, %v4060
    %v4066 = vld [vmem:[#allocation7] sm:$0x3]
    %v4068 = vlaneseq
    %v4069 = vshrl.u32 %v4068, 7
    %v4070 = vsub.s32 0, %v4069
    %v4071 = vrot.slane %v4066, %v4070
    %v4072 = vlaneseq
    %v4073 = vshrl.u32 %v4072, 7
    %v4074 = vsub.s32 1, %v4073
    %v4075 = vrot.slane %v4066, %v4074
    %v4078 = vadd.f32 %v4064, %v4071
    %v4079 = vadd.f32 %v4065, %v4075
    %v4080 = vpack.c.bf16 %v4078, %v4078
    %v4081 = vpack.c.bf16 %v4079, %v4079
    %v4082 = vld [vmem:[#allocation8] sm:$0xf]
    %v4083 = vld [vmem:[#allocation8 + $0x4] sm:$0xf]
    %v4084 = vld [vmem:[#allocation8 + $0x8] sm:$0xf]
    %v4085 = vld [vmem:[#allocation8 + $0xc] sm:$0xf]
    %v4086 = vld [vmem:[#allocation8 + $0x10] sm:$0xf]
    %v4087 = vld [vmem:[#allocation8 + $0x14] sm:$0xf]
    %v4088 = vld [vmem:[#allocation8 + $0x18] sm:$0xf]
    %v4089 = vld [vmem:[#allocation8 + $0x1c] sm:$0xf]
    %v4090 = vld [vmem:[#allocation8 + $0x20] sm:$0xf]
    %v4091 = vld [vmem:[#allocation8 + $0x24] sm:$0xf]
    %v4092 = vld [vmem:[#allocation8 + $0x28] sm:$0xf]
    %v4093 = vld [vmem:[#allocation8 + $0x2c] sm:$0xf]
    %v4094 = vld [vmem:[#allocation8 + $0x30] sm:$0xf]
    %v4095 = vld [vmem:[#allocation8 + $0x34] sm:$0xf]
    %v4096 = vld [vmem:[#allocation8 + $0x38] sm:$0xf]
    %v4097 = vld [vmem:[#allocation8 + $0x3c] sm:$0xf]
    %v4098 = vld [vmem:[#allocation8 + $0x40] sm:$0xf]
    %v4099 = vld [vmem:[#allocation8 + $0x44] sm:$0xf]
    %v4100 = vld [vmem:[#allocation8 + $0x48] sm:$0xf]
    %v4101 = vld [vmem:[#allocation8 + $0x4c] sm:$0xf]
    %v4102 = vld [vmem:[#allocation8 + $0x50] sm:$0xf]
    %v4103 = vld [vmem:[#allocation8 + $0x54] sm:$0xf]
    %v4104 = vld [vmem:[#allocation8 + $0x58] sm:$0xf]
    %v4105 = vld [vmem:[#allocation8 + $0x5c] sm:$0xf]
    %v4106 = vld [vmem:[#allocation8 + $0x60] sm:$0xf]
    %v4107 = vld [vmem:[#allocation8 + $0x64] sm:$0xf]
    %v4108 = vld [vmem:[#allocation8 + $0x68] sm:$0xf]
    %v4109 = vld [vmem:[#allocation8 + $0x6c] sm:$0xf]
    %v4110 = vld [vmem:[#allocation8 + $0x70] sm:$0xf]
    %v4111 = vld [vmem:[#allocation8 + $0x74] sm:$0xf]
    %v4112 = vld [vmem:[#allocation8 + $0x78] sm:$0xf]
    %v4113 = vld [vmem:[#allocation8 + $0x7c] sm:$0xf]
    %v4114 = vld [vmem:[#allocation10] sm:$0x1]
    %v4116 = vlaneseq
    %v4117 = vshrl.u32 %v4116, 7
    %v4118 = vsub.s32 0, %v4117
    %v4119 = vrot.slane %v4114, %v4118
    %v4153 = vunpack.c.l.b16 %v4082
    %v4154 = vunpack.c.l.b16 %v4083
    %v4155 = vunpack.c.l.b16 %v4084
    %v4156 = vunpack.c.l.b16 %v4085
    %v4157 = vunpack.c.l.b16 %v4086
    %v4158 = vunpack.c.l.b16 %v4087
    %v4159 = vunpack.c.l.b16 %v4088
    %v4160 = vunpack.c.l.b16 %v4089
    %v4161 = vunpack.c.l.b16 %v4090
    %v4162 = vunpack.c.l.b16 %v4091
    %v4163 = vunpack.c.l.b16 %v4092
    %v4164 = vunpack.c.l.b16 %v4093
    %v4165 = vunpack.c.l.b16 %v4094
    %v4166 = vunpack.c.l.b16 %v4095
    %v4167 = vunpack.c.l.b16 %v4096
    %v4168 = vunpack.c.l.b16 %v4097
    %v4169 = vunpack.c.l.b16 %v4098
    %v4170 = vunpack.c.l.b16 %v4099
    %v4171 = vunpack.c.l.b16 %v4100
    %v4172 = vunpack.c.l.b16 %v4101
    %v4173 = vunpack.c.l.b16 %v4102
    %v4174 = vunpack.c.l.b16 %v4103
    %v4175 = vunpack.c.l.b16 %v4104
    %v4176 = vunpack.c.l.b16 %v4105
    %v4177 = vunpack.c.l.b16 %v4106
    %v4178 = vunpack.c.l.b16 %v4107
    %v4179 = vunpack.c.l.b16 %v4108
    %v4180 = vunpack.c.l.b16 %v4109
    %v4181 = vunpack.c.l.b16 %v4110
    %v4182 = vunpack.c.l.b16 %v4111
    %v4183 = vunpack.c.l.b16 %v4112
    %v4184 = vunpack.c.l.b16 %v4113
    %v4185 = vpack.c.b16 %v4154, %v4153
    %v4186 = vpack.c.b16 %v4156, %v4155
    %v4187 = vpack.c.b16 %v4158, %v4157
    %v4188 = vpack.c.b16 %v4160, %v4159
    %v4189 = vpack.c.b16 %v4162, %v4161
    %v4190 = vpack.c.b16 %v4164, %v4163
    %v4191 = vpack.c.b16 %v4166, %v4165
    %v4192 = vpack.c.b16 %v4168, %v4167
    %v4193 = vpack.c.b16 %v4170, %v4169
    %v4194 = vpack.c.b16 %v4172, %v4171
    %v4195 = vpack.c.b16 %v4174, %v4173
    %v4196 = vpack.c.b16 %v4176, %v4175
    %v4197 = vpack.c.b16 %v4178, %v4177
    %v4198 = vpack.c.b16 %v4180, %v4179
    %v4199 = vpack.c.b16 %v4182, %v4181
    %v4200 = vpack.c.b16 %v4184, %v4183
    %4217 = vmatprep.subr.bf16.mxu0 0
    %4218 = vmatpush1.bf16.msra.mxu0 %v4192
    %4219 = vmatprep.subr.bf16.mxu0 0
    %4220 = vmatpush1.bf16.msra.mxu0 %v4191
    %4221 = vmatprep.subr.bf16.mxu0 0
    %4222 = vmatpush1.bf16.msra.mxu0 %v4190
    %4223 = vmatprep.subr.bf16.mxu0 0
    %4224 = vmatpush1.bf16.msra.mxu0 %v4189
    %4225 = vmatprep.subr.bf16.mxu0 0
    %4226 = vmatpush1.bf16.msra.mxu0 %v4188
    %4227 = vmatprep.subr.bf16.mxu0 0
    %4228 = vmatpush1.bf16.msra.mxu0 %v4187
    %4229 = vmatprep.subr.bf16.mxu0 0
    %4230 = vmatpush1.bf16.msra.mxu0 %v4186
    %4231 = vmatprep.subr.bf16.mxu0 0
    %4232 = vmatpush1.bf16.msra.mxu0 %v4185
    %4233 = vmatprep.subr.bf16.mxu0 0
    %4234 = vmatpush2.bf16.msra.mxu0 %v4200
    %4235 = vmatprep.subr.bf16.mxu0 0
    %4236 = vmatpush2.bf16.msra.mxu0 %v4199
    %4237 = vmatprep.subr.bf16.mxu0 0
    %4238 = vmatpush2.bf16.msra.mxu0 %v4198
    %4239 = vmatprep.subr.bf16.mxu0 0
    %4240 = vmatpush2.bf16.msra.mxu0 %v4197
    %4241 = vmatprep.subr.bf16.mxu0 0
    %4242 = vmatpush2.bf16.msra.mxu0 %v4196
    %4243 = vmatprep.subr.bf16.mxu0 0
    %4244 = vmatpush2.bf16.msra.mxu0 %v4195
    %4245 = vmatprep.subr.bf16.mxu0 0
    %4246 = vmatpush2.bf16.msra.mxu0 %v4194
    %4247 = vmatprep.subr.bf16.mxu0 0
    %4248 = vmatpush2.bf16.msra.mxu0 %v4193
    %4249 = vmatprep.mubr.bf16.mxu0 %v4081
    %4250 = vmatmul.mubr.bf16.gmra.mxu0 %v4080
    %v4251 = vpop.f32.mrf.mxu0
    %v4252 = vadd.f32 %v4119, %v4251
    %v4253 = vpop.f32.mrf.mxu0
    %v4254 = vpop.f32.mrf.mxu0
    %v4255 = vpop.f32.mrf.mxu0
    %4256 = vdwg.mxu0
    %v4257 = vmax.f32 %v4252, 0.0
    %v4258 = vpack.c.bf16 %v4257, %v4257
    %v4259 = vld [vmem:[#allocation11] sm:$0xf]
    %v4260 = vld [vmem:[#allocation11 + $0x4] sm:$0xf]
    %v4261 = vld [vmem:[#allocation11 + $0x8] sm:$0xf]
    %v4262 = vld [vmem:[#allocation11 + $0xc] sm:$0xf]
    %v4263 = vld [vmem:[#allocation11 + $0x10] sm:$0xf]
    %v4264 = vld [vmem:[#allocation11 + $0x14] sm:$0xf]
    %v4265 = vld [vmem:[#allocation11 + $0x18] sm:$0xf]
    %v4266 = vld [vmem:[#allocation11 + $0x1c] sm:$0xf]
    %v4267 = vld [vmem:[#allocation11 + $0x20] sm:$0xf]
    %v4268 = vld [vmem:[#allocation11 + $0x24] sm:$0xf]
    %v4269 = vld [vmem:[#allocation11 + $0x28] sm:$0xf]
    %v4270 = vld [vmem:[#allocation11 + $0x2c] sm:$0xf]
    %v4271 = vld [vmem:[#allocation11 + $0x30] sm:$0xf]
    %v4272 = vld [vmem:[#allocation11 + $0x34] sm:$0xf]
    %v4273 = vld [vmem:[#allocation11 + $0x38] sm:$0xf]
    %v4274 = vld [vmem:[#allocation11 + $0x3c] sm:$0xf]
    %v4275 = vld [vmem:[#allocation13] sm:$0x1]
    %v4277 = vlaneseq
    %v4278 = vshrl.u32 %v4277, 7
    %v4279 = vsub.s32 0, %v4278
    %v4280 = vrot.slane %v4275, %v4279
    %v4298 = vunpack.c.l.b16 %v4259
    %v4299 = vunpack.c.l.b16 %v4260
    %v4300 = vunpack.c.l.b16 %v4261
    %v4301 = vunpack.c.l.b16 %v4262
    %v4302 = vunpack.c.l.b16 %v4263
    %v4303 = vunpack.c.l.b16 %v4264
    %v4304 = vunpack.c.l.b16 %v4265
    %v4305 = vunpack.c.l.b16 %v4266
    %v4306 = vunpack.c.l.b16 %v4267
    %v4307 = vunpack.c.l.b16 %v4268
    %v4308 = vunpack.c.l.b16 %v4269
    %v4309 = vunpack.c.l.b16 %v4270
    %v4310 = vunpack.c.l.b16 %v4271
    %v4311 = vunpack.c.l.b16 %v4272
    %v4312 = vunpack.c.l.b16 %v4273
    %v4313 = vunpack.c.l.b16 %v4274
    %v4314 = vpack.c.b16 %v4299, %v4298
    %v4315 = vpack.c.b16 %v4301, %v4300
    %v4316 = vpack.c.b16 %v4303, %v4302
    %v4317 = vpack.c.b16 %v4305, %v4304
    %v4318 = vpack.c.b16 %v4307, %v4306
    %v4319 = vpack.c.b16 %v4309, %v4308
    %v4320 = vpack.c.b16 %v4311, %v4310
    %v4321 = vpack.c.b16 %v4313, %v4312
    %4330 = vmatprep.subr.bf16.mxu0 0
    %4331 = vmatpush1.bf16.msra.mxu0 %v4321
    %4332 = vmatprep.subr.bf16.mxu0 0
    %4333 = vmatpush1.bf16.msra.mxu0 %v4320
    %4334 = vmatprep.subr.bf16.mxu0 0
    %4335 = vmatpush1.bf16.msra.mxu0 %v4319
    %4336 = vmatprep.subr.bf16.mxu0 0
    %4337 = vmatpush1.bf16.msra.mxu0 %v4318
    %4338 = vmatprep.subr.bf16.mxu0 0
    %4339 = vmatpush1.bf16.msra.mxu0 %v4317
    %4340 = vmatprep.subr.bf16.mxu0 0
    %4341 = vmatpush1.bf16.msra.mxu0 %v4316
    %4342 = vmatprep.subr.bf16.mxu0 0
    %4343 = vmatpush1.bf16.msra.mxu0 %v4315
    %4344 = vmatprep.subr.bf16.mxu0 0
    %4345 = vmatpush1.bf16.msra.mxu0 %v4314
    %4346 = vmatprep.subr.bf16.mxu0 0
    %4347 = vmatpush2.bf16.msra.mxu0 0
    %4348 = vmatprep.subr.bf16.mxu0 0
    %4349 = vmatpush2.bf16.msra.mxu0 0
    %4350 = vmatprep.subr.bf16.mxu0 0
    %4351 = vmatpush2.bf16.msra.mxu0 0
    %4352 = vmatprep.subr.bf16.mxu0 0
    %4353 = vmatpush2.bf16.msra.mxu0 0
    %4354 = vmatprep.subr.bf16.mxu0 0
    %4355 = vmatpush2.bf16.msra.mxu0 0
    %4356 = vmatprep.subr.bf16.mxu0 0
    %4357 = vmatpush2.bf16.msra.mxu0 0
    %4358 = vmatprep.subr.bf16.mxu0 0
    %4359 = vmatpush2.bf16.msra.mxu0 0
    %4360 = vmatprep.subr.bf16.mxu0 0
    %4361 = vmatpush2.bf16.msra.mxu0 0
    %4362 = vmatprep.mubr.bf16.mxu0 0
    %4363 = vmatmul.mubr.bf16.gmra.mxu0 %v4258
    %v4364 = vpop.f32.mrf.mxu0
    %v4365 = vadd.f32 %v4280, %v4364
    %v4366 = vpop.f32.mrf.mxu0
    %v4367 = vpop.f32.mrf.mxu0
    %v4368 = vpop.f32.mrf.mxu0
    %4369 = vdwg.mxu0
    %4370 = vst [vmem:[#allocation14] sm:$0xff] %v4365
    // Predicated region
    $region58: #{tpu_custom_call.1} parent=1 // pred_check
      _
    $region59: #{tpu_custom_call.1} parent=1 // pred_check_branch
      %4372 = sbr.rel (0) target = $region61
    $region60: #{tpu_custom_call.1} parent=1 // pred_region
      %s4374 = ssub.s32 128, 128
      %4375 = vsyncadd [#allocation4], %s4374
      %s4377 = sshll.u32 [#allocation14], 4
      %s4378 = int_to_ptr.vmem [resolvable:$true] %s4377
      %4380 = dma.vmem_to_hbm [thread:$0]  %s4378, 128, %s7, [#allocation4]
    $region61: #{tpu_custom_call.1} parent=1 // pred_fallthru
      _
    // Predicated region
    $region62: #{tpu_custom_call.1} parent=1 // pred_check
      _
    $region63: #{tpu_custom_call.1} parent=1 // pred_check_branch
      %4382 = sbr.rel (0) target = $region65
    $region64: #{tpu_custom_call.1} parent=1 // pred_region
      %4383 = dma.done [#allocation4], 128
    $region65: #{tpu_custom_call.1} parent=1 // pred_fallthru
      _
    %4384 = vsyncpa [#allocation3], 1
    %4385 = vsyncpa [#allocation6], 1
    %4386 = vsyncpa [#allocation9], 1
    %4387 = vsyncpa [#allocation12], 1
    %4388 = vsyncpa [#allocation4], 1

</llo_original>
